<compile_context>
chip_gen: v6e
topology: v6e:2x2x1
jax: 0.10.0
libtpu: 0.0.40
codegen_flags: <defaults>
</compile_context>

<pallas_src>
import functools

import jax
import jax.numpy as jnp
from jax.experimental import pallas as pl
from jax.experimental.pallas import tpu as pltpu


def _round_up(n: int, m: int) -> int:
    return ((n + m - 1) // m) * m


# ---- Kernel 1: conv1x1 + BN + LeakyReLU + global average pool --------------------------
def _vol_pool_kernel(x_ref, w_ref, b_ref, part_ref, acc_ref, *, inv_s, slope):
    # x_ref: (1, Cv, st)   w_ref: (Cp, Cv)   b_ref: (Cp, 1)
    # part_ref: (1, 1, Cp, 1) partial pooled output   acc_ref: (Cp, st) VMEM scratch
    s = pl.program_id(2)

    @pl.when(s == 0)
    def _():
        acc_ref[...] = jnp.zeros_like(acc_ref)

    x = x_ref[0]                  # (Cv, st)
    w = w_ref[...]                # (Cp, Cv)  VMEM-resident folded conv+BN weight
    z = b_ref[...]                # (Cp, 1)   folded bias, broadcasts over lanes
    # Tiny contraction unrolled as VPU broadcast MACs (avoids multi-pass f32 MXU matmul).
    for c in range(w.shape[1]):
        z = z + w[:, c:c + 1] * x[c:c + 1, :]            # (Cp, st)
    z = jnp.where(z >= 0, z, z * slope)                  # LeakyReLU(0.2)
    acc_ref[...] += z                                    # lane-dense accumulator (pure VPU)

    @pl.when(s == pl.num_programs(2) - 1)
    def _():
        # One cross-lane reduce + scale per (batch, spatial-split), not per step.
        part_ref[0, 0] = jnp.sum(acc_ref[...], axis=-1, keepdims=True) * inv_s


# ---- Kernel 2: out[b, 0, :] = pooled[b, :, 0] @ point_feature[b] -----------------------
def _fuse_kernel(g_ref, p_ref, o_ref):
    # g_ref: (1, Cp, 1)   p_ref: (1, Cp, nt)   o_ref: (1, 1, nt)
    g = g_ref[0]                                          # (Cp, 1)
    p = p_ref[0]                                          # (Cp, nt)
    o_ref[0] = jnp.sum(g * p, axis=0, keepdims=True).astype(o_ref.dtype)


@functools.partial(jax.jit,
                   static_argnames=("eps", "slope", "spatial_tile", "point_tile"))
def fuse_net_forward(point_feature, vol_feature, conv_w, conv_b,
                     bn_gamma, bn_beta, bn_mean, bn_var,
                     *, eps=1e-5, slope=0.2,
                     spatial_tile=8192, point_tile=8192):
    """point_feature: (B, Cp, N); vol_feature: (B, Cv, D, H, W); conv_w: (Cp, Cv)."""
    B, Cv, D, H, W = vol_feature.shape
    Cp, _ = conv_w.shape
    _, _, N = point_feature.shape
    S = D * H * W

    # Fold inference-mode BatchNorm into the 1x1x1 conv (per-channel affine).
    scale = bn_gamma / jnp.sqrt(bn_var + eps)                        # (Cp,)
    w_f = (conv_w * scale[:, None]).astype(jnp.float32)              # (Cp, Cv)
    b_f = (scale * (conv_b - bn_mean) + bn_beta).reshape(Cp, 1).astype(jnp.float32)

    # ---- spatial tiling / padding (lane-dense, multiples of 128) ----
    st = min(spatial_tile, _round_up(S, 128))
    S_pad = _round_up(S, st)
    vol3 = vol_feature.reshape(B, Cv, S)
    if S_pad != S:
        vol3 = jnp.pad(vol3, ((0, 0), (0, 0), (0, S_pad - S)))
    n_s = S_pad // st
    # Second "parallel" axis over spatial halves keeps both v7x TCs busy when B is small.
    splits = 2 if (n_s % 2 == 0 and n_s >= 2) else 1
    steps = n_s // splits

    partial = pl.pallas_call(
        functools.partial(_vol_pool_kernel, inv_s=1.0 / S, slope=slope),
        out_shape=jax.ShapeDtypeStruct((B, splits, Cp, 1), jnp.float32),
        grid=(B, splits, steps),
        in_specs=[
            pl.BlockSpec((1, Cv, st), lambda b, h, s: (b, 0, h * steps + s)),
            pl.BlockSpec((Cp, Cv), lambda b, h, s: (0, 0)),   # VMEM-resident weights
            pl.BlockSpec((Cp, 1), lambda b, h, s: (0, 0)),    # VMEM-resident bias
        ],
        out_specs=pl.BlockSpec((1, 1, Cp, 1), lambda b, h, s: (b, h, 0, 0)),
        scratch_shapes=[pltpu.VMEM((Cp, st), jnp.float32)],
        compiler_params=pltpu.CompilerParams(
            dimension_semantics=("parallel", "parallel", "arbitrary")),
    )(vol3, w_f, b_f)

    pooled = jnp.sum(partial, axis=1)                                # (B, Cp, 1)
    if S_pad != S:
        # Each zero-padded voxel contributed leaky(b_f)/S to the mean; remove it exactly.
        leaky_b = jnp.where(b_f >= 0, b_f, slope * b_f)
        pooled = pooled - ((S_pad - S) / S) * leaky_b

    # ---- point tiling / padding ----
    nt = min(point_tile, _round_up(N, 128))
    N_pad = _round_up(N, nt)
    pf = point_feature
    if N_pad != N:
        pf = jnp.pad(pf, ((0, 0), (0, 0), (0, N_pad - N)))

    out = pl.pallas_call(
        _fuse_kernel,
        out_shape=jax.ShapeDtypeStruct((B, 1, N_pad), point_feature.dtype),
        grid=(B, N_pad // nt),
        in_specs=[
            pl.BlockSpec((1, Cp, 1), lambda b, n: (b, 0, 0)),    # resident pooled gate
            pl.BlockSpec((1, Cp, nt), lambda b, n: (b, 0, n)),
        ],
        out_specs=pl.BlockSpec((1, 1, nt), lambda b, n: (b, 0, n)),
        compiler_params=pltpu.CompilerParams(
            dimension_semantics=("parallel", "parallel")),
    )(pooled, pf)

    if N_pad != N:
        out = out[:, :, :N]
    return out


def reference(point_feature, vol_feature, conv_w, conv_b,
              bn_gamma, bn_beta, bn_mean, bn_var, *, eps=1e-5, slope=0.2):
    z = jnp.einsum("pc,bcdhw->bpdhw", conv_w, vol_feature)
    z = z + conv_b[None, :, None, None, None]
    z = (z - bn_mean[None, :, None, None, None]) * (
        bn_gamma / jnp.sqrt(bn_var + eps))[None, :, None, None, None]
    z = z + bn_beta[None, :, None, None, None]
    z = jnp.where(z >= 0, z, slope * z)
    pooled = jnp.mean(z, axis=(2, 3, 4))                             # (B, Cp)
    return jnp.einsum("bp,bpn->bn", pooled, point_feature)[:, None, :]


if __name__ == "__main__":
    key = jax.random.PRNGKey(0)
    B = 2
    Cv = 3           # args.pamir_vol_dim
    Cp = 13          # points_channel
    D = H = W = 30   # S = 27000 -> padded to 32768, 4 spatial tiles, 2 parallel halves
    N = 2000         # padded to 2048 lane-dense point tiles

    keys = jax.random.split(key, 8)
    point_feature = jax.random.normal(keys[0], (B, Cp, N), jnp.float32)
    vol_feature = jax.random.normal(keys[1], (B, Cv, D, H, W), jnp.float32)

    bound = 1.0 / jnp.sqrt(Cv)   # nn.Conv3d default init bound for kernel_size=1
    conv_w = jax.random.uniform(keys[2], (Cp, Cv), jnp.float32, -bound, bound)
    conv_b = jax.random.uniform(keys[3], (Cp,), jnp.float32, -bound, bound)

    bn_gamma = jax.random.uniform(keys[4], (Cp,), jnp.float32, 0.5, 1.5)
    bn_beta = 0.1 * jax.random.normal(keys[5], (Cp,), jnp.float32)
    bn_mean = 0.1 * jax.random.normal(keys[6], (Cp,), jnp.float32)
    bn_var = jax.random.uniform(keys[7], (Cp,), jnp.float32, 0.5, 1.5)

    out = fuse_net_forward(point_feature, vol_feature, conv_w, conv_b,
                           bn_gamma, bn_beta, bn_mean, bn_var)
    out = jax.block_until_ready(out)

    ref = reference(point_feature, vol_feature, conv_w, conv_b,
                    bn_gamma, bn_beta, bn_mean, bn_var)
    assert out.shape == (B, 1, N)
    assert jnp.allclose(out, ref, atol=1e-4, rtol=1e-4), "mismatch vs reference"

    print("KERNEL_OK")
</pallas_src>

<mosaic_0001>
module attributes {stable_mosaic.version = 11 : i64} {
  func.func @_vol_pool_kernel(%arg0: i32, %arg1: i32, %arg2: i32, %arg3: memref<1x3x8192xf32, #tpu.memory_space<vmem>>, %arg4: memref<13x3xf32, #tpu.memory_space<vmem>>, %arg5: memref<13x1xf32, #tpu.memory_space<vmem>>, %arg6: memref<1x1x13x1xf32, #tpu.memory_space<vmem>>, %arg7: memref<13x8192xf32, #tpu.memory_space<vmem>>) attributes {dimension_semantics = [#tpu.dimension_semantics<parallel>, #tpu.dimension_semantics<parallel>, #tpu.dimension_semantics<arbitrary>], iteration_bounds = array<i64: 2, 2, 2>, scalar_prefetch = 0 : i64, scratch_operands = 1 : i64, tpu.core_type = #tpu.core_type<tc>, window_params = [{transform_indices = @transform_0, window_bounds = array<i64: 1, 3, 8192>}, {pipeline_mode = #tpu.pipeline_mode<synchronous>, transform_indices = @transform_1, window_bounds = array<i64: 13, 3>}, {pipeline_mode = #tpu.pipeline_mode<synchronous>, transform_indices = @transform_2, window_bounds = array<i64: 13, 1>}, {transform_indices = @transform_3, window_bounds = array<i64: 1, 1, 13, 1>}]} {
    %c0_i32 = arith.constant 0 : i32
    %0 = arith.cmpi eq, %arg2, %c0_i32 : i32
    %1 = arith.extui %0 : i1 to i32
    %c0_i32_0 = arith.constant 0 : i32
    %2 = arith.cmpi ne, %1, %c0_i32_0 : i32
    scf.if %2 {
      %cst_13 = arith.constant 0.000000e+00 : f32
      %37 = vector.broadcast %cst_13 : f32 to vector<13x8192xf32>
      %c0_14 = arith.constant 0 : index
      %c0_15 = arith.constant 0 : index
      %38 = vector.load %arg7[%c0_14, %c0_15] : memref<13x8192xf32, #tpu.memory_space<vmem>>, vector<13x8192xf32>
      tpu.vector_store %arg7[%c0_14, %c0_15], %37 {strides = array<i32>} : memref<13x8192xf32, #tpu.memory_space<vmem>>, vector<13x8192xf32>,
    } else {
    }
    %c0 = arith.constant 0 : index
    %c0_1 = arith.constant 0 : index
    %c0_2 = arith.constant 0 : index
    %3 = vector.load %arg3[%c0, %c0_1, %c0_2] : memref<1x3x8192xf32, #tpu.memory_space<vmem>>, vector<1x3x8192xf32>
    %4 = vector.shape_cast %3 : vector<1x3x8192xf32> to vector<3x8192xf32>
    %c0_3 = arith.constant 0 : index
    %c0_4 = arith.constant 0 : index
    %5 = vector.load %arg4[%c0_3, %c0_4] : memref<13x3xf32, #tpu.memory_space<vmem>>, vector<13x3xf32>
    %c0_5 = arith.constant 0 : index
    %c0_6 = arith.constant 0 : index
    %6 = vector.load %arg5[%c0_5, %c0_6] : memref<13x1xf32, #tpu.memory_space<vmem>>, vector<13x1xf32>
    %7 = vector.extract_strided_slice %5 {offsets = [0, 0], sizes = [13, 1], strides = [1, 1]} : vector<13x3xf32> to vector<13x1xf32>
    %8 = vector.extract_strided_slice %4 {offsets = [0, 0], sizes = [1, 8192], strides = [1, 1]} : vector<3x8192xf32> to vector<1x8192xf32>
    %9 = vector.broadcast %7 : vector<13x1xf32> to vector<13x8192xf32>
    %10 = vector.broadcast %8 : vector<1x8192xf32> to vector<13x8192xf32>
    %11 = arith.mulf %9, %10 : vector<13x8192xf32>
    %12 = vector.broadcast %6 : vector<13x1xf32> to vector<13x8192xf32>
    %13 = arith.addf %12, %11 : vector<13x8192xf32>
    %14 = vector.extract_strided_slice %5 {offsets = [0, 1], sizes = [13, 1], strides = [1, 1]} : vector<13x3xf32> to vector<13x1xf32>
    %15 = vector.extract_strided_slice %4 {offsets = [1, 0], sizes = [1, 8192], strides = [1, 1]} : vector<3x8192xf32> to vector<1x8192xf32>
    %16 = vector.broadcast %14 : vector<13x1xf32> to vector<13x8192xf32>
    %17 = vector.broadcast %15 : vector<1x8192xf32> to vector<13x8192xf32>
    %18 = arith.mulf %16, %17 : vector<13x8192xf32>
    %19 = arith.addf %13, %18 : vector<13x8192xf32>
    %20 = vector.extract_strided_slice %5 {offsets = [0, 2], sizes = [13, 1], strides = [1, 1]} : vector<13x3xf32> to vector<13x1xf32>
    %21 = vector.extract_strided_slice %4 {offsets = [2, 0], sizes = [1, 8192], strides = [1, 1]} : vector<3x8192xf32> to vector<1x8192xf32>
    %22 = vector.broadcast %20 : vector<13x1xf32> to vector<13x8192xf32>
    %23 = vector.broadcast %21 : vector<1x8192xf32> to vector<13x8192xf32>
    %24 = arith.mulf %22, %23 : vector<13x8192xf32>
    %25 = arith.addf %19, %24 : vector<13x8192xf32>
    %cst = arith.constant 0.000000e+00 : f32
    %26 = vector.broadcast %cst : f32 to vector<13x8192xf32>
    %27 = arith.cmpf oge, %25, %26 : vector<13x8192xf32>
    %cst_7 = arith.constant 2.000000e-01 : f32
    %28 = vector.broadcast %cst_7 : f32 to vector<13x8192xf32>
    %29 = arith.mulf %25, %28 : vector<13x8192xf32>
    %30 = arith.select %27, %25, %29 : vector<13x8192xi1>, vector<13x8192xf32>
    %c0_8 = arith.constant 0 : index
    %c0_9 = arith.constant 0 : index
    %31 = vector.load %arg7[%c0_8, %c0_9] : memref<13x8192xf32, #tpu.memory_space<vmem>>, vector<13x8192xf32>
    %32 = arith.addf %31, %30 : vector<13x8192xf32>
    %c0_10 = arith.constant 0 : index
    %c0_11 = arith.constant 0 : index
    %33 = vector.load %arg7[%c0_10, %c0_11] : memref<13x8192xf32, #tpu.memory_space<vmem>>, vector<13x8192xf32>
    tpu.vector_store %arg7[%c0_10, %c0_11], %32 {strides = array<i32>} : memref<13x8192xf32, #tpu.memory_space<vmem>>, vector<13x8192xf32>,
    %c1_i32 = arith.constant 1 : i32
    %34 = arith.cmpi eq, %arg2, %c1_i32 : i32
    %35 = arith.extui %34 : i1 to i32
    %c0_i32_12 = arith.constant 0 : i32
    %36 = arith.cmpi ne, %35, %c0_i32_12 : i32
    scf.if %36 {
      %c0_13 = arith.constant 0 : index
      %c0_14 = arith.constant 0 : index
      %37 = vector.load %arg7[%c0_13, %c0_14] : memref<13x8192xf32, #tpu.memory_space<vmem>>, vector<13x8192xf32>
      %cst_15 = arith.constant dense<0.000000e+00> : vector<13xf32>
      %38 = vector.multi_reduction <add>, %37, %cst_15 [1] : vector<13x8192xf32> to vector<13xf32>
      %39 = vector.shape_cast %38 : vector<13xf32> to vector<13x1xf32>
      %cst_16 = arith.constant 3.70370362E-5 : f32
      %40 = vector.broadcast %cst_16 : f32 to vector<13x1xf32>
      %41 = arith.mulf %39, %40 : vector<13x1xf32>
      %c0_17 = arith.constant 0 : index
      %c0_18 = arith.constant 0 : index
      %c0_19 = arith.constant 0 : index
      %c0_20 = arith.constant 0 : index
      %42 = vector.load %arg6[%c0_17, %c0_18, %c0_19, %c0_20] : memref<1x1x13x1xf32, #tpu.memory_space<vmem>>, vector<1x1x13x1xf32>
      %43 = vector.shape_cast %42 : vector<1x1x13x1xf32> to vector<13x1xf32>
      %44 = vector.shape_cast %41 : vector<13x1xf32> to vector<1x1x13x1xf32>
      tpu.vector_store %arg6[%c0_17, %c0_18, %c0_19, %c0_20], %44 {strides = array<i32>} : memref<1x1x13x1xf32, #tpu.memory_space<vmem>>, vector<1x1x13x1xf32>,
    } else {
    }
    return
  }
  func.func @transform_0(%arg0: i32, %arg1: i32, %arg2: i32) -> (i32, i32, i32) {
    %c2_i32 = arith.constant 2 : i32
    %0 = arith.muli %arg1, %c2_i32 : i32
    %1 = arith.addi %0, %arg2 : i32
    %c0_i32 = arith.constant 0 : i32
    %c0_i32_0 = arith.constant 0 : i32
    return %arg0, %c0_i32, %1 : i32, i32, i32
  }
  func.func @transform_1(%arg0: i32, %arg1: i32, %arg2: i32) -> (i32, i32) {
    %c0_i32 = arith.constant 0 : i32
    %c0_i32_0 = arith.constant 0 : i32
    %c0_i32_1 = arith.constant 0 : i32
    return %c0_i32, %c0_i32_0 : i32, i32
  }
  func.func @transform_2(%arg0: i32, %arg1: i32, %arg2: i32) -> (i32, i32) {
    %c0_i32 = arith.constant 0 : i32
    %c0_i32_0 = arith.constant 0 : i32
    %c0_i32_1 = arith.constant 0 : i32
    return %c0_i32, %c0_i32_0 : i32, i32
  }
  func.func @transform_3(%arg0: i32, %arg1: i32, %arg2: i32) -> (i32, i32, i32, i32) {
    %c0_i32 = arith.constant 0 : i32
    %c0_i32_0 = arith.constant 0 : i32
    %c0_i32_1 = arith.constant 0 : i32
    return %arg0, %arg1, %c0_i32, %c0_i32_0 : i32, i32, i32, i32
  }
}

module attributes {stable_mosaic.version = 11 : i64} {
  func.func @_fuse_kernel(%arg0: i32, %arg1: i32, %arg2: memref<1x13x1xf32, #tpu.memory_space<vmem>>, %arg3: memref<1x13x2048xf32, #tpu.memory_space<vmem>>, %arg4: memref<1x1x2048xf32, #tpu.memory_space<vmem>>) attributes {dimension_semantics = [#tpu.dimension_semantics<parallel>, #tpu.dimension_semantics<parallel>], iteration_bounds = array<i64: 2, 1>, scalar_prefetch = 0 : i64, scratch_operands = 0 : i64, tpu.core_type = #tpu.core_type<tc>, window_params = [{transform_indices = @transform_0, window_bounds = array<i64: 1, 13, 1>}, {transform_indices = @transform_1, window_bounds = array<i64: 1, 13, 2048>}, {transform_indices = @transform_2, window_bounds = array<i64: 1, 1, 2048>}]} {
    %c0 = arith.constant 0 : index
    %c0_0 = arith.constant 0 : index
    %c0_1 = arith.constant 0 : index
    %0 = vector.load %arg2[%c0, %c0_0, %c0_1] : memref<1x13x1xf32, #tpu.memory_space<vmem>>, vector<1x13x1xf32>
    %1 = vector.shape_cast %0 : vector<1x13x1xf32> to vector<13x1xf32>
    %c0_2 = arith.constant 0 : index
    %c0_3 = arith.constant 0 : index
    %c0_4 = arith.constant 0 : index
    %2 = vector.load %arg3[%c0_2, %c0_3, %c0_4] : memref<1x13x2048xf32, #tpu.memory_space<vmem>>, vector<1x13x2048xf32>
    %3 = vector.shape_cast %2 : vector<1x13x2048xf32> to vector<13x2048xf32>
    %4 = vector.broadcast %1 : vector<13x1xf32> to vector<13x2048xf32>
    %5 = arith.mulf %4, %3 : vector<13x2048xf32>
    %cst = arith.constant dense<0.000000e+00> : vector<2048xf32>
    %6 = vector.multi_reduction <add>, %5, %cst [0] : vector<13x2048xf32> to vector<2048xf32>
    %7 = vector.shape_cast %6 : vector<2048xf32> to vector<1x2048xf32>
    %c0_5 = arith.constant 0 : index
    %c0_6 = arith.constant 0 : index
    %c0_7 = arith.constant 0 : index
    %8 = vector.load %arg4[%c0_5, %c0_6, %c0_7] : memref<1x1x2048xf32, #tpu.memory_space<vmem>>, vector<1x1x2048xf32>
    %9 = vector.shape_cast %8 : vector<1x1x2048xf32> to vector<1x2048xf32>
    %10 = vector.shape_cast %7 : vector<1x2048xf32> to vector<1x1x2048xf32>
    tpu.vector_store %arg4[%c0_5, %c0_6, %c0_7], %10 {strides = array<i32>} : memref<1x1x2048xf32, #tpu.memory_space<vmem>>, vector<1x1x2048xf32>,
    return
  }
  func.func @transform_0(%arg0: i32, %arg1: i32) -> (i32, i32, i32) {
    %c0_i32 = arith.constant 0 : i32
    %c0_i32_0 = arith.constant 0 : i32
    %c0_i32_1 = arith.constant 0 : i32
    return %arg0, %c0_i32, %c0_i32_0 : i32, i32, i32
  }
  func.func @transform_1(%arg0: i32, %arg1: i32) -> (i32, i32, i32) {
    %c0_i32 = arith.constant 0 : i32
    %c0_i32_0 = arith.constant 0 : i32
    return %arg0, %c0_i32, %arg1 : i32, i32, i32
  }
  func.func @transform_2(%arg0: i32, %arg1: i32) -> (i32, i32, i32) {
    %c0_i32 = arith.constant 0 : i32
    %c0_i32_0 = arith.constant 0 : i32
    return %arg0, %c0_i32, %arg1 : i32, i32, i32
  }
}

</mosaic_0001>

<llo_original>
// kernel: fuse_net_forward.3
$region0: #{fuse_net_forward.3}
  #allocation0 [shape = 'u32[]', space=smem, size = 0x4, offset = 0x4, fixed_abs, tag = 'smem constant byte address 0x4 - core index']
  #allocation1 [shape = 'u32[144,128]{1,0:T(1,128)}', space=vmem, size = 0x12000, scoped, tag = 'internal scratch']
  %s0 = inlined_call_operand.vmem [shape: f32[2,13,1], index: 0, kind: input, shape index: {}]
  %s1 = inlined_call_operand.vmem [shape: f32[2,13,2048], index: 1, kind: input, shape index: {}]
  %s2 = inlined_call_operand.hbm [shape: f32[2,1,2048], index: 2, kind: output, shape index: {}]
  %s3 = sld [smem:[#allocation0]]
  $region41: #{fuse_net_forward.3} parent=0
    _
  %s5 = ssub.s32 1, %s3
  %s6 = scalar_select 0, %s5, %s3
  $region1: #{fuse_net_forward.3} parent=0
    #allocation2 [shape = 'u8[16384]{0}', space=vmem, size = 0x4000, scoped, tag = 'output window, operand 0']
    #allocation3 [shape = 's32[2]{0}', space=sflag, size = 0x8, scoped, tag = 'scoped memory for fuse_net_forward.3']
    %7 = vsyncpa [#allocation3], 0
    %s8 = scalar_lea.sflag [#allocation3], 1
    %9 = vsyncpa %s8, 0
    loop: start=0, step=1, limit=4
    $region2: #{fuse_net_forward.3} parent=1 // loop_pre_header
      _
    $region3: #{fuse_net_forward.3} parent=1 // loop_header
      %s11 = sphi 0, %s15
      %p12 = scmp.ge.s32.totalorder %s11, 4
      %s18 = sphi 0, %s30
      %s19 = sphi 0, %s26
      %s20 = sphi 0, %s18
      %s21 = sphi 0, %s19
      %s22 = sphi 0, %s20
      %s23 = sphi 0, %s21
      %s33 = sphi 0, %s35
      %s36 = sphi 0, %s33
      %s37 = sphi 0, %s36
      %s53 = sphi 0, %s37
      %s61 = sphi 0, %s63
      %s64 = sphi 0, %s61
      %s65 = sphi 0, %s64
      %s81 = sphi 0, %s65
      %s89 = sphi 0, %s91
      %s92 = sphi 0, %s89
      %s93 = sphi 0, %s92
      %s109 = sphi 0, %s93
    $region4: #{fuse_net_forward.3} parent=1 // loop_header_branch
      %14 = sbr.rel (%p12) target = $region8
    $region5: #{fuse_net_forward.3} parent=1 // loop_body
      %s16 = ssub.s32 %s11, 1
      %s17 = ssub.s32 %s11, 2
      %s24 = sadd.s32 1, %s19
      %p25 = scmp.ge.s32.totalorder %s24, 1
      %s26 = scalar_select %p25, 0, %s24
      %s27 = sadd.s32 1, %s18
      %s28 = scalar_select %p25, %s27, %s18
      %p29 = scmp.ge.s32.totalorder %s28, 2
      %s30 = scalar_select %p29, 0, %s28
      %s31 = ssub.s32 %s18, %s30
      %p32 = scmp.eq.s32.totalorder %s31, 0
      %s34 = sadd.s32 %s33, 1
      %s35 = scalar_select %p32, %s33, %s34
      %p38 = pneg %p32
      %p39 = scmp.eq.s32.totalorder %s11, 1
      %p40 = por %p38, %p39
      %p41 = scmp.ne.s32.totalorder %s33, %s36
      %p42 = scmp.eq.s32.totalorder %s11, 0
      %p43 = por %p41, %p42
      %p44 = scmp.ne.s32.totalorder %s33, %s36
      %p45 = scmp.eq.s32.totalorder %s16, 1
      %p46 = por %p44, %p45
      %p47 = scmp.ne.s32.totalorder %s36, %s37
      %p48 = scmp.eq.s32.totalorder %s16, 0
      %p49 = por %p47, %p48
      %p50 = scmp.ne.s32.totalorder %s36, %s37
      %p51 = scmp.eq.s32.totalorder %s17, 1
      %p52 = por %p50, %p51
      %p54 = scmp.ne.s32.totalorder %s37, %s53
      %p55 = scmp.eq.s32.totalorder %s17, 0
      %p56 = por %p54, %p55
      %s57 = ssub.s32 %s18, %s30
      %s58 = ssub.s32 %s19, %s26
      %s59 = sor.u32 %s57, %s58
      %p60 = scmp.eq.s32.totalorder %s59, 0
      %s62 = sadd.s32 %s61, 1
      %s63 = scalar_select %p60, %s61, %s62
      %p66 = pneg %p60
      %p67 = scmp.eq.s32.totalorder %s11, 1
      %p68 = por %p66, %p67
      %p69 = scmp.ne.s32.totalorder %s61, %s64
      %p70 = scmp.eq.s32.totalorder %s11, 0
      %p71 = por %p69, %p70
      %p72 = scmp.ne.s32.totalorder %s61, %s64
      %p73 = scmp.eq.s32.totalorder %s16, 1
      %p74 = por %p72, %p73
      %p75 = scmp.ne.s32.totalorder %s64, %s65
      %p76 = scmp.eq.s32.totalorder %s16, 0
      %p77 = por %p75, %p76
      %p78 = scmp.ne.s32.totalorder %s64, %s65
      %p79 = scmp.eq.s32.totalorder %s17, 1
      %p80 = por %p78, %p79
      %p82 = scmp.ne.s32.totalorder %s65, %s81
      %p83 = scmp.eq.s32.totalorder %s17, 0
      %p84 = por %p82, %p83
      %s85 = ssub.s32 %s18, %s30
      %s86 = ssub.s32 %s19, %s26
      %s87 = sor.u32 %s85, %s86
      %p88 = scmp.eq.s32.totalorder %s87, 0
      %s90 = sadd.s32 %s89, 1
      %s91 = scalar_select %p88, %s89, %s90
      %p94 = pneg %p88
      %p95 = scmp.eq.s32.totalorder %s11, 1
      %p96 = por %p94, %p95
      %p97 = scmp.ne.s32.totalorder %s89, %s92
      %p98 = scmp.eq.s32.totalorder %s11, 0
      %p99 = por %p97, %p98
      %p100 = scmp.ne.s32.totalorder %s89, %s92
      %p101 = scmp.eq.s32.totalorder %s16, 1
      %p102 = por %p100, %p101
      %p103 = scmp.ne.s32.totalorder %s92, %s93
      %p104 = scmp.eq.s32.totalorder %s16, 0
      %p105 = por %p103, %p104
      %p106 = scmp.ne.s32.totalorder %s92, %s93
      %p107 = scmp.eq.s32.totalorder %s17, 1
      %p108 = por %p106, %p107
      %p110 = scmp.ne.s32.totalorder %s93, %s109
      %p111 = scmp.eq.s32.totalorder %s17, 0
      %p112 = por %p110, %p111
      %p113 = scmp.le.s32.totalorder 1, %s11
      %p114 = scmp.lt.s32.totalorder %s11, 3
      %p115 = pnand %p113, %p114
      %p116 = pneg %p115
      // Predicated region
      $region9: #{fuse_net_forward.3} parent=5 // pred_check
        _
      $region10: #{fuse_net_forward.3} parent=5 // pred_check_branch
        %118 = sbr.rel (%p115) target = $region12
      $region11: #{fuse_net_forward.3} parent=5 // pred_region
        %s119 = ssub.s32 %s11, 1
      $region12: #{fuse_net_forward.3} parent=5 // pred_fallthru
        _
      %p120 = scmp.lt.s32.totalorder %s11, 2
      // Predicated region
      $region13: #{fuse_net_forward.3} parent=5 // pred_check
        %p121 = pneg %p120
      $region14: #{fuse_net_forward.3} parent=5 // pred_check_branch
        %123 = sbr.rel (%p121) target = $region16
      $region15: #{fuse_net_forward.3} parent=5 // pred_region
        // Predicated region
        $region17: #{fuse_net_forward.3} parent=15 // pred_check
          %p124 = pneg %p43
        $region18: #{fuse_net_forward.3} parent=15 // pred_check_branch
          %126 = sbr.rel (%p124) target = $region20
        $region19: #{fuse_net_forward.3} parent=15 // pred_region
          %p127 = scmp.lt.s32.totalorder %s18, 1
          %s128 = scalar_select %p127, %s18, 1
          %s129 = smul.addr %s128, 2
          %s130 = smul.addr %s129, 8
          %s131 = scalar_lea.vmem %s0, %s130
        $region20: #{fuse_net_forward.3} parent=15 // pred_fallthru
          _
        // Predicated region
        $region21: #{fuse_net_forward.3} parent=15 // pred_check
          %p132 = pneg %p71
        $region22: #{fuse_net_forward.3} parent=15 // pred_check_branch
          %134 = sbr.rel (%p132) target = $region24
        $region23: #{fuse_net_forward.3} parent=15 // pred_region
          %s135 = smul.u32 16, %s19
          %p136 = scmp.lt.s32.totalorder %s18, 1
          %s137 = scalar_select %p136, %s18, 1
          %p138 = scmp.lt.s32.totalorder %s135, 15
          %s139 = scalar_select %p138, %s135, 15
          %s140 = smul.addr %s137, 32
          %s141 = sadd.s32 %s139, %s140
          %s142 = smul.addr %s141, 8
          %s143 = scalar_lea.vmem %s1, %s142
          %s144 = smul.u32 16, %s19
        $region24: #{fuse_net_forward.3} parent=15 // pred_fallthru
          _
      $region16: #{fuse_net_forward.3} parent=5 // pred_fallthru
        _
      %p145 = scmp.le.s32.totalorder 1, %s11
      %p146 = scmp.lt.s32.totalorder %s11, 3
      %p147 = pnand %p145, %p146
      %p148 = pneg %p147
      // Predicated region
      $region25: #{fuse_net_forward.3} parent=5 // pred_check
        _
      $region26: #{fuse_net_forward.3} parent=5 // pred_check_branch
        %150 = sbr.rel (%p147) target = $region28
      $region27: #{fuse_net_forward.3} parent=5 // pred_region
        %s151 = ssub.s32 %s11, 1
        %p152 = scmp.lt.s32.totalorder %s20, 1
        %s153 = scalar_select %p152, %s20, 1
        %s154 = smul.addr %s153, 2
        %s155 = smul.addr %s154, 8
        %s156 = scalar_lea.vmem %s0, %s155
        %p157 = pneg %p49
        %p158 = pneg %p46
        %s159 = smul.u32 16, %s21
        %p160 = scmp.lt.s32.totalorder %s20, 1
        %s161 = scalar_select %p160, %s20, 1
        %p162 = scmp.lt.s32.totalorder %s159, 15
        %s163 = scalar_select %p162, %s159, 15
        %s164 = smul.addr %s161, 32
        %s165 = sadd.s32 %s163, %s164
        %s166 = smul.addr %s165, 8
        %s167 = scalar_lea.vmem %s1, %s166
        %p168 = pneg %p77
        %p169 = pneg %p74
        %p170 = pneg %p105
        %p171 = pneg %p102
        %s172 = sand.u32 %s92, 1
        %s173 = scalar_lea.sflag [#allocation3], %s172
        %s174 = sand.u32 %s92, 1
        %s175 = smul.addr %s174, 16
        %s176 = scalar_lea.vmem [#allocation2], %s175
        %p177 = scmp.lt.s32.totalorder %s20, 1
        %s178 = scalar_select %p177, %s20, 1
        %s179 = smul.addr %s178, 2
        %s180 = smul.addr %s179, 8
        %s181 = scalar_lea.vmem %s0, %s180
        %s182 = smul.u32 16, %s21
        %p183 = scmp.lt.s32.totalorder %s20, 1
        %s184 = scalar_select %p183, %s20, 1
        %p185 = scmp.lt.s32.totalorder %s182, 15
        %s186 = scalar_select %p185, %s182, 15
        %s187 = smul.addr %s184, 32
        %s188 = sadd.s32 %s186, %s187
        %s189 = smul.addr %s188, 8
        %s190 = scalar_lea.vmem %s1, %s189
        %s191 = smul.u32 16, %s21
        %s192 = smul.u32 16, %s21
        %v193 = vld [vmem:[%s181] sm:$0xff]
        %v194 = vld [vmem:[%s181 + $0x8] sm:$0x1f]
        %v195 = vld [vmem:[%s190] sm:$0xff]
        %v196 = vld [vmem:[%s190 + $0x8] sm:$0xff]
        %v197 = vld [vmem:[%s190 + $0x10] sm:$0xff]
        %v198 = vld [vmem:[%s190 + $0x18] sm:$0xff]
        %v199 = vld [vmem:[%s190 + $0x20] sm:$0xff]
        %v200 = vld [vmem:[%s190 + $0x28] sm:$0xff]
        %v201 = vld [vmem:[%s190 + $0x30] sm:$0xff]
        %v202 = vld [vmem:[%s190 + $0x38] sm:$0xff]
        %v203 = vld [vmem:[%s190 + $0x40] sm:$0xff]
        %v204 = vld [vmem:[%s190 + $0x48] sm:$0xff]
        %v205 = vld [vmem:[%s190 + $0x50] sm:$0xff]
        %v206 = vld [vmem:[%s190 + $0x58] sm:$0xff]
        %v207 = vld [vmem:[%s190 + $0x60] sm:$0xff]
        %v208 = vld [vmem:[%s190 + $0x68] sm:$0xff]
        %v209 = vld [vmem:[%s190 + $0x70] sm:$0xff]
        %v210 = vld [vmem:[%s190 + $0x78] sm:$0xff]
        %v211 = vld [vmem:[%s190 + $0x80] sm:$0x1f]
        %v212 = vld [vmem:[%s190 + $0x88] sm:$0x1f]
        %v213 = vld [vmem:[%s190 + $0x90] sm:$0x1f]
        %v214 = vld [vmem:[%s190 + $0x98] sm:$0x1f]
        %v215 = vld [vmem:[%s190 + $0xa0] sm:$0x1f]
        %v216 = vld [vmem:[%s190 + $0xa8] sm:$0x1f]
        %v217 = vld [vmem:[%s190 + $0xb0] sm:$0x1f]
        %v218 = vld [vmem:[%s190 + $0xb8] sm:$0x1f]
        %v219 = vld [vmem:[%s190 + $0xc0] sm:$0x1f]
        %v220 = vld [vmem:[%s190 + $0xc8] sm:$0x1f]
        %v221 = vld [vmem:[%s190 + $0xd0] sm:$0x1f]
        %v222 = vld [vmem:[%s190 + $0xd8] sm:$0x1f]
        %v223 = vld [vmem:[%s190 + $0xe0] sm:$0x1f]
        %v224 = vld [vmem:[%s190 + $0xe8] sm:$0x1f]
        %v225 = vld [vmem:[%s190 + $0xf0] sm:$0x1f]
        %v226 = vld [vmem:[%s190 + $0xf8] sm:$0x1f]
        %228 = vset.pattern.permute.xlu0 0
        %229 = vperm.xlu0 %228, %v193
        %v230 = vpop.permute.xlu0 %229
        %233 = vset.pattern.permute.xlu0 0
        %234 = vperm.xlu0 %233, %v194
        %v235 = vpop.permute.xlu0 %234
        %v237 = vmul.f32 %v230, %v195
        %v238 = vmul.f32 %v230, %v196
        %v239 = vmul.f32 %v230, %v197
        %v240 = vmul.f32 %v230, %v198
        %v241 = vmul.f32 %v230, %v199
        %v242 = vmul.f32 %v230, %v200
        %v243 = vmul.f32 %v230, %v201
        %v244 = vmul.f32 %v230, %v202
        %v245 = vmul.f32 %v230, %v203
        %v246 = vmul.f32 %v230, %v204
        %v247 = vmul.f32 %v230, %v205
        %v248 = vmul.f32 %v230, %v206
        %v249 = vmul.f32 %v230, %v207
        %v250 = vmul.f32 %v230, %v208
        %v251 = vmul.f32 %v230, %v209
        %v252 = vmul.f32 %v230, %v210
        %v253 = vmul.f32 %v235, %v211
        %v254 = vmul.f32 %v235, %v212
        %v255 = vmul.f32 %v235, %v213
        %v256 = vmul.f32 %v235, %v214
        %v257 = vmul.f32 %v235, %v215
        %v258 = vmul.f32 %v235, %v216
        %v259 = vmul.f32 %v235, %v217
        %v260 = vmul.f32 %v235, %v218
        %v261 = vmul.f32 %v235, %v219
        %v262 = vmul.f32 %v235, %v220
        %v263 = vmul.f32 %v235, %v221
        %v264 = vmul.f32 %v235, %v222
        %v265 = vmul.f32 %v235, %v223
        %v266 = vmul.f32 %v235, %v224
        %v267 = vmul.f32 %v235, %v225
        %v268 = vmul.f32 %v235, %v226
        %vm269 = vcmask 1044480
        %v270 = vsel %vm269, %v253, 0.0
        %v271 = vadd.f32 %v237, %v270
        %v272 = vrot.slane %v271, 4
        %v273 = vadd.f32 %v271, %v272
        %v274 = vrot.slane %v273, 2
        %v275 = vadd.f32 %v273, %v274
        %v276 = vrot.slane %v275, 1
        %v277 = vadd.f32 %v275, %v276
        %v278 = vsel %vm269, %v254, 0.0
        %v279 = vadd.f32 %v238, %v278
        %v280 = vrot.slane %v279, 4
        %v281 = vadd.f32 %v279, %v280
        %v282 = vrot.slane %v281, 2
        %v283 = vadd.f32 %v281, %v282
        %v284 = vrot.slane %v283, 1
        %v285 = vadd.f32 %v283, %v284
        %v286 = vsel %vm269, %v255, 0.0
        %v287 = vadd.f32 %v239, %v286
        %v288 = vrot.slane %v287, 4
        %v289 = vadd.f32 %v287, %v288
        %v290 = vrot.slane %v289, 2
        %v291 = vadd.f32 %v289, %v290
        %v292 = vrot.slane %v291, 1
        %v293 = vadd.f32 %v291, %v292
        %v294 = vsel %vm269, %v256, 0.0
        %v295 = vadd.f32 %v240, %v294
        %v296 = vrot.slane %v295, 4
        %v297 = vadd.f32 %v295, %v296
        %v298 = vrot.slane %v297, 2
        %v299 = vadd.f32 %v297, %v298
        %v300 = vrot.slane %v299, 1
        %v301 = vadd.f32 %v299, %v300
        %v302 = vsel %vm269, %v257, 0.0
        %v303 = vadd.f32 %v241, %v302
        %v304 = vrot.slane %v303, 4
        %v305 = vadd.f32 %v303, %v304
        %v306 = vrot.slane %v305, 2
        %v307 = vadd.f32 %v305, %v306
        %v308 = vrot.slane %v307, 1
        %v309 = vadd.f32 %v307, %v308
        %v310 = vsel %vm269, %v258, 0.0
        %v311 = vadd.f32 %v242, %v310
        %v312 = vrot.slane %v311, 4
        %v313 = vadd.f32 %v311, %v312
        %v314 = vrot.slane %v313, 2
        %v315 = vadd.f32 %v313, %v314
        %v316 = vrot.slane %v315, 1
        %v317 = vadd.f32 %v315, %v316
        %v318 = vsel %vm269, %v259, 0.0
        %v319 = vadd.f32 %v243, %v318
        %v320 = vrot.slane %v319, 4
        %v321 = vadd.f32 %v319, %v320
        %v322 = vrot.slane %v321, 2
        %v323 = vadd.f32 %v321, %v322
        %v324 = vrot.slane %v323, 1
        %v325 = vadd.f32 %v323, %v324
        %v326 = vsel %vm269, %v260, 0.0
        %v327 = vadd.f32 %v244, %v326
        %v328 = vrot.slane %v327, 4
        %v329 = vadd.f32 %v327, %v328
        %v330 = vrot.slane %v329, 2
        %v331 = vadd.f32 %v329, %v330
        %v332 = vrot.slane %v331, 1
        %v333 = vadd.f32 %v331, %v332
        %v334 = vsel %vm269, %v261, 0.0
        %v335 = vadd.f32 %v245, %v334
        %v336 = vrot.slane %v335, 4
        %v337 = vadd.f32 %v335, %v336
        %v338 = vrot.slane %v337, 2
        %v339 = vadd.f32 %v337, %v338
        %v340 = vrot.slane %v339, 1
        %v341 = vadd.f32 %v339, %v340
        %v342 = vsel %vm269, %v262, 0.0
        %v343 = vadd.f32 %v246, %v342
        %v344 = vrot.slane %v343, 4
        %v345 = vadd.f32 %v343, %v344
        %v346 = vrot.slane %v345, 2
        %v347 = vadd.f32 %v345, %v346
        %v348 = vrot.slane %v347, 1
        %v349 = vadd.f32 %v347, %v348
        %v350 = vsel %vm269, %v263, 0.0
        %v351 = vadd.f32 %v247, %v350
        %v352 = vrot.slane %v351, 4
        %v353 = vadd.f32 %v351, %v352
        %v354 = vrot.slane %v353, 2
        %v355 = vadd.f32 %v353, %v354
        %v356 = vrot.slane %v355, 1
        %v357 = vadd.f32 %v355, %v356
        %v358 = vsel %vm269, %v264, 0.0
        %v359 = vadd.f32 %v248, %v358
        %v360 = vrot.slane %v359, 4
        %v361 = vadd.f32 %v359, %v360
        %v362 = vrot.slane %v361, 2
        %v363 = vadd.f32 %v361, %v362
        %v364 = vrot.slane %v363, 1
        %v365 = vadd.f32 %v363, %v364
        %v366 = vsel %vm269, %v265, 0.0
        %v367 = vadd.f32 %v249, %v366
        %v368 = vrot.slane %v367, 4
        %v369 = vadd.f32 %v367, %v368
        %v370 = vrot.slane %v369, 2
        %v371 = vadd.f32 %v369, %v370
        %v372 = vrot.slane %v371, 1
        %v373 = vadd.f32 %v371, %v372
        %v374 = vsel %vm269, %v266, 0.0
        %v375 = vadd.f32 %v250, %v374
        %v376 = vrot.slane %v375, 4
        %v377 = vadd.f32 %v375, %v376
        %v378 = vrot.slane %v377, 2
        %v379 = vadd.f32 %v377, %v378
        %v380 = vrot.slane %v379, 1
        %v381 = vadd.f32 %v379, %v380
        %v382 = vsel %vm269, %v267, 0.0
        %v383 = vadd.f32 %v251, %v382
        %v384 = vrot.slane %v383, 4
        %v385 = vadd.f32 %v383, %v384
        %v386 = vrot.slane %v385, 2
        %v387 = vadd.f32 %v385, %v386
        %v388 = vrot.slane %v387, 1
        %v389 = vadd.f32 %v387, %v388
        %v390 = vsel %vm269, %v268, 0.0
        %v391 = vadd.f32 %v252, %v390
        %v392 = vrot.slane %v391, 4
        %v393 = vadd.f32 %v391, %v392
        %v394 = vrot.slane %v393, 2
        %v395 = vadd.f32 %v393, %v394
        %v396 = vrot.slane %v395, 1
        %v397 = vadd.f32 %v395, %v396
        %v414 = vcombine.low %v277, %v285
        %v415 = vcombine.low %v293, %v301
        %v416 = vcombine.low %v309, %v317
        %v417 = vcombine.low %v325, %v333
        %v419 = vunpack.c.l.s4 1966171168
        %v420 = vunpack.c.0.s8 %v419
        %v421 = vlaneseq
        %v422 = vshrl.u32 %v421, 7
        %v423 = vsub.s32 %v420, %v422
        %v424 = vrot.slane %v414, %v423
        %v426 = vunpack.c.l.s4 1966171168
        %v427 = vunpack.c.0.s8 %v426
        %v428 = vlaneseq
        %v429 = vshrl.u32 %v428, 7
        %v430 = vsub.s32 %v427, %v429
        %v431 = vrot.slane %v415, %v430
        %v433 = vunpack.c.l.s4 1966171168
        %v434 = vunpack.c.0.s8 %v433
        %v435 = vlaneseq
        %v436 = vshrl.u32 %v435, 7
        %v437 = vsub.s32 %v434, %v436
        %v438 = vrot.slane %v416, %v437
        %v440 = vunpack.c.l.s4 1966171168
        %v441 = vunpack.c.0.s8 %v440
        %v442 = vlaneseq
        %v443 = vshrl.u32 %v442, 7
        %v444 = vsub.s32 %v441, %v443
        %v445 = vrot.slane %v417, %v444
        %v446 = vcombine.low %v424, %v431
        %v447 = vcombine.low %v438, %v445
        %v449 = vunpack.c.l.s4 1966171168
        %v450 = vunpack.c.0.s8 %v449
        %v451 = vlaneseq
        %v452 = vshrl.u32 %v451, 7
        %v453 = vsub.s32 %v450, %v452
        %v454 = vrot.slane %v446, %v453
        %v456 = vunpack.c.l.s4 1966171168
        %v457 = vunpack.c.0.s8 %v456
        %v458 = vlaneseq
        %v459 = vshrl.u32 %v458, 7
        %v460 = vsub.s32 %v457, %v459
        %v461 = vrot.slane %v447, %v460
        %v462 = vcombine.low %v454, %v461
        %v463 = vcombine.low %v341, %v349
        %v464 = vcombine.low %v357, %v365
        %v465 = vcombine.low %v373, %v381
        %v466 = vcombine.low %v389, %v397
        %v468 = vunpack.c.l.s4 1966171168
        %v469 = vunpack.c.0.s8 %v468
        %v470 = vlaneseq
        %v471 = vshrl.u32 %v470, 7
        %v472 = vsub.s32 %v469, %v471
        %v473 = vrot.slane %v463, %v472
        %v475 = vunpack.c.l.s4 1966171168
        %v476 = vunpack.c.0.s8 %v475
        %v477 = vlaneseq
        %v478 = vshrl.u32 %v477, 7
        %v479 = vsub.s32 %v476, %v478
        %v480 = vrot.slane %v464, %v479
        %v482 = vunpack.c.l.s4 1966171168
        %v483 = vunpack.c.0.s8 %v482
        %v484 = vlaneseq
        %v485 = vshrl.u32 %v484, 7
        %v486 = vsub.s32 %v483, %v485
        %v487 = vrot.slane %v465, %v486
        %v489 = vunpack.c.l.s4 1966171168
        %v490 = vunpack.c.0.s8 %v489
        %v491 = vlaneseq
        %v492 = vshrl.u32 %v491, 7
        %v493 = vsub.s32 %v490, %v492
        %v494 = vrot.slane %v466, %v493
        %v495 = vcombine.low %v473, %v480
        %v496 = vcombine.low %v487, %v494
        %v498 = vunpack.c.l.s4 1966171168
        %v499 = vunpack.c.0.s8 %v498
        %v500 = vlaneseq
        %v501 = vshrl.u32 %v500, 7
        %v502 = vsub.s32 %v499, %v501
        %v503 = vrot.slane %v495, %v502
        %v505 = vunpack.c.l.s4 1966171168
        %v506 = vunpack.c.0.s8 %v505
        %v507 = vlaneseq
        %v508 = vshrl.u32 %v507, 7
        %v509 = vsub.s32 %v506, %v508
        %v510 = vrot.slane %v496, %v509
        %v511 = vcombine.low %v503, %v510
        %514 = vst [vmem:[%s176] sm:$0xff] %v462
        %515 = vst [vmem:[%s176 + $0x8] sm:$0xff] %v511
        %s516 = sand.u32 %s92, 1
        %s517 = scalar_lea.sflag [#allocation3], %s516
        %s518 = sand.u32 %s92, 1
        %s519 = smul.addr %s518, 16
        %s520 = scalar_lea.vmem [#allocation2], %s519
        // Predicated region
        $region29: #{fuse_net_forward.3} parent=27 // pred_check
          %p521 = pneg %p102
        $region30: #{fuse_net_forward.3} parent=27 // pred_check_branch
          %523 = sbr.rel (%p521) target = $region32
        $region31: #{fuse_net_forward.3} parent=27 // pred_region
          %s524 = smul.u32 16, %s21
          %s526 = ssub.s32 256, 256
          %527 = vsyncadd %s517, %s526
          %s528 = smul.addr %s20, 16
          %s529 = sadd.s32 %s524, %s528
          %s530 = smul.addr %s529, 16
          %s531 = scalar_lea.hbm %s2, %s530
          %s533 = sshll.u32 %s520, 4
          %s534 = int_to_ptr.vmem [resolvable:$true] %s533
          %536 = dma.vmem_to_hbm [thread:$0]  %s534, 256, %s531, %s517
        $region32: #{fuse_net_forward.3} parent=27 // pred_fallthru
          _
      $region28: #{fuse_net_forward.3} parent=5 // pred_fallthru
        _
      %p537 = scmp.le.s32.totalorder 2, %s11
      // Predicated region
      $region33: #{fuse_net_forward.3} parent=5 // pred_check
        %p538 = pneg %p537
      $region34: #{fuse_net_forward.3} parent=5 // pred_check_branch
        %540 = sbr.rel (%p538) target = $region36
      $region35: #{fuse_net_forward.3} parent=5 // pred_region
        %s541 = ssub.s32 %s11, 2
        // Predicated region
        $region37: #{fuse_net_forward.3} parent=35 // pred_check
          %p542 = pneg %p108
        $region38: #{fuse_net_forward.3} parent=35 // pred_check_branch
          %544 = sbr.rel (%p542) target = $region40
        $region39: #{fuse_net_forward.3} parent=35 // pred_region
          %s545 = sand.u32 %s93, 1
          %s546 = scalar_lea.sflag [#allocation3], %s545
          %s547 = sand.u32 %s93, 1
          %s548 = smul.addr %s547, 16
          %s549 = scalar_lea.vmem [#allocation2], %s548
          %550 = dma.done %s546, 256
        $region40: #{fuse_net_forward.3} parent=35 // pred_fallthru
          _
      $region36: #{fuse_net_forward.3} parent=5 // pred_fallthru
        _
    $region6: #{fuse_net_forward.3} parent=1 // loop_footer
      %s15 = sadd.s32 1, %s11
    $region7: #{fuse_net_forward.3} parent=1 // loop_footer_branch
      %10 = sbr.rel target = $region3
    $region8: #{fuse_net_forward.3} parent=1 // loop_exit
      _
    %551 = vsyncpa [#allocation3], 1
    %s552 = scalar_lea.sflag [#allocation3], 1
    %553 = vsyncpa %s552, 1

// kernel: fuse_net_forward.2
$region0: #{fuse_net_forward.2}
  #allocation0 [shape = 'u32[]', space=smem, size = 0x4, offset = 0x4, fixed_abs, tag = 'smem constant byte address 0x4 - core index']
  #allocation1 [shape = 'u32[144,128]{1,0:T(1,128)}', space=vmem, size = 0x12000, scoped, tag = 'internal scratch']
  #allocation2 [shape = 'f32[13,8192]{1,0:T(8,128)}', space=vmem, size = 0x80000, scoped, tag = 'scratch operand']
  %s0 = inlined_call_operand.vmem [shape: f32[2,3,32768], index: 0, kind: input, shape index: {}]
  %s1 = inlined_call_operand.vmem [shape: f32[13,3], index: 1, kind: input, shape index: {}]
  %s2 = inlined_call_operand.vmem [shape: f32[13,1], index: 2, kind: input, shape index: {}]
  %s3 = inlined_call_operand.vmem [shape: f32[2,2,13,1], index: 3, kind: output, shape index: {}]
  %s4 = sld [smem:[#allocation0]]
  $region53: #{fuse_net_forward.2} parent=0
    _
  %s6 = ssub.s32 1, %s4
  %s7 = scalar_select 0, %s6, %s4
  loop: start=0, step=1, limit=10
  $region2: #{fuse_net_forward.2} parent=0 // loop_pre_header
    _
  $region3: #{fuse_net_forward.2} parent=0 // loop_header
    %s9 = sphi 0, %s13
    %p10 = scmp.ge.s32.totalorder %s9, 10
    %s16 = sphi 0, %s35
    %s17 = sphi 0, %s31
    %s18 = sphi 0, %s27
    %s19 = sphi 0, %s16
    %s20 = sphi 0, %s17
    %s21 = sphi 0, %s18
    %s22 = sphi 0, %s19
    %s23 = sphi 0, %s20
    %s24 = sphi 0, %s21
    %s44 = sphi 0, %s46
    %s47 = sphi 0, %s44
    %s48 = sphi 0, %s47
    %s64 = sphi 0, %s48
    %s68 = sphi 0, %s68
    %s70 = sphi 0, %s68
    %s71 = sphi 0, %s70
    %s85 = sphi 0, %s71
    %s89 = sphi 0, %s89
    %s91 = sphi 0, %s89
    %s92 = sphi 0, %s91
    %s106 = sphi 0, %s92
    %s114 = sphi 0, %s116
    %s117 = sphi 0, %s114
    %s118 = sphi 0, %s117
    %s134 = sphi 0, %s118
  $region4: #{fuse_net_forward.2} parent=0 // loop_header_branch
    %12 = sbr.rel (%p10) target = $region8
  $region5: #{fuse_net_forward.2} parent=0 // loop_body
    %s14 = ssub.s32 %s9, 1
    %s15 = ssub.s32 %s9, 2
    %s25 = sadd.s32 1, %s18
    %p26 = scmp.ge.s32.totalorder %s25, 2
    %s27 = scalar_select %p26, 0, %s25
    %s28 = sadd.s32 1, %s17
    %s29 = scalar_select %p26, %s28, %s17
    %p30 = scmp.ge.s32.totalorder %s29, 2
    %s31 = scalar_select %p30, 0, %s29
    %s32 = sadd.s32 1, %s16
    %s33 = scalar_select %p30, %s32, %s16
    %p34 = scmp.ge.s32.totalorder %s33, 2
    %s35 = scalar_select %p34, 0, %s33
    %s36 = smul.u32 %s17, 2
    %s37 = sadd.s32 %s36, %s18
    %s38 = smul.u32 %s31, 2
    %s39 = sadd.s32 %s38, %s27
    %s40 = ssub.s32 %s16, %s35
    %s41 = ssub.s32 %s37, %s39
    %s42 = sor.u32 %s40, %s41
    %p43 = scmp.eq.s32.totalorder %s42, 0
    %s45 = sadd.s32 %s44, 1
    %s46 = scalar_select %p43, %s44, %s45
    %p49 = pneg %p43
    %p50 = scmp.eq.s32.totalorder %s9, 7
    %p51 = por %p49, %p50
    %p52 = scmp.ne.s32.totalorder %s44, %s47
    %p53 = scmp.eq.s32.totalorder %s9, 0
    %p54 = por %p52, %p53
    %p55 = scmp.ne.s32.totalorder %s44, %s47
    %p56 = scmp.eq.s32.totalorder %s14, 7
    %p57 = por %p55, %p56
    %p58 = scmp.ne.s32.totalorder %s47, %s48
    %p59 = scmp.eq.s32.totalorder %s14, 0
    %p60 = por %p58, %p59
    %p61 = scmp.ne.s32.totalorder %s47, %s48
    %p62 = scmp.eq.s32.totalorder %s15, 7
    %p63 = por %p61, %p62
    %p65 = scmp.ne.s32.totalorder %s48, %s64
    %p66 = scmp.eq.s32.totalorder %s15, 0
    %p67 = por %p65, %p66
    %s69 = sadd.s32 %s68, 1
    %p72 = scmp.eq.s32.totalorder %s9, 7
    %p73 = scmp.ne.s32.totalorder %s68, %s70
    %p74 = scmp.eq.s32.totalorder %s9, 0
    %p75 = por %p73, %p74
    %p76 = scmp.ne.s32.totalorder %s68, %s70
    %p77 = scmp.eq.s32.totalorder %s14, 7
    %p78 = por %p76, %p77
    %p79 = scmp.ne.s32.totalorder %s70, %s71
    %p80 = scmp.eq.s32.totalorder %s14, 0
    %p81 = por %p79, %p80
    %p82 = scmp.ne.s32.totalorder %s70, %s71
    %p83 = scmp.eq.s32.totalorder %s15, 7
    %p84 = por %p82, %p83
    %p86 = scmp.ne.s32.totalorder %s71, %s85
    %p87 = scmp.eq.s32.totalorder %s15, 0
    %p88 = por %p86, %p87
    %s90 = sadd.s32 %s89, 1
    %p93 = scmp.eq.s32.totalorder %s9, 7
    %p94 = scmp.ne.s32.totalorder %s89, %s91
    %p95 = scmp.eq.s32.totalorder %s9, 0
    %p96 = por %p94, %p95
    %p97 = scmp.ne.s32.totalorder %s89, %s91
    %p98 = scmp.eq.s32.totalorder %s14, 7
    %p99 = por %p97, %p98
    %p100 = scmp.ne.s32.totalorder %s91, %s92
    %p101 = scmp.eq.s32.totalorder %s14, 0
    %p102 = por %p100, %p101
    %p103 = scmp.ne.s32.totalorder %s91, %s92
    %p104 = scmp.eq.s32.totalorder %s15, 7
    %p105 = por %p103, %p104
    %p107 = scmp.ne.s32.totalorder %s92, %s106
    %p108 = scmp.eq.s32.totalorder %s15, 0
    %p109 = por %p107, %p108
    %s110 = ssub.s32 %s16, %s35
    %s111 = ssub.s32 %s17, %s31
    %s112 = sor.u32 %s110, %s111
    %p113 = scmp.eq.s32.totalorder %s112, 0
    %s115 = sadd.s32 %s114, 1
    %s116 = scalar_select %p113, %s114, %s115
    %p119 = pneg %p113
    %p120 = scmp.eq.s32.totalorder %s9, 7
    %p121 = por %p119, %p120
    %p122 = scmp.ne.s32.totalorder %s114, %s117
    %p123 = scmp.eq.s32.totalorder %s9, 0
    %p124 = por %p122, %p123
    %p125 = scmp.ne.s32.totalorder %s114, %s117
    %p126 = scmp.eq.s32.totalorder %s14, 7
    %p127 = por %p125, %p126
    %p128 = scmp.ne.s32.totalorder %s117, %s118
    %p129 = scmp.eq.s32.totalorder %s14, 0
    %p130 = por %p128, %p129
    %p131 = scmp.ne.s32.totalorder %s117, %s118
    %p132 = scmp.eq.s32.totalorder %s15, 7
    %p133 = por %p131, %p132
    %p135 = scmp.ne.s32.totalorder %s118, %s134
    %p136 = scmp.eq.s32.totalorder %s15, 0
    %p137 = por %p135, %p136
    %p138 = scmp.le.s32.totalorder 1, %s9
    %p139 = scmp.lt.s32.totalorder %s9, 9
    %p140 = pnand %p138, %p139
    %p141 = pneg %p140
    // Predicated region
    $region9: #{fuse_net_forward.2} parent=5 // pred_check
      _
    $region10: #{fuse_net_forward.2} parent=5 // pred_check_branch
      %143 = sbr.rel (%p140) target = $region12
    $region11: #{fuse_net_forward.2} parent=5 // pred_region
      %s144 = ssub.s32 %s9, 1
      // Predicated region
      $region13: #{fuse_net_forward.2} parent=11 // pred_check
        %p145 = pneg %p81
      $region14: #{fuse_net_forward.2} parent=11 // pred_check_branch
        %147 = sbr.rel (%p145) target = $region16
      $region15: #{fuse_net_forward.2} parent=11 // pred_region
        _
      $region16: #{fuse_net_forward.2} parent=11 // pred_fallthru
        _
      // Predicated region
      $region17: #{fuse_net_forward.2} parent=11 // pred_check
        %p148 = pneg %p102
      $region18: #{fuse_net_forward.2} parent=11 // pred_check_branch
        %150 = sbr.rel (%p148) target = $region20
      $region19: #{fuse_net_forward.2} parent=11 // pred_region
        _
      $region20: #{fuse_net_forward.2} parent=11 // pred_fallthru
        _
    $region12: #{fuse_net_forward.2} parent=5 // pred_fallthru
      _
    %p151 = scmp.lt.s32.totalorder %s9, 8
    // Predicated region
    $region21: #{fuse_net_forward.2} parent=5 // pred_check
      %p152 = pneg %p151
    $region22: #{fuse_net_forward.2} parent=5 // pred_check_branch
      %154 = sbr.rel (%p152) target = $region24
    $region23: #{fuse_net_forward.2} parent=5 // pred_region
      // Predicated region
      $region25: #{fuse_net_forward.2} parent=23 // pred_check
        %p155 = pneg %p54
      $region26: #{fuse_net_forward.2} parent=23 // pred_check_branch
        %157 = sbr.rel (%p155) target = $region28
      $region27: #{fuse_net_forward.2} parent=23 // pred_region
        %s158 = smul.u32 %s17, 2
        %s159 = sadd.s32 %s158, %s18
        %s160 = smul.u32 64, %s159
        %p161 = scmp.lt.s32.totalorder %s16, 1
        %s162 = scalar_select %p161, %s16, 1
        %p163 = scmp.lt.s32.totalorder %s160, 255
        %s164 = scalar_select %p163, %s160, 255
        %s165 = smul.addr %s162, 256
        %s166 = sadd.s32 %s164, %s165
        %s167 = smul.addr %s166, 4
        %s168 = scalar_lea.vmem %s0, %s167
        %s169 = smul.u32 %s17, 2
        %s170 = sadd.s32 %s169, %s18
        %s171 = smul.u32 64, %s170
      $region28: #{fuse_net_forward.2} parent=23 // pred_fallthru
        _
    $region24: #{fuse_net_forward.2} parent=5 // pred_fallthru
      _
    %p172 = scmp.le.s32.totalorder 1, %s9
    %p173 = scmp.lt.s32.totalorder %s9, 9
    %p174 = pnand %p172, %p173
    %p175 = pneg %p174
    // Predicated region
    $region29: #{fuse_net_forward.2} parent=5 // pred_check
      _
    $region30: #{fuse_net_forward.2} parent=5 // pred_check_branch
      %177 = sbr.rel (%p174) target = $region32
    $region31: #{fuse_net_forward.2} parent=5 // pred_region
      %s178 = ssub.s32 %s9, 1
      %s179 = smul.u32 %s20, 2
      %s180 = sadd.s32 %s179, %s21
      %s181 = smul.u32 64, %s180
      %p182 = scmp.lt.s32.totalorder %s19, 1
      %s183 = scalar_select %p182, %s19, 1
      %p184 = scmp.lt.s32.totalorder %s181, 255
      %s185 = scalar_select %p184, %s181, 255
      %s186 = smul.addr %s183, 256
      %s187 = sadd.s32 %s185, %s186
      %s188 = smul.addr %s187, 4
      %s189 = scalar_lea.vmem %s0, %s188
      %p190 = pneg %p60
      %p191 = pneg %p57
      %p192 = pneg %p81
      %p193 = pneg %p78
      %p194 = pneg %p102
      %p195 = pneg %p99
      %p196 = pneg %p130
      %p197 = pneg %p127
      %p198 = scmp.lt.s32.totalorder %s19, 1
      %s199 = scalar_select %p198, %s19, 1
      %p200 = scmp.lt.s32.totalorder %s20, 1
      %s201 = scalar_select %p200, %s20, 1
      %s202 = smul.addr %s201, 2
      %s203 = smul.addr %s199, 4
      %s204 = sadd.s32 %s202, %s203
      %s205 = smul.addr %s204, 8
      %s206 = scalar_lea.vmem %s3, %s205
      %s207 = smul.u32 %s20, 2
      %s208 = sadd.s32 %s207, %s21
      %s209 = smul.u32 64, %s208
      %p210 = scmp.lt.s32.totalorder %s19, 1
      %s211 = scalar_select %p210, %s19, 1
      %p212 = scmp.lt.s32.totalorder %s209, 255
      %s213 = scalar_select %p212, %s209, 255
      %s214 = smul.addr %s211, 256
      %s215 = sadd.s32 %s213, %s214
      %s216 = smul.addr %s215, 4
      %s217 = scalar_lea.vmem %s0, %s216
      %s218 = smul.u32 %s20, 2
      %s219 = sadd.s32 %s218, %s21
      %s220 = smul.u32 64, %s219
      %p221 = scmp.lt.s32.totalorder %s19, 1
      %s222 = scalar_select %p221, %s19, 1
      %p223 = scmp.lt.s32.totalorder %s20, 1
      %s224 = scalar_select %p223, %s20, 1
      %s225 = smul.addr %s224, 2
      %s226 = smul.addr %s222, 4
      %s227 = sadd.s32 %s225, %s226
      %s228 = smul.addr %s227, 8
      %s229 = scalar_lea.vmem %s3, %s228
      %p230 = scmp.eq.s32.totalorder %s21, 0
      // Predicated region
      $region33: #{fuse_net_forward.2} parent=31 // pred_check
        %p231 = pneg %p230
      $region34: #{fuse_net_forward.2} parent=31 // pred_check_branch
        %233 = sbr.rel (%p231) target = $region36
      $region35: #{fuse_net_forward.2} parent=31 // pred_region
        %234 = vst [vmem:[#allocation2] sm:$0xff] 0.0
        %235 = vst [vmem:[#allocation2 + $0x8] sm:$0xff] 0.0
        %236 = vst [vmem:[#allocation2 + $0x10] sm:$0xff] 0.0
        %237 = vst [vmem:[#allocation2 + $0x18] sm:$0xff] 0.0
        %238 = vst [vmem:[#allocation2 + $0x20] sm:$0xff] 0.0
        %239 = vst [vmem:[#allocation2 + $0x28] sm:$0xff] 0.0
        %240 = vst [vmem:[#allocation2 + $0x30] sm:$0xff] 0.0
        %241 = vst [vmem:[#allocation2 + $0x38] sm:$0xff] 0.0
        %242 = vst [vmem:[#allocation2 + $0x40] sm:$0xff] 0.0
        %243 = vst [vmem:[#allocation2 + $0x48] sm:$0xff] 0.0
        %244 = vst [vmem:[#allocation2 + $0x50] sm:$0xff] 0.0
        %245 = vst [vmem:[#allocation2 + $0x58] sm:$0xff] 0.0
        %246 = vst [vmem:[#allocation2 + $0x60] sm:$0xff] 0.0
        %247 = vst [vmem:[#allocation2 + $0x68] sm:$0xff] 0.0
        %248 = vst [vmem:[#allocation2 + $0x70] sm:$0xff] 0.0
        %249 = vst [vmem:[#allocation2 + $0x78] sm:$0xff] 0.0
        %250 = vst [vmem:[#allocation2 + $0x80] sm:$0xff] 0.0
        %251 = vst [vmem:[#allocation2 + $0x88] sm:$0xff] 0.0
        %252 = vst [vmem:[#allocation2 + $0x90] sm:$0xff] 0.0
        %253 = vst [vmem:[#allocation2 + $0x98] sm:$0xff] 0.0
        %254 = vst [vmem:[#allocation2 + $0xa0] sm:$0xff] 0.0
        %255 = vst [vmem:[#allocation2 + $0xa8] sm:$0xff] 0.0
        %256 = vst [vmem:[#allocation2 + $0xb0] sm:$0xff] 0.0
        %257 = vst [vmem:[#allocation2 + $0xb8] sm:$0xff] 0.0
        %258 = vst [vmem:[#allocation2 + $0xc0] sm:$0xff] 0.0
        %259 = vst [vmem:[#allocation2 + $0xc8] sm:$0xff] 0.0
        %260 = vst [vmem:[#allocation2 + $0xd0] sm:$0xff] 0.0
        %261 = vst [vmem:[#allocation2 + $0xd8] sm:$0xff] 0.0
        %262 = vst [vmem:[#allocation2 + $0xe0] sm:$0xff] 0.0
        %263 = vst [vmem:[#allocation2 + $0xe8] sm:$0xff] 0.0
        %264 = vst [vmem:[#allocation2 + $0xf0] sm:$0xff] 0.0
        %265 = vst [vmem:[#allocation2 + $0xf8] sm:$0xff] 0.0
        %266 = vst [vmem:[#allocation2 + $0x100] sm:$0xff] 0.0
        %267 = vst [vmem:[#allocation2 + $0x108] sm:$0xff] 0.0
        %268 = vst [vmem:[#allocation2 + $0x110] sm:$0xff] 0.0
        %269 = vst [vmem:[#allocation2 + $0x118] sm:$0xff] 0.0
        %270 = vst [vmem:[#allocation2 + $0x120] sm:$0xff] 0.0
        %271 = vst [vmem:[#allocation2 + $0x128] sm:$0xff] 0.0
        %272 = vst [vmem:[#allocation2 + $0x130] sm:$0xff] 0.0
        %273 = vst [vmem:[#allocation2 + $0x138] sm:$0xff] 0.0
        %274 = vst [vmem:[#allocation2 + $0x140] sm:$0xff] 0.0
        %275 = vst [vmem:[#allocation2 + $0x148] sm:$0xff] 0.0
        %276 = vst [vmem:[#allocation2 + $0x150] sm:$0xff] 0.0
        %277 = vst [vmem:[#allocation2 + $0x158] sm:$0xff] 0.0
        %278 = vst [vmem:[#allocation2 + $0x160] sm:$0xff] 0.0
        %279 = vst [vmem:[#allocation2 + $0x168] sm:$0xff] 0.0
        %280 = vst [vmem:[#allocation2 + $0x170] sm:$0xff] 0.0
        %281 = vst [vmem:[#allocation2 + $0x178] sm:$0xff] 0.0
        %282 = vst [vmem:[#allocation2 + $0x180] sm:$0xff] 0.0
        %283 = vst [vmem:[#allocation2 + $0x188] sm:$0xff] 0.0
        %284 = vst [vmem:[#allocation2 + $0x190] sm:$0xff] 0.0
        %285 = vst [vmem:[#allocation2 + $0x198] sm:$0xff] 0.0
        %286 = vst [vmem:[#allocation2 + $0x1a0] sm:$0xff] 0.0
        %287 = vst [vmem:[#allocation2 + $0x1a8] sm:$0xff] 0.0
        %288 = vst [vmem:[#allocation2 + $0x1b0] sm:$0xff] 0.0
        %289 = vst [vmem:[#allocation2 + $0x1b8] sm:$0xff] 0.0
        %290 = vst [vmem:[#allocation2 + $0x1c0] sm:$0xff] 0.0
        %291 = vst [vmem:[#allocation2 + $0x1c8] sm:$0xff] 0.0
        %292 = vst [vmem:[#allocation2 + $0x1d0] sm:$0xff] 0.0
        %293 = vst [vmem:[#allocation2 + $0x1d8] sm:$0xff] 0.0
        %294 = vst [vmem:[#allocation2 + $0x1e0] sm:$0xff] 0.0
        %295 = vst [vmem:[#allocation2 + $0x1e8] sm:$0xff] 0.0
        %296 = vst [vmem:[#allocation2 + $0x1f0] sm:$0xff] 0.0
        %297 = vst [vmem:[#allocation2 + $0x1f8] sm:$0xff] 0.0
        %298 = vst [vmem:[#allocation2 + $0x200] sm:$0x1f] 0.0
        %299 = vst [vmem:[#allocation2 + $0x208] sm:$0x1f] 0.0
        %300 = vst [vmem:[#allocation2 + $0x210] sm:$0x1f] 0.0
        %301 = vst [vmem:[#allocation2 + $0x218] sm:$0x1f] 0.0
        %302 = vst [vmem:[#allocation2 + $0x220] sm:$0x1f] 0.0
        %303 = vst [vmem:[#allocation2 + $0x228] sm:$0x1f] 0.0
        %304 = vst [vmem:[#allocation2 + $0x230] sm:$0x1f] 0.0
        %305 = vst [vmem:[#allocation2 + $0x238] sm:$0x1f] 0.0
        %306 = vst [vmem:[#allocation2 + $0x240] sm:$0x1f] 0.0
        %307 = vst [vmem:[#allocation2 + $0x248] sm:$0x1f] 0.0
        %308 = vst [vmem:[#allocation2 + $0x250] sm:$0x1f] 0.0
        %309 = vst [vmem:[#allocation2 + $0x258] sm:$0x1f] 0.0
        %310 = vst [vmem:[#allocation2 + $0x260] sm:$0x1f] 0.0
        %311 = vst [vmem:[#allocation2 + $0x268] sm:$0x1f] 0.0
        %312 = vst [vmem:[#allocation2 + $0x270] sm:$0x1f] 0.0
        %313 = vst [vmem:[#allocation2 + $0x278] sm:$0x1f] 0.0
        %314 = vst [vmem:[#allocation2 + $0x280] sm:$0x1f] 0.0
        %315 = vst [vmem:[#allocation2 + $0x288] sm:$0x1f] 0.0
        %316 = vst [vmem:[#allocation2 + $0x290] sm:$0x1f] 0.0
        %317 = vst [vmem:[#allocation2 + $0x298] sm:$0x1f] 0.0
        %318 = vst [vmem:[#allocation2 + $0x2a0] sm:$0x1f] 0.0
        %319 = vst [vmem:[#allocation2 + $0x2a8] sm:$0x1f] 0.0
        %320 = vst [vmem:[#allocation2 + $0x2b0] sm:$0x1f] 0.0
        %321 = vst [vmem:[#allocation2 + $0x2b8] sm:$0x1f] 0.0
        %322 = vst [vmem:[#allocation2 + $0x2c0] sm:$0x1f] 0.0
        %323 = vst [vmem:[#allocation2 + $0x2c8] sm:$0x1f] 0.0
        %324 = vst [vmem:[#allocation2 + $0x2d0] sm:$0x1f] 0.0
        %325 = vst [vmem:[#allocation2 + $0x2d8] sm:$0x1f] 0.0
        %326 = vst [vmem:[#allocation2 + $0x2e0] sm:$0x1f] 0.0
        %327 = vst [vmem:[#allocation2 + $0x2e8] sm:$0x1f] 0.0
        %328 = vst [vmem:[#allocation2 + $0x2f0] sm:$0x1f] 0.0
        %329 = vst [vmem:[#allocation2 + $0x2f8] sm:$0x1f] 0.0
        %330 = vst [vmem:[#allocation2 + $0x300] sm:$0x1f] 0.0
        %331 = vst [vmem:[#allocation2 + $0x308] sm:$0x1f] 0.0
        %332 = vst [vmem:[#allocation2 + $0x310] sm:$0x1f] 0.0
        %333 = vst [vmem:[#allocation2 + $0x318] sm:$0x1f] 0.0
        %334 = vst [vmem:[#allocation2 + $0x320] sm:$0x1f] 0.0
        %335 = vst [vmem:[#allocation2 + $0x328] sm:$0x1f] 0.0
        %336 = vst [vmem:[#allocation2 + $0x330] sm:$0x1f] 0.0
        %337 = vst [vmem:[#allocation2 + $0x338] sm:$0x1f] 0.0
        %338 = vst [vmem:[#allocation2 + $0x340] sm:$0x1f] 0.0
        %339 = vst [vmem:[#allocation2 + $0x348] sm:$0x1f] 0.0
        %340 = vst [vmem:[#allocation2 + $0x350] sm:$0x1f] 0.0
        %341 = vst [vmem:[#allocation2 + $0x358] sm:$0x1f] 0.0
        %342 = vst [vmem:[#allocation2 + $0x360] sm:$0x1f] 0.0
        %343 = vst [vmem:[#allocation2 + $0x368] sm:$0x1f] 0.0
        %344 = vst [vmem:[#allocation2 + $0x370] sm:$0x1f] 0.0
        %345 = vst [vmem:[#allocation2 + $0x378] sm:$0x1f] 0.0
        %346 = vst [vmem:[#allocation2 + $0x380] sm:$0x1f] 0.0
        %347 = vst [vmem:[#allocation2 + $0x388] sm:$0x1f] 0.0
        %348 = vst [vmem:[#allocation2 + $0x390] sm:$0x1f] 0.0
        %349 = vst [vmem:[#allocation2 + $0x398] sm:$0x1f] 0.0
        %350 = vst [vmem:[#allocation2 + $0x3a0] sm:$0x1f] 0.0
        %351 = vst [vmem:[#allocation2 + $0x3a8] sm:$0x1f] 0.0
        %352 = vst [vmem:[#allocation2 + $0x3b0] sm:$0x1f] 0.0
        %353 = vst [vmem:[#allocation2 + $0x3b8] sm:$0x1f] 0.0
        %354 = vst [vmem:[#allocation2 + $0x3c0] sm:$0x1f] 0.0
        %355 = vst [vmem:[#allocation2 + $0x3c8] sm:$0x1f] 0.0
        %356 = vst [vmem:[#allocation2 + $0x3d0] sm:$0x1f] 0.0
        %357 = vst [vmem:[#allocation2 + $0x3d8] sm:$0x1f] 0.0
        %358 = vst [vmem:[#allocation2 + $0x3e0] sm:$0x1f] 0.0
        %359 = vst [vmem:[#allocation2 + $0x3e8] sm:$0x1f] 0.0
        %360 = vst [vmem:[#allocation2 + $0x3f0] sm:$0x1f] 0.0
        %361 = vst [vmem:[#allocation2 + $0x3f8] sm:$0x1f] 0.0
      $region36: #{fuse_net_forward.2} parent=31 // pred_fallthru
        _
      %v362 = vld [vmem:[%s217] sm:$0x77]
      %v363 = vld [vmem:[%s217 + $0x8] sm:$0x77]
      %v364 = vld [vmem:[%s217 + $0x10] sm:$0x77]
      %v365 = vld [vmem:[%s217 + $0x18] sm:$0x77]
      %v366 = vld [vmem:[%s217 + $0x20] sm:$0x77]
      %v367 = vld [vmem:[%s217 + $0x28] sm:$0x77]
      %v368 = vld [vmem:[%s217 + $0x30] sm:$0x77]
      %v369 = vld [vmem:[%s217 + $0x38] sm:$0x77]
      %v370 = vld [vmem:[%s217 + $0x40] sm:$0x77]
      %v371 = vld [vmem:[%s217 + $0x48] sm:$0x77]
      %v372 = vld [vmem:[%s217 + $0x50] sm:$0x77]
      %v373 = vld [vmem:[%s217 + $0x58] sm:$0x77]
      %v374 = vld [vmem:[%s217 + $0x60] sm:$0x77]
      %v375 = vld [vmem:[%s217 + $0x68] sm:$0x77]
      %v376 = vld [vmem:[%s217 + $0x70] sm:$0x77]
      %v377 = vld [vmem:[%s217 + $0x78] sm:$0x77]
      %v378 = vld [vmem:[%s217 + $0x80] sm:$0x77]
      %v379 = vld [vmem:[%s217 + $0x88] sm:$0x77]
      %v380 = vld [vmem:[%s217 + $0x90] sm:$0x77]
      %v381 = vld [vmem:[%s217 + $0x98] sm:$0x77]
      %v382 = vld [vmem:[%s217 + $0xa0] sm:$0x77]
      %v383 = vld [vmem:[%s217 + $0xa8] sm:$0x77]
      %v384 = vld [vmem:[%s217 + $0xb0] sm:$0x77]
      %v385 = vld [vmem:[%s217 + $0xb8] sm:$0x77]
      %v386 = vld [vmem:[%s217 + $0xc0] sm:$0x77]
      %v387 = vld [vmem:[%s217 + $0xc8] sm:$0x77]
      %v388 = vld [vmem:[%s217 + $0xd0] sm:$0x77]
      %v389 = vld [vmem:[%s217 + $0xd8] sm:$0x77]
      %v390 = vld [vmem:[%s217 + $0xe0] sm:$0x77]
      %v391 = vld [vmem:[%s217 + $0xe8] sm:$0x77]
      %v392 = vld [vmem:[%s217 + $0xf0] sm:$0x77]
      %v393 = vld [vmem:[%s217 + $0xf8] sm:$0x77]
      %v394 = vld [vmem:[%s1] sm:$0xff]
      %v395 = vld [vmem:[%s1 + $0x8] sm:$0x1f]
      %v396 = vld [vmem:[%s2] sm:$0xff]
      %v397 = vld [vmem:[%s2 + $0x8] sm:$0x1f]
      %399 = vset.pattern.permute.xlu0 0
      %400 = vperm.xlu0 %399, %v394
      %v401 = vpop.permute.xlu0 %400
      %404 = vset.pattern.permute.xlu0 0
      %405 = vperm.xlu0 %404, %v395
      %v406 = vpop.permute.xlu0 %405
      %v440 = vlaneseq
      %v441 = vshrl.u32 %v440, 7
      %v442 = vsub.s32 0, %v441
      %v443 = vrot.slane %v362, %v442
      %v444 = vlaneseq
      %v445 = vshrl.u32 %v444, 7
      %v446 = vsub.s32 4, %v445
      %v447 = vrot.slane %v362, %v446
      %v448 = vlaneseq
      %v449 = vshrl.u32 %v448, 7
      %v450 = vsub.s32 0, %v449
      %v451 = vrot.slane %v363, %v450
      %v452 = vlaneseq
      %v453 = vshrl.u32 %v452, 7
      %v454 = vsub.s32 4, %v453
      %v455 = vrot.slane %v363, %v454
      %v456 = vlaneseq
      %v457 = vshrl.u32 %v456, 7
      %v458 = vsub.s32 0, %v457
      %v459 = vrot.slane %v364, %v458
      %v460 = vlaneseq
      %v461 = vshrl.u32 %v460, 7
      %v462 = vsub.s32 4, %v461
      %v463 = vrot.slane %v364, %v462
      %v464 = vlaneseq
      %v465 = vshrl.u32 %v464, 7
      %v466 = vsub.s32 0, %v465
      %v467 = vrot.slane %v365, %v466
      %v468 = vlaneseq
      %v469 = vshrl.u32 %v468, 7
      %v470 = vsub.s32 4, %v469
      %v471 = vrot.slane %v365, %v470
      %v472 = vlaneseq
      %v473 = vshrl.u32 %v472, 7
      %v474 = vsub.s32 0, %v473
      %v475 = vrot.slane %v366, %v474
      %v476 = vlaneseq
      %v477 = vshrl.u32 %v476, 7
      %v478 = vsub.s32 4, %v477
      %v479 = vrot.slane %v366, %v478
      %v480 = vlaneseq
      %v481 = vshrl.u32 %v480, 7
      %v482 = vsub.s32 0, %v481
      %v483 = vrot.slane %v367, %v482
      %v484 = vlaneseq
      %v485 = vshrl.u32 %v484, 7
      %v486 = vsub.s32 4, %v485
      %v487 = vrot.slane %v367, %v486
      %v488 = vlaneseq
      %v489 = vshrl.u32 %v488, 7
      %v490 = vsub.s32 0, %v489
      %v491 = vrot.slane %v368, %v490
      %v492 = vlaneseq
      %v493 = vshrl.u32 %v492, 7
      %v494 = vsub.s32 4, %v493
      %v495 = vrot.slane %v368, %v494
      %v496 = vlaneseq
      %v497 = vshrl.u32 %v496, 7
      %v498 = vsub.s32 0, %v497
      %v499 = vrot.slane %v369, %v498
      %v500 = vlaneseq
      %v501 = vshrl.u32 %v500, 7
      %v502 = vsub.s32 4, %v501
      %v503 = vrot.slane %v369, %v502
      %v504 = vlaneseq
      %v505 = vshrl.u32 %v504, 7
      %v506 = vsub.s32 0, %v505
      %v507 = vrot.slane %v370, %v506
      %v508 = vlaneseq
      %v509 = vshrl.u32 %v508, 7
      %v510 = vsub.s32 4, %v509
      %v511 = vrot.slane %v370, %v510
      %v512 = vlaneseq
      %v513 = vshrl.u32 %v512, 7
      %v514 = vsub.s32 0, %v513
      %v515 = vrot.slane %v371, %v514
      %v516 = vlaneseq
      %v517 = vshrl.u32 %v516, 7
      %v518 = vsub.s32 4, %v517
      %v519 = vrot.slane %v371, %v518
      %v520 = vlaneseq
      %v521 = vshrl.u32 %v520, 7
      %v522 = vsub.s32 0, %v521
      %v523 = vrot.slane %v372, %v522
      %v524 = vlaneseq
      %v525 = vshrl.u32 %v524, 7
      %v526 = vsub.s32 4, %v525
      %v527 = vrot.slane %v372, %v526
      %v528 = vlaneseq
      %v529 = vshrl.u32 %v528, 7
      %v530 = vsub.s32 0, %v529
      %v531 = vrot.slane %v373, %v530
      %v532 = vlaneseq
      %v533 = vshrl.u32 %v532, 7
      %v534 = vsub.s32 4, %v533
      %v535 = vrot.slane %v373, %v534
      %v536 = vlaneseq
      %v537 = vshrl.u32 %v536, 7
      %v538 = vsub.s32 0, %v537
      %v539 = vrot.slane %v374, %v538
      %v540 = vlaneseq
      %v541 = vshrl.u32 %v540, 7
      %v542 = vsub.s32 4, %v541
      %v543 = vrot.slane %v374, %v542
      %v544 = vlaneseq
      %v545 = vshrl.u32 %v544, 7
      %v546 = vsub.s32 0, %v545
      %v547 = vrot.slane %v375, %v546
      %v548 = vlaneseq
      %v549 = vshrl.u32 %v548, 7
      %v550 = vsub.s32 4, %v549
      %v551 = vrot.slane %v375, %v550
      %v552 = vlaneseq
      %v553 = vshrl.u32 %v552, 7
      %v554 = vsub.s32 0, %v553
      %v555 = vrot.slane %v376, %v554
      %v556 = vlaneseq
      %v557 = vshrl.u32 %v556, 7
      %v558 = vsub.s32 4, %v557
      %v559 = vrot.slane %v376, %v558
      %v560 = vlaneseq
      %v561 = vshrl.u32 %v560, 7
      %v562 = vsub.s32 0, %v561
      %v563 = vrot.slane %v377, %v562
      %v564 = vlaneseq
      %v565 = vshrl.u32 %v564, 7
      %v566 = vsub.s32 4, %v565
      %v567 = vrot.slane %v377, %v566
      %v568 = vlaneseq
      %v569 = vshrl.u32 %v568, 7
      %v570 = vsub.s32 0, %v569
      %v571 = vrot.slane %v378, %v570
      %v572 = vlaneseq
      %v573 = vshrl.u32 %v572, 7
      %v574 = vsub.s32 4, %v573
      %v575 = vrot.slane %v378, %v574
      %v576 = vlaneseq
      %v577 = vshrl.u32 %v576, 7
      %v578 = vsub.s32 0, %v577
      %v579 = vrot.slane %v379, %v578
      %v580 = vlaneseq
      %v581 = vshrl.u32 %v580, 7
      %v582 = vsub.s32 4, %v581
      %v583 = vrot.slane %v379, %v582
      %v584 = vlaneseq
      %v585 = vshrl.u32 %v584, 7
      %v586 = vsub.s32 0, %v585
      %v587 = vrot.slane %v380, %v586
      %v588 = vlaneseq
      %v589 = vshrl.u32 %v588, 7
      %v590 = vsub.s32 4, %v589
      %v591 = vrot.slane %v380, %v590
      %v592 = vlaneseq
      %v593 = vshrl.u32 %v592, 7
      %v594 = vsub.s32 0, %v593
      %v595 = vrot.slane %v381, %v594
      %v596 = vlaneseq
      %v597 = vshrl.u32 %v596, 7
      %v598 = vsub.s32 4, %v597
      %v599 = vrot.slane %v381, %v598
      %v600 = vlaneseq
      %v601 = vshrl.u32 %v600, 7
      %v602 = vsub.s32 0, %v601
      %v603 = vrot.slane %v382, %v602
      %v604 = vlaneseq
      %v605 = vshrl.u32 %v604, 7
      %v606 = vsub.s32 4, %v605
      %v607 = vrot.slane %v382, %v606
      %v608 = vlaneseq
      %v609 = vshrl.u32 %v608, 7
      %v610 = vsub.s32 0, %v609
      %v611 = vrot.slane %v383, %v610
      %v612 = vlaneseq
      %v613 = vshrl.u32 %v612, 7
      %v614 = vsub.s32 4, %v613
      %v615 = vrot.slane %v383, %v614
      %v616 = vlaneseq
      %v617 = vshrl.u32 %v616, 7
      %v618 = vsub.s32 0, %v617
      %v619 = vrot.slane %v384, %v618
      %v620 = vlaneseq
      %v621 = vshrl.u32 %v620, 7
      %v622 = vsub.s32 4, %v621
      %v623 = vrot.slane %v384, %v622
      %v624 = vlaneseq
      %v625 = vshrl.u32 %v624, 7
      %v626 = vsub.s32 0, %v625
      %v627 = vrot.slane %v385, %v626
      %v628 = vlaneseq
      %v629 = vshrl.u32 %v628, 7
      %v630 = vsub.s32 4, %v629
      %v631 = vrot.slane %v385, %v630
      %v632 = vlaneseq
      %v633 = vshrl.u32 %v632, 7
      %v634 = vsub.s32 0, %v633
      %v635 = vrot.slane %v386, %v634
      %v636 = vlaneseq
      %v637 = vshrl.u32 %v636, 7
      %v638 = vsub.s32 4, %v637
      %v639 = vrot.slane %v386, %v638
      %v640 = vlaneseq
      %v641 = vshrl.u32 %v640, 7
      %v642 = vsub.s32 0, %v641
      %v643 = vrot.slane %v387, %v642
      %v644 = vlaneseq
      %v645 = vshrl.u32 %v644, 7
      %v646 = vsub.s32 4, %v645
      %v647 = vrot.slane %v387, %v646
      %v648 = vlaneseq
      %v649 = vshrl.u32 %v648, 7
      %v650 = vsub.s32 0, %v649
      %v651 = vrot.slane %v388, %v650
      %v652 = vlaneseq
      %v653 = vshrl.u32 %v652, 7
      %v654 = vsub.s32 4, %v653
      %v655 = vrot.slane %v388, %v654
      %v656 = vlaneseq
      %v657 = vshrl.u32 %v656, 7
      %v658 = vsub.s32 0, %v657
      %v659 = vrot.slane %v389, %v658
      %v660 = vlaneseq
      %v661 = vshrl.u32 %v660, 7
      %v662 = vsub.s32 4, %v661
      %v663 = vrot.slane %v389, %v662
      %v664 = vlaneseq
      %v665 = vshrl.u32 %v664, 7
      %v666 = vsub.s32 0, %v665
      %v667 = vrot.slane %v390, %v666
      %v668 = vlaneseq
      %v669 = vshrl.u32 %v668, 7
      %v670 = vsub.s32 4, %v669
      %v671 = vrot.slane %v390, %v670
      %v672 = vlaneseq
      %v673 = vshrl.u32 %v672, 7
      %v674 = vsub.s32 0, %v673
      %v675 = vrot.slane %v391, %v674
      %v676 = vlaneseq
      %v677 = vshrl.u32 %v676, 7
      %v678 = vsub.s32 4, %v677
      %v679 = vrot.slane %v391, %v678
      %v680 = vlaneseq
      %v681 = vshrl.u32 %v680, 7
      %v682 = vsub.s32 0, %v681
      %v683 = vrot.slane %v392, %v682
      %v684 = vlaneseq
      %v685 = vshrl.u32 %v684, 7
      %v686 = vsub.s32 4, %v685
      %v687 = vrot.slane %v392, %v686
      %v688 = vlaneseq
      %v689 = vshrl.u32 %v688, 7
      %v690 = vsub.s32 0, %v689
      %v691 = vrot.slane %v393, %v690
      %v692 = vlaneseq
      %v693 = vshrl.u32 %v692, 7
      %v694 = vsub.s32 4, %v693
      %v695 = vrot.slane %v393, %v694
      %v760 = vlaneseq
      %v761 = vshrl.u32 %v760, 7
      %v762 = vsub.s32 0, %v761
      %v763 = vrot.slane %v443, %v762
      %v764 = vlaneseq
      %v765 = vshrl.u32 %v764, 7
      %v766 = vsub.s32 0, %v765
      %v767 = vrot.slane %v447, %v766
      %v768 = vlaneseq
      %v769 = vshrl.u32 %v768, 7
      %v770 = vsub.s32 0, %v769
      %v771 = vrot.slane %v451, %v770
      %v772 = vlaneseq
      %v773 = vshrl.u32 %v772, 7
      %v774 = vsub.s32 0, %v773
      %v775 = vrot.slane %v455, %v774
      %v776 = vlaneseq
      %v777 = vshrl.u32 %v776, 7
      %v778 = vsub.s32 0, %v777
      %v779 = vrot.slane %v459, %v778
      %v780 = vlaneseq
      %v781 = vshrl.u32 %v780, 7
      %v782 = vsub.s32 0, %v781
      %v783 = vrot.slane %v463, %v782
      %v784 = vlaneseq
      %v785 = vshrl.u32 %v784, 7
      %v786 = vsub.s32 0, %v785
      %v787 = vrot.slane %v467, %v786
      %v788 = vlaneseq
      %v789 = vshrl.u32 %v788, 7
      %v790 = vsub.s32 0, %v789
      %v791 = vrot.slane %v471, %v790
      %v792 = vlaneseq
      %v793 = vshrl.u32 %v792, 7
      %v794 = vsub.s32 0, %v793
      %v795 = vrot.slane %v475, %v794
      %v796 = vlaneseq
      %v797 = vshrl.u32 %v796, 7
      %v798 = vsub.s32 0, %v797
      %v799 = vrot.slane %v479, %v798
      %v800 = vlaneseq
      %v801 = vshrl.u32 %v800, 7
      %v802 = vsub.s32 0, %v801
      %v803 = vrot.slane %v483, %v802
      %v804 = vlaneseq
      %v805 = vshrl.u32 %v804, 7
      %v806 = vsub.s32 0, %v805
      %v807 = vrot.slane %v487, %v806
      %v808 = vlaneseq
      %v809 = vshrl.u32 %v808, 7
      %v810 = vsub.s32 0, %v809
      %v811 = vrot.slane %v491, %v810
      %v812 = vlaneseq
      %v813 = vshrl.u32 %v812, 7
      %v814 = vsub.s32 0, %v813
      %v815 = vrot.slane %v495, %v814
      %v816 = vlaneseq
      %v817 = vshrl.u32 %v816, 7
      %v818 = vsub.s32 0, %v817
      %v819 = vrot.slane %v499, %v818
      %v820 = vlaneseq
      %v821 = vshrl.u32 %v820, 7
      %v822 = vsub.s32 0, %v821
      %v823 = vrot.slane %v503, %v822
      %v824 = vlaneseq
      %v825 = vshrl.u32 %v824, 7
      %v826 = vsub.s32 0, %v825
      %v827 = vrot.slane %v507, %v826
      %v828 = vlaneseq
      %v829 = vshrl.u32 %v828, 7
      %v830 = vsub.s32 0, %v829
      %v831 = vrot.slane %v511, %v830
      %v832 = vlaneseq
      %v833 = vshrl.u32 %v832, 7
      %v834 = vsub.s32 0, %v833
      %v835 = vrot.slane %v515, %v834
      %v836 = vlaneseq
      %v837 = vshrl.u32 %v836, 7
      %v838 = vsub.s32 0, %v837
      %v839 = vrot.slane %v519, %v838
      %v840 = vlaneseq
      %v841 = vshrl.u32 %v840, 7
      %v842 = vsub.s32 0, %v841
      %v843 = vrot.slane %v523, %v842
      %v844 = vlaneseq
      %v845 = vshrl.u32 %v844, 7
      %v846 = vsub.s32 0, %v845
      %v847 = vrot.slane %v527, %v846
      %v848 = vlaneseq
      %v849 = vshrl.u32 %v848, 7
      %v850 = vsub.s32 0, %v849
      %v851 = vrot.slane %v531, %v850
      %v852 = vlaneseq
      %v853 = vshrl.u32 %v852, 7
      %v854 = vsub.s32 0, %v853
      %v855 = vrot.slane %v535, %v854
      %v856 = vlaneseq
      %v857 = vshrl.u32 %v856, 7
      %v858 = vsub.s32 0, %v857
      %v859 = vrot.slane %v539, %v858
      %v860 = vlaneseq
      %v861 = vshrl.u32 %v860, 7
      %v862 = vsub.s32 0, %v861
      %v863 = vrot.slane %v543, %v862
      %v864 = vlaneseq
      %v865 = vshrl.u32 %v864, 7
      %v866 = vsub.s32 0, %v865
      %v867 = vrot.slane %v547, %v866
      %v868 = vlaneseq
      %v869 = vshrl.u32 %v868, 7
      %v870 = vsub.s32 0, %v869
      %v871 = vrot.slane %v551, %v870
      %v872 = vlaneseq
      %v873 = vshrl.u32 %v872, 7
      %v874 = vsub.s32 0, %v873
      %v875 = vrot.slane %v555, %v874
      %v876 = vlaneseq
      %v877 = vshrl.u32 %v876, 7
      %v878 = vsub.s32 0, %v877
      %v879 = vrot.slane %v559, %v878
      %v880 = vlaneseq
      %v881 = vshrl.u32 %v880, 7
      %v882 = vsub.s32 0, %v881
      %v883 = vrot.slane %v563, %v882
      %v884 = vlaneseq
      %v885 = vshrl.u32 %v884, 7
      %v886 = vsub.s32 0, %v885
      %v887 = vrot.slane %v567, %v886
      %v888 = vlaneseq
      %v889 = vshrl.u32 %v888, 7
      %v890 = vsub.s32 0, %v889
      %v891 = vrot.slane %v571, %v890
      %v892 = vlaneseq
      %v893 = vshrl.u32 %v892, 7
      %v894 = vsub.s32 0, %v893
      %v895 = vrot.slane %v575, %v894
      %v896 = vlaneseq
      %v897 = vshrl.u32 %v896, 7
      %v898 = vsub.s32 0, %v897
      %v899 = vrot.slane %v579, %v898
      %v900 = vlaneseq
      %v901 = vshrl.u32 %v900, 7
      %v902 = vsub.s32 0, %v901
      %v903 = vrot.slane %v583, %v902
      %v904 = vlaneseq
      %v905 = vshrl.u32 %v904, 7
      %v906 = vsub.s32 0, %v905
      %v907 = vrot.slane %v587, %v906
      %v908 = vlaneseq
      %v909 = vshrl.u32 %v908, 7
      %v910 = vsub.s32 0, %v909
      %v911 = vrot.slane %v591, %v910
      %v912 = vlaneseq
      %v913 = vshrl.u32 %v912, 7
      %v914 = vsub.s32 0, %v913
      %v915 = vrot.slane %v595, %v914
      %v916 = vlaneseq
      %v917 = vshrl.u32 %v916, 7
      %v918 = vsub.s32 0, %v917
      %v919 = vrot.slane %v599, %v918
      %v920 = vlaneseq
      %v921 = vshrl.u32 %v920, 7
      %v922 = vsub.s32 0, %v921
      %v923 = vrot.slane %v603, %v922
      %v924 = vlaneseq
      %v925 = vshrl.u32 %v924, 7
      %v926 = vsub.s32 0, %v925
      %v927 = vrot.slane %v607, %v926
      %v928 = vlaneseq
      %v929 = vshrl.u32 %v928, 7
      %v930 = vsub.s32 0, %v929
      %v931 = vrot.slane %v611, %v930
      %v932 = vlaneseq
      %v933 = vshrl.u32 %v932, 7
      %v934 = vsub.s32 0, %v933
      %v935 = vrot.slane %v615, %v934
      %v936 = vlaneseq
      %v937 = vshrl.u32 %v936, 7
      %v938 = vsub.s32 0, %v937
      %v939 = vrot.slane %v619, %v938
      %v940 = vlaneseq
      %v941 = vshrl.u32 %v940, 7
      %v942 = vsub.s32 0, %v941
      %v943 = vrot.slane %v623, %v942
      %v944 = vlaneseq
      %v945 = vshrl.u32 %v944, 7
      %v946 = vsub.s32 0, %v945
      %v947 = vrot.slane %v627, %v946
      %v948 = vlaneseq
      %v949 = vshrl.u32 %v948, 7
      %v950 = vsub.s32 0, %v949
      %v951 = vrot.slane %v631, %v950
      %v952 = vlaneseq
      %v953 = vshrl.u32 %v952, 7
      %v954 = vsub.s32 0, %v953
      %v955 = vrot.slane %v635, %v954
      %v956 = vlaneseq
      %v957 = vshrl.u32 %v956, 7
      %v958 = vsub.s32 0, %v957
      %v959 = vrot.slane %v639, %v958
      %v960 = vlaneseq
      %v961 = vshrl.u32 %v960, 7
      %v962 = vsub.s32 0, %v961
      %v963 = vrot.slane %v643, %v962
      %v964 = vlaneseq
      %v965 = vshrl.u32 %v964, 7
      %v966 = vsub.s32 0, %v965
      %v967 = vrot.slane %v647, %v966
      %v968 = vlaneseq
      %v969 = vshrl.u32 %v968, 7
      %v970 = vsub.s32 0, %v969
      %v971 = vrot.slane %v651, %v970
      %v972 = vlaneseq
      %v973 = vshrl.u32 %v972, 7
      %v974 = vsub.s32 0, %v973
      %v975 = vrot.slane %v655, %v974
      %v976 = vlaneseq
      %v977 = vshrl.u32 %v976, 7
      %v978 = vsub.s32 0, %v977
      %v979 = vrot.slane %v659, %v978
      %v980 = vlaneseq
      %v981 = vshrl.u32 %v980, 7
      %v982 = vsub.s32 0, %v981
      %v983 = vrot.slane %v663, %v982
      %v984 = vlaneseq
      %v985 = vshrl.u32 %v984, 7
      %v986 = vsub.s32 0, %v985
      %v987 = vrot.slane %v667, %v986
      %v988 = vlaneseq
      %v989 = vshrl.u32 %v988, 7
      %v990 = vsub.s32 0, %v989
      %v991 = vrot.slane %v671, %v990
      %v992 = vlaneseq
      %v993 = vshrl.u32 %v992, 7
      %v994 = vsub.s32 0, %v993
      %v995 = vrot.slane %v675, %v994
      %v996 = vlaneseq
      %v997 = vshrl.u32 %v996, 7
      %v998 = vsub.s32 0, %v997
      %v999 = vrot.slane %v679, %v998
      %v1000 = vlaneseq
      %v1001 = vshrl.u32 %v1000, 7
      %v1002 = vsub.s32 0, %v1001
      %v1003 = vrot.slane %v683, %v1002
      %v1004 = vlaneseq
      %v1005 = vshrl.u32 %v1004, 7
      %v1006 = vsub.s32 0, %v1005
      %v1007 = vrot.slane %v687, %v1006
      %v1008 = vlaneseq
      %v1009 = vshrl.u32 %v1008, 7
      %v1010 = vsub.s32 0, %v1009
      %v1011 = vrot.slane %v691, %v1010
      %v1012 = vlaneseq
      %v1013 = vshrl.u32 %v1012, 7
      %v1014 = vsub.s32 0, %v1013
      %v1015 = vrot.slane %v695, %v1014
      %v1016 = vmul.f32 %v401, %v763
      %v1017 = vmul.f32 %v401, %v767
      %v1018 = vmul.f32 %v401, %v771
      %v1019 = vmul.f32 %v401, %v775
      %v1020 = vmul.f32 %v401, %v779
      %v1021 = vmul.f32 %v401, %v783
      %v1022 = vmul.f32 %v401, %v787
      %v1023 = vmul.f32 %v401, %v791
      %v1024 = vmul.f32 %v401, %v795
      %v1025 = vmul.f32 %v401, %v799
      %v1026 = vmul.f32 %v401, %v803
      %v1027 = vmul.f32 %v401, %v807
      %v1028 = vmul.f32 %v401, %v811
      %v1029 = vmul.f32 %v401, %v815
      %v1030 = vmul.f32 %v401, %v819
      %v1031 = vmul.f32 %v401, %v823
      %v1032 = vmul.f32 %v401, %v827
      %v1033 = vmul.f32 %v401, %v831
      %v1034 = vmul.f32 %v401, %v835
      %v1035 = vmul.f32 %v401, %v839
      %v1036 = vmul.f32 %v401, %v843
      %v1037 = vmul.f32 %v401, %v847
      %v1038 = vmul.f32 %v401, %v851
      %v1039 = vmul.f32 %v401, %v855
      %v1040 = vmul.f32 %v401, %v859
      %v1041 = vmul.f32 %v401, %v863
      %v1042 = vmul.f32 %v401, %v867
      %v1043 = vmul.f32 %v401, %v871
      %v1044 = vmul.f32 %v401, %v875
      %v1045 = vmul.f32 %v401, %v879
      %v1046 = vmul.f32 %v401, %v883
      %v1047 = vmul.f32 %v401, %v887
      %v1048 = vmul.f32 %v401, %v891
      %v1049 = vmul.f32 %v401, %v895
      %v1050 = vmul.f32 %v401, %v899
      %v1051 = vmul.f32 %v401, %v903
      %v1052 = vmul.f32 %v401, %v907
      %v1053 = vmul.f32 %v401, %v911
      %v1054 = vmul.f32 %v401, %v915
      %v1055 = vmul.f32 %v401, %v919
      %v1056 = vmul.f32 %v401, %v923
      %v1057 = vmul.f32 %v401, %v927
      %v1058 = vmul.f32 %v401, %v931
      %v1059 = vmul.f32 %v401, %v935
      %v1060 = vmul.f32 %v401, %v939
      %v1061 = vmul.f32 %v401, %v943
      %v1062 = vmul.f32 %v401, %v947
      %v1063 = vmul.f32 %v401, %v951
      %v1064 = vmul.f32 %v401, %v955
      %v1065 = vmul.f32 %v401, %v959
      %v1066 = vmul.f32 %v401, %v963
      %v1067 = vmul.f32 %v401, %v967
      %v1068 = vmul.f32 %v401, %v971
      %v1069 = vmul.f32 %v401, %v975
      %v1070 = vmul.f32 %v401, %v979
      %v1071 = vmul.f32 %v401, %v983
      %v1072 = vmul.f32 %v401, %v987
      %v1073 = vmul.f32 %v401, %v991
      %v1074 = vmul.f32 %v401, %v995
      %v1075 = vmul.f32 %v401, %v999
      %v1076 = vmul.f32 %v401, %v1003
      %v1077 = vmul.f32 %v401, %v1007
      %v1078 = vmul.f32 %v401, %v1011
      %v1079 = vmul.f32 %v401, %v1015
      %v1080 = vmul.f32 %v406, %v763
      %v1081 = vmul.f32 %v406, %v767
      %v1082 = vmul.f32 %v406, %v771
      %v1083 = vmul.f32 %v406, %v775
      %v1084 = vmul.f32 %v406, %v779
      %v1085 = vmul.f32 %v406, %v783
      %v1086 = vmul.f32 %v406, %v787
      %v1087 = vmul.f32 %v406, %v791
      %v1088 = vmul.f32 %v406, %v795
      %v1089 = vmul.f32 %v406, %v799
      %v1090 = vmul.f32 %v406, %v803
      %v1091 = vmul.f32 %v406, %v807
      %v1092 = vmul.f32 %v406, %v811
      %v1093 = vmul.f32 %v406, %v815
      %v1094 = vmul.f32 %v406, %v819
      %v1095 = vmul.f32 %v406, %v823
      %v1096 = vmul.f32 %v406, %v827
      %v1097 = vmul.f32 %v406, %v831
      %v1098 = vmul.f32 %v406, %v835
      %v1099 = vmul.f32 %v406, %v839
      %v1100 = vmul.f32 %v406, %v843
      %v1101 = vmul.f32 %v406, %v847
      %v1102 = vmul.f32 %v406, %v851
      %v1103 = vmul.f32 %v406, %v855
      %v1104 = vmul.f32 %v406, %v859
      %v1105 = vmul.f32 %v406, %v863
      %v1106 = vmul.f32 %v406, %v867
      %v1107 = vmul.f32 %v406, %v871
      %v1108 = vmul.f32 %v406, %v875
      %v1109 = vmul.f32 %v406, %v879
      %v1110 = vmul.f32 %v406, %v883
      %v1111 = vmul.f32 %v406, %v887
      %v1112 = vmul.f32 %v406, %v891
      %v1113 = vmul.f32 %v406, %v895
      %v1114 = vmul.f32 %v406, %v899
      %v1115 = vmul.f32 %v406, %v903
      %v1116 = vmul.f32 %v406, %v907
      %v1117 = vmul.f32 %v406, %v911
      %v1118 = vmul.f32 %v406, %v915
      %v1119 = vmul.f32 %v406, %v919
      %v1120 = vmul.f32 %v406, %v923
      %v1121 = vmul.f32 %v406, %v927
      %v1122 = vmul.f32 %v406, %v931
      %v1123 = vmul.f32 %v406, %v935
      %v1124 = vmul.f32 %v406, %v939
      %v1125 = vmul.f32 %v406, %v943
      %v1126 = vmul.f32 %v406, %v947
      %v1127 = vmul.f32 %v406, %v951
      %v1128 = vmul.f32 %v406, %v955
      %v1129 = vmul.f32 %v406, %v959
      %v1130 = vmul.f32 %v406, %v963
      %v1131 = vmul.f32 %v406, %v967
      %v1132 = vmul.f32 %v406, %v971
      %v1133 = vmul.f32 %v406, %v975
      %v1134 = vmul.f32 %v406, %v979
      %v1135 = vmul.f32 %v406, %v983
      %v1136 = vmul.f32 %v406, %v987
      %v1137 = vmul.f32 %v406, %v991
      %v1138 = vmul.f32 %v406, %v995
      %v1139 = vmul.f32 %v406, %v999
      %v1140 = vmul.f32 %v406, %v1003
      %v1141 = vmul.f32 %v406, %v1007
      %v1142 = vmul.f32 %v406, %v1011
      %v1143 = vmul.f32 %v406, %v1015
      %1145 = vset.pattern.permute.xlu0 0
      %1146 = vperm.xlu0 %1145, %v396
      %v1147 = vpop.permute.xlu0 %1146
      %1150 = vset.pattern.permute.xlu0 0
      %1151 = vperm.xlu0 %1150, %v397
      %v1152 = vpop.permute.xlu0 %1151
      %v1154 = vadd.f32 %v1147, %v1016
      %v1155 = vadd.f32 %v1147, %v1017
      %v1156 = vadd.f32 %v1147, %v1018
      %v1157 = vadd.f32 %v1147, %v1019
      %v1158 = vadd.f32 %v1147, %v1020
      %v1159 = vadd.f32 %v1147, %v1021
      %v1160 = vadd.f32 %v1147, %v1022
      %v1161 = vadd.f32 %v1147, %v1023
      %v1162 = vadd.f32 %v1147, %v1024
      %v1163 = vadd.f32 %v1147, %v1025
      %v1164 = vadd.f32 %v1147, %v1026
      %v1165 = vadd.f32 %v1147, %v1027
      %v1166 = vadd.f32 %v1147, %v1028
      %v1167 = vadd.f32 %v1147, %v1029
      %v1168 = vadd.f32 %v1147, %v1030
      %v1169 = vadd.f32 %v1147, %v1031
      %v1170 = vadd.f32 %v1147, %v1032
      %v1171 = vadd.f32 %v1147, %v1033
      %v1172 = vadd.f32 %v1147, %v1034
      %v1173 = vadd.f32 %v1147, %v1035
      %v1174 = vadd.f32 %v1147, %v1036
      %v1175 = vadd.f32 %v1147, %v1037
      %v1176 = vadd.f32 %v1147, %v1038
      %v1177 = vadd.f32 %v1147, %v1039
      %v1178 = vadd.f32 %v1147, %v1040
      %v1179 = vadd.f32 %v1147, %v1041
      %v1180 = vadd.f32 %v1147, %v1042
      %v1181 = vadd.f32 %v1147, %v1043
      %v1182 = vadd.f32 %v1147, %v1044
      %v1183 = vadd.f32 %v1147, %v1045
      %v1184 = vadd.f32 %v1147, %v1046
      %v1185 = vadd.f32 %v1147, %v1047
      %v1186 = vadd.f32 %v1147, %v1048
      %v1187 = vadd.f32 %v1147, %v1049
      %v1188 = vadd.f32 %v1147, %v1050
      %v1189 = vadd.f32 %v1147, %v1051
      %v1190 = vadd.f32 %v1147, %v1052
      %v1191 = vadd.f32 %v1147, %v1053
      %v1192 = vadd.f32 %v1147, %v1054
      %v1193 = vadd.f32 %v1147, %v1055
      %v1194 = vadd.f32 %v1147, %v1056
      %v1195 = vadd.f32 %v1147, %v1057
      %v1196 = vadd.f32 %v1147, %v1058
      %v1197 = vadd.f32 %v1147, %v1059
      %v1198 = vadd.f32 %v1147, %v1060
      %v1199 = vadd.f32 %v1147, %v1061
      %v1200 = vadd.f32 %v1147, %v1062
      %v1201 = vadd.f32 %v1147, %v1063
      %v1202 = vadd.f32 %v1147, %v1064
      %v1203 = vadd.f32 %v1147, %v1065
      %v1204 = vadd.f32 %v1147, %v1066
      %v1205 = vadd.f32 %v1147, %v1067
      %v1206 = vadd.f32 %v1147, %v1068
      %v1207 = vadd.f32 %v1147, %v1069
      %v1208 = vadd.f32 %v1147, %v1070
      %v1209 = vadd.f32 %v1147, %v1071
      %v1210 = vadd.f32 %v1147, %v1072
      %v1211 = vadd.f32 %v1147, %v1073
      %v1212 = vadd.f32 %v1147, %v1074
      %v1213 = vadd.f32 %v1147, %v1075
      %v1214 = vadd.f32 %v1147, %v1076
      %v1215 = vadd.f32 %v1147, %v1077
      %v1216 = vadd.f32 %v1147, %v1078
      %v1217 = vadd.f32 %v1147, %v1079
      %v1218 = vadd.f32 %v1152, %v1080
      %v1219 = vadd.f32 %v1152, %v1081
      %v1220 = vadd.f32 %v1152, %v1082
      %v1221 = vadd.f32 %v1152, %v1083
      %v1222 = vadd.f32 %v1152, %v1084
      %v1223 = vadd.f32 %v1152, %v1085
      %v1224 = vadd.f32 %v1152, %v1086
      %v1225 = vadd.f32 %v1152, %v1087
      %v1226 = vadd.f32 %v1152, %v1088
      %v1227 = vadd.f32 %v1152, %v1089
      %v1228 = vadd.f32 %v1152, %v1090
      %v1229 = vadd.f32 %v1152, %v1091
      %v1230 = vadd.f32 %v1152, %v1092
      %v1231 = vadd.f32 %v1152, %v1093
      %v1232 = vadd.f32 %v1152, %v1094
      %v1233 = vadd.f32 %v1152, %v1095
      %v1234 = vadd.f32 %v1152, %v1096
      %v1235 = vadd.f32 %v1152, %v1097
      %v1236 = vadd.f32 %v1152, %v1098
      %v1237 = vadd.f32 %v1152, %v1099
      %v1238 = vadd.f32 %v1152, %v1100
      %v1239 = vadd.f32 %v1152, %v1101
      %v1240 = vadd.f32 %v1152, %v1102
      %v1241 = vadd.f32 %v1152, %v1103
      %v1242 = vadd.f32 %v1152, %v1104
      %v1243 = vadd.f32 %v1152, %v1105
      %v1244 = vadd.f32 %v1152, %v1106
      %v1245 = vadd.f32 %v1152, %v1107
      %v1246 = vadd.f32 %v1152, %v1108
      %v1247 = vadd.f32 %v1152, %v1109
      %v1248 = vadd.f32 %v1152, %v1110
      %v1249 = vadd.f32 %v1152, %v1111
      %v1250 = vadd.f32 %v1152, %v1112
      %v1251 = vadd.f32 %v1152, %v1113
      %v1252 = vadd.f32 %v1152, %v1114
      %v1253 = vadd.f32 %v1152, %v1115
      %v1254 = vadd.f32 %v1152, %v1116
      %v1255 = vadd.f32 %v1152, %v1117
      %v1256 = vadd.f32 %v1152, %v1118
      %v1257 = vadd.f32 %v1152, %v1119
      %v1258 = vadd.f32 %v1152, %v1120
      %v1259 = vadd.f32 %v1152, %v1121
      %v1260 = vadd.f32 %v1152, %v1122
      %v1261 = vadd.f32 %v1152, %v1123
      %v1262 = vadd.f32 %v1152, %v1124
      %v1263 = vadd.f32 %v1152, %v1125
      %v1264 = vadd.f32 %v1152, %v1126
      %v1265 = vadd.f32 %v1152, %v1127
      %v1266 = vadd.f32 %v1152, %v1128
      %v1267 = vadd.f32 %v1152, %v1129
      %v1268 = vadd.f32 %v1152, %v1130
      %v1269 = vadd.f32 %v1152, %v1131
      %v1270 = vadd.f32 %v1152, %v1132
      %v1271 = vadd.f32 %v1152, %v1133
      %v1272 = vadd.f32 %v1152, %v1134
      %v1273 = vadd.f32 %v1152, %v1135
      %v1274 = vadd.f32 %v1152, %v1136
      %v1275 = vadd.f32 %v1152, %v1137
      %v1276 = vadd.f32 %v1152, %v1138
      %v1277 = vadd.f32 %v1152, %v1139
      %v1278 = vadd.f32 %v1152, %v1140
      %v1279 = vadd.f32 %v1152, %v1141
      %v1280 = vadd.f32 %v1152, %v1142
      %v1281 = vadd.f32 %v1152, %v1143
      %1282 = vset.pattern.permute.xlu0 1
      %1283 = vperm.xlu0 %1282, %v394
      %v1284 = vpop.permute.xlu0 %1283
      %1286 = vset.pattern.permute.xlu0 1
      %1287 = vperm.xlu0 %1286, %v395
      %v1288 = vpop.permute.xlu0 %1287
      %v1290 = vlaneseq
      %v1291 = vshrl.u32 %v1290, 7
      %v1292 = vsub.s32 1, %v1291
      %v1293 = vrot.slane %v362, %v1292
      %v1294 = vlaneseq
      %v1295 = vshrl.u32 %v1294, 7
      %v1296 = vsub.s32 5, %v1295
      %v1297 = vrot.slane %v362, %v1296
      %v1298 = vlaneseq
      %v1299 = vshrl.u32 %v1298, 7
      %v1300 = vsub.s32 1, %v1299
      %v1301 = vrot.slane %v363, %v1300
      %v1302 = vlaneseq
      %v1303 = vshrl.u32 %v1302, 7
      %v1304 = vsub.s32 5, %v1303
      %v1305 = vrot.slane %v363, %v1304
      %v1306 = vlaneseq
      %v1307 = vshrl.u32 %v1306, 7
      %v1308 = vsub.s32 1, %v1307
      %v1309 = vrot.slane %v364, %v1308
      %v1310 = vlaneseq
      %v1311 = vshrl.u32 %v1310, 7
      %v1312 = vsub.s32 5, %v1311
      %v1313 = vrot.slane %v364, %v1312
      %v1314 = vlaneseq
      %v1315 = vshrl.u32 %v1314, 7
      %v1316 = vsub.s32 1, %v1315
      %v1317 = vrot.slane %v365, %v1316
      %v1318 = vlaneseq
      %v1319 = vshrl.u32 %v1318, 7
      %v1320 = vsub.s32 5, %v1319
      %v1321 = vrot.slane %v365, %v1320
      %v1322 = vlaneseq
      %v1323 = vshrl.u32 %v1322, 7
      %v1324 = vsub.s32 1, %v1323
      %v1325 = vrot.slane %v366, %v1324
      %v1326 = vlaneseq
      %v1327 = vshrl.u32 %v1326, 7
      %v1328 = vsub.s32 5, %v1327
      %v1329 = vrot.slane %v366, %v1328
      %v1330 = vlaneseq
      %v1331 = vshrl.u32 %v1330, 7
      %v1332 = vsub.s32 1, %v1331
      %v1333 = vrot.slane %v367, %v1332
      %v1334 = vlaneseq
      %v1335 = vshrl.u32 %v1334, 7
      %v1336 = vsub.s32 5, %v1335
      %v1337 = vrot.slane %v367, %v1336
      %v1338 = vlaneseq
      %v1339 = vshrl.u32 %v1338, 7
      %v1340 = vsub.s32 1, %v1339
      %v1341 = vrot.slane %v368, %v1340
      %v1342 = vlaneseq
      %v1343 = vshrl.u32 %v1342, 7
      %v1344 = vsub.s32 5, %v1343
      %v1345 = vrot.slane %v368, %v1344
      %v1346 = vlaneseq
      %v1347 = vshrl.u32 %v1346, 7
      %v1348 = vsub.s32 1, %v1347
      %v1349 = vrot.slane %v369, %v1348
      %v1350 = vlaneseq
      %v1351 = vshrl.u32 %v1350, 7
      %v1352 = vsub.s32 5, %v1351
      %v1353 = vrot.slane %v369, %v1352
      %v1354 = vlaneseq
      %v1355 = vshrl.u32 %v1354, 7
      %v1356 = vsub.s32 1, %v1355
      %v1357 = vrot.slane %v370, %v1356
      %v1358 = vlaneseq
      %v1359 = vshrl.u32 %v1358, 7
      %v1360 = vsub.s32 5, %v1359
      %v1361 = vrot.slane %v370, %v1360
      %v1362 = vlaneseq
      %v1363 = vshrl.u32 %v1362, 7
      %v1364 = vsub.s32 1, %v1363
      %v1365 = vrot.slane %v371, %v1364
      %v1366 = vlaneseq
      %v1367 = vshrl.u32 %v1366, 7
      %v1368 = vsub.s32 5, %v1367
      %v1369 = vrot.slane %v371, %v1368
      %v1370 = vlaneseq
      %v1371 = vshrl.u32 %v1370, 7
      %v1372 = vsub.s32 1, %v1371
      %v1373 = vrot.slane %v372, %v1372
      %v1374 = vlaneseq
      %v1375 = vshrl.u32 %v1374, 7
      %v1376 = vsub.s32 5, %v1375
      %v1377 = vrot.slane %v372, %v1376
      %v1378 = vlaneseq
      %v1379 = vshrl.u32 %v1378, 7
      %v1380 = vsub.s32 1, %v1379
      %v1381 = vrot.slane %v373, %v1380
      %v1382 = vlaneseq
      %v1383 = vshrl.u32 %v1382, 7
      %v1384 = vsub.s32 5, %v1383
      %v1385 = vrot.slane %v373, %v1384
      %v1386 = vlaneseq
      %v1387 = vshrl.u32 %v1386, 7
      %v1388 = vsub.s32 1, %v1387
      %v1389 = vrot.slane %v374, %v1388
      %v1390 = vlaneseq
      %v1391 = vshrl.u32 %v1390, 7
      %v1392 = vsub.s32 5, %v1391
      %v1393 = vrot.slane %v374, %v1392
      %v1394 = vlaneseq
      %v1395 = vshrl.u32 %v1394, 7
      %v1396 = vsub.s32 1, %v1395
      %v1397 = vrot.slane %v375, %v1396
      %v1398 = vlaneseq
      %v1399 = vshrl.u32 %v1398, 7
      %v1400 = vsub.s32 5, %v1399
      %v1401 = vrot.slane %v375, %v1400
      %v1402 = vlaneseq
      %v1403 = vshrl.u32 %v1402, 7
      %v1404 = vsub.s32 1, %v1403
      %v1405 = vrot.slane %v376, %v1404
      %v1406 = vlaneseq
      %v1407 = vshrl.u32 %v1406, 7
      %v1408 = vsub.s32 5, %v1407
      %v1409 = vrot.slane %v376, %v1408
      %v1410 = vlaneseq
      %v1411 = vshrl.u32 %v1410, 7
      %v1412 = vsub.s32 1, %v1411
      %v1413 = vrot.slane %v377, %v1412
      %v1414 = vlaneseq
      %v1415 = vshrl.u32 %v1414, 7
      %v1416 = vsub.s32 5, %v1415
      %v1417 = vrot.slane %v377, %v1416
      %v1418 = vlaneseq
      %v1419 = vshrl.u32 %v1418, 7
      %v1420 = vsub.s32 1, %v1419
      %v1421 = vrot.slane %v378, %v1420
      %v1422 = vlaneseq
      %v1423 = vshrl.u32 %v1422, 7
      %v1424 = vsub.s32 5, %v1423
      %v1425 = vrot.slane %v378, %v1424
      %v1426 = vlaneseq
      %v1427 = vshrl.u32 %v1426, 7
      %v1428 = vsub.s32 1, %v1427
      %v1429 = vrot.slane %v379, %v1428
      %v1430 = vlaneseq
      %v1431 = vshrl.u32 %v1430, 7
      %v1432 = vsub.s32 5, %v1431
      %v1433 = vrot.slane %v379, %v1432
      %v1434 = vlaneseq
      %v1435 = vshrl.u32 %v1434, 7
      %v1436 = vsub.s32 1, %v1435
      %v1437 = vrot.slane %v380, %v1436
      %v1438 = vlaneseq
      %v1439 = vshrl.u32 %v1438, 7
      %v1440 = vsub.s32 5, %v1439
      %v1441 = vrot.slane %v380, %v1440
      %v1442 = vlaneseq
      %v1443 = vshrl.u32 %v1442, 7
      %v1444 = vsub.s32 1, %v1443
      %v1445 = vrot.slane %v381, %v1444
      %v1446 = vlaneseq
      %v1447 = vshrl.u32 %v1446, 7
      %v1448 = vsub.s32 5, %v1447
      %v1449 = vrot.slane %v381, %v1448
      %v1450 = vlaneseq
      %v1451 = vshrl.u32 %v1450, 7
      %v1452 = vsub.s32 1, %v1451
      %v1453 = vrot.slane %v382, %v1452
      %v1454 = vlaneseq
      %v1455 = vshrl.u32 %v1454, 7
      %v1456 = vsub.s32 5, %v1455
      %v1457 = vrot.slane %v382, %v1456
      %v1458 = vlaneseq
      %v1459 = vshrl.u32 %v1458, 7
      %v1460 = vsub.s32 1, %v1459
      %v1461 = vrot.slane %v383, %v1460
      %v1462 = vlaneseq
      %v1463 = vshrl.u32 %v1462, 7
      %v1464 = vsub.s32 5, %v1463
      %v1465 = vrot.slane %v383, %v1464
      %v1466 = vlaneseq
      %v1467 = vshrl.u32 %v1466, 7
      %v1468 = vsub.s32 1, %v1467
      %v1469 = vrot.slane %v384, %v1468
      %v1470 = vlaneseq
      %v1471 = vshrl.u32 %v1470, 7
      %v1472 = vsub.s32 5, %v1471
      %v1473 = vrot.slane %v384, %v1472
      %v1474 = vlaneseq
      %v1475 = vshrl.u32 %v1474, 7
      %v1476 = vsub.s32 1, %v1475
      %v1477 = vrot.slane %v385, %v1476
      %v1478 = vlaneseq
      %v1479 = vshrl.u32 %v1478, 7
      %v1480 = vsub.s32 5, %v1479
      %v1481 = vrot.slane %v385, %v1480
      %v1482 = vlaneseq
      %v1483 = vshrl.u32 %v1482, 7
      %v1484 = vsub.s32 1, %v1483
      %v1485 = vrot.slane %v386, %v1484
      %v1486 = vlaneseq
      %v1487 = vshrl.u32 %v1486, 7
      %v1488 = vsub.s32 5, %v1487
      %v1489 = vrot.slane %v386, %v1488
      %v1490 = vlaneseq
      %v1491 = vshrl.u32 %v1490, 7
      %v1492 = vsub.s32 1, %v1491
      %v1493 = vrot.slane %v387, %v1492
      %v1494 = vlaneseq
      %v1495 = vshrl.u32 %v1494, 7
      %v1496 = vsub.s32 5, %v1495
      %v1497 = vrot.slane %v387, %v1496
      %v1498 = vlaneseq
      %v1499 = vshrl.u32 %v1498, 7
      %v1500 = vsub.s32 1, %v1499
      %v1501 = vrot.slane %v388, %v1500
      %v1502 = vlaneseq
      %v1503 = vshrl.u32 %v1502, 7
      %v1504 = vsub.s32 5, %v1503
      %v1505 = vrot.slane %v388, %v1504
      %v1506 = vlaneseq
      %v1507 = vshrl.u32 %v1506, 7
      %v1508 = vsub.s32 1, %v1507
      %v1509 = vrot.slane %v389, %v1508
      %v1510 = vlaneseq
      %v1511 = vshrl.u32 %v1510, 7
      %v1512 = vsub.s32 5, %v1511
      %v1513 = vrot.slane %v389, %v1512
      %v1514 = vlaneseq
      %v1515 = vshrl.u32 %v1514, 7
      %v1516 = vsub.s32 1, %v1515
      %v1517 = vrot.slane %v390, %v1516
      %v1518 = vlaneseq
      %v1519 = vshrl.u32 %v1518, 7
      %v1520 = vsub.s32 5, %v1519
      %v1521 = vrot.slane %v390, %v1520
      %v1522 = vlaneseq
      %v1523 = vshrl.u32 %v1522, 7
      %v1524 = vsub.s32 1, %v1523
      %v1525 = vrot.slane %v391, %v1524
      %v1526 = vlaneseq
      %v1527 = vshrl.u32 %v1526, 7
      %v1528 = vsub.s32 5, %v1527
      %v1529 = vrot.slane %v391, %v1528
      %v1530 = vlaneseq
      %v1531 = vshrl.u32 %v1530, 7
      %v1532 = vsub.s32 1, %v1531
      %v1533 = vrot.slane %v392, %v1532
      %v1534 = vlaneseq
      %v1535 = vshrl.u32 %v1534, 7
      %v1536 = vsub.s32 5, %v1535
      %v1537 = vrot.slane %v392, %v1536
      %v1538 = vlaneseq
      %v1539 = vshrl.u32 %v1538, 7
      %v1540 = vsub.s32 1, %v1539
      %v1541 = vrot.slane %v393, %v1540
      %v1542 = vlaneseq
      %v1543 = vshrl.u32 %v1542, 7
      %v1544 = vsub.s32 5, %v1543
      %v1545 = vrot.slane %v393, %v1544
      %v1610 = vlaneseq
      %v1611 = vshrl.u32 %v1610, 7
      %v1612 = vsub.s32 1, %v1611
      %v1613 = vrot.slane %v1293, %v1612
      %v1614 = vlaneseq
      %v1615 = vshrl.u32 %v1614, 7
      %v1616 = vsub.s32 1, %v1615
      %v1617 = vrot.slane %v1297, %v1616
      %v1618 = vlaneseq
      %v1619 = vshrl.u32 %v1618, 7
      %v1620 = vsub.s32 1, %v1619
      %v1621 = vrot.slane %v1301, %v1620
      %v1622 = vlaneseq
      %v1623 = vshrl.u32 %v1622, 7
      %v1624 = vsub.s32 1, %v1623
      %v1625 = vrot.slane %v1305, %v1624
      %v1626 = vlaneseq
      %v1627 = vshrl.u32 %v1626, 7
      %v1628 = vsub.s32 1, %v1627
      %v1629 = vrot.slane %v1309, %v1628
      %v1630 = vlaneseq
      %v1631 = vshrl.u32 %v1630, 7
      %v1632 = vsub.s32 1, %v1631
      %v1633 = vrot.slane %v1313, %v1632
      %v1634 = vlaneseq
      %v1635 = vshrl.u32 %v1634, 7
      %v1636 = vsub.s32 1, %v1635
      %v1637 = vrot.slane %v1317, %v1636
      %v1638 = vlaneseq
      %v1639 = vshrl.u32 %v1638, 7
      %v1640 = vsub.s32 1, %v1639
      %v1641 = vrot.slane %v1321, %v1640
      %v1642 = vlaneseq
      %v1643 = vshrl.u32 %v1642, 7
      %v1644 = vsub.s32 1, %v1643
      %v1645 = vrot.slane %v1325, %v1644
      %v1646 = vlaneseq
      %v1647 = vshrl.u32 %v1646, 7
      %v1648 = vsub.s32 1, %v1647
      %v1649 = vrot.slane %v1329, %v1648
      %v1650 = vlaneseq
      %v1651 = vshrl.u32 %v1650, 7
      %v1652 = vsub.s32 1, %v1651
      %v1653 = vrot.slane %v1333, %v1652
      %v1654 = vlaneseq
      %v1655 = vshrl.u32 %v1654, 7
      %v1656 = vsub.s32 1, %v1655
      %v1657 = vrot.slane %v1337, %v1656
      %v1658 = vlaneseq
      %v1659 = vshrl.u32 %v1658, 7
      %v1660 = vsub.s32 1, %v1659
      %v1661 = vrot.slane %v1341, %v1660
      %v1662 = vlaneseq
      %v1663 = vshrl.u32 %v1662, 7
      %v1664 = vsub.s32 1, %v1663
      %v1665 = vrot.slane %v1345, %v1664
      %v1666 = vlaneseq
      %v1667 = vshrl.u32 %v1666, 7
      %v1668 = vsub.s32 1, %v1667
      %v1669 = vrot.slane %v1349, %v1668
      %v1670 = vlaneseq
      %v1671 = vshrl.u32 %v1670, 7
      %v1672 = vsub.s32 1, %v1671
      %v1673 = vrot.slane %v1353, %v1672
      %v1674 = vlaneseq
      %v1675 = vshrl.u32 %v1674, 7
      %v1676 = vsub.s32 1, %v1675
      %v1677 = vrot.slane %v1357, %v1676
      %v1678 = vlaneseq
      %v1679 = vshrl.u32 %v1678, 7
      %v1680 = vsub.s32 1, %v1679
      %v1681 = vrot.slane %v1361, %v1680
      %v1682 = vlaneseq
      %v1683 = vshrl.u32 %v1682, 7
      %v1684 = vsub.s32 1, %v1683
      %v1685 = vrot.slane %v1365, %v1684
      %v1686 = vlaneseq
      %v1687 = vshrl.u32 %v1686, 7
      %v1688 = vsub.s32 1, %v1687
      %v1689 = vrot.slane %v1369, %v1688
      %v1690 = vlaneseq
      %v1691 = vshrl.u32 %v1690, 7
      %v1692 = vsub.s32 1, %v1691
      %v1693 = vrot.slane %v1373, %v1692
      %v1694 = vlaneseq
      %v1695 = vshrl.u32 %v1694, 7
      %v1696 = vsub.s32 1, %v1695
      %v1697 = vrot.slane %v1377, %v1696
      %v1698 = vlaneseq
      %v1699 = vshrl.u32 %v1698, 7
      %v1700 = vsub.s32 1, %v1699
      %v1701 = vrot.slane %v1381, %v1700
      %v1702 = vlaneseq
      %v1703 = vshrl.u32 %v1702, 7
      %v1704 = vsub.s32 1, %v1703
      %v1705 = vrot.slane %v1385, %v1704
      %v1706 = vlaneseq
      %v1707 = vshrl.u32 %v1706, 7
      %v1708 = vsub.s32 1, %v1707
      %v1709 = vrot.slane %v1389, %v1708
      %v1710 = vlaneseq
      %v1711 = vshrl.u32 %v1710, 7
      %v1712 = vsub.s32 1, %v1711
      %v1713 = vrot.slane %v1393, %v1712
      %v1714 = vlaneseq
      %v1715 = vshrl.u32 %v1714, 7
      %v1716 = vsub.s32 1, %v1715
      %v1717 = vrot.slane %v1397, %v1716
      %v1718 = vlaneseq
      %v1719 = vshrl.u32 %v1718, 7
      %v1720 = vsub.s32 1, %v1719
      %v1721 = vrot.slane %v1401, %v1720
      %v1722 = vlaneseq
      %v1723 = vshrl.u32 %v1722, 7
      %v1724 = vsub.s32 1, %v1723
      %v1725 = vrot.slane %v1405, %v1724
      %v1726 = vlaneseq
      %v1727 = vshrl.u32 %v1726, 7
      %v1728 = vsub.s32 1, %v1727
      %v1729 = vrot.slane %v1409, %v1728
      %v1730 = vlaneseq
      %v1731 = vshrl.u32 %v1730, 7
      %v1732 = vsub.s32 1, %v1731
      %v1733 = vrot.slane %v1413, %v1732
      %v1734 = vlaneseq
      %v1735 = vshrl.u32 %v1734, 7
      %v1736 = vsub.s32 1, %v1735
      %v1737 = vrot.slane %v1417, %v1736
      %v1738 = vlaneseq
      %v1739 = vshrl.u32 %v1738, 7
      %v1740 = vsub.s32 1, %v1739
      %v1741 = vrot.slane %v1421, %v1740
      %v1742 = vlaneseq
      %v1743 = vshrl.u32 %v1742, 7
      %v1744 = vsub.s32 1, %v1743
      %v1745 = vrot.slane %v1425, %v1744
      %v1746 = vlaneseq
      %v1747 = vshrl.u32 %v1746, 7
      %v1748 = vsub.s32 1, %v1747
      %v1749 = vrot.slane %v1429, %v1748
      %v1750 = vlaneseq
      %v1751 = vshrl.u32 %v1750, 7
      %v1752 = vsub.s32 1, %v1751
      %v1753 = vrot.slane %v1433, %v1752
      %v1754 = vlaneseq
      %v1755 = vshrl.u32 %v1754, 7
      %v1756 = vsub.s32 1, %v1755
      %v1757 = vrot.slane %v1437, %v1756
      %v1758 = vlaneseq
      %v1759 = vshrl.u32 %v1758, 7
      %v1760 = vsub.s32 1, %v1759
      %v1761 = vrot.slane %v1441, %v1760
      %v1762 = vlaneseq
      %v1763 = vshrl.u32 %v1762, 7
      %v1764 = vsub.s32 1, %v1763
      %v1765 = vrot.slane %v1445, %v1764
      %v1766 = vlaneseq
      %v1767 = vshrl.u32 %v1766, 7
      %v1768 = vsub.s32 1, %v1767
      %v1769 = vrot.slane %v1449, %v1768
      %v1770 = vlaneseq
      %v1771 = vshrl.u32 %v1770, 7
      %v1772 = vsub.s32 1, %v1771
      %v1773 = vrot.slane %v1453, %v1772
      %v1774 = vlaneseq
      %v1775 = vshrl.u32 %v1774, 7
      %v1776 = vsub.s32 1, %v1775
      %v1777 = vrot.slane %v1457, %v1776
      %v1778 = vlaneseq
      %v1779 = vshrl.u32 %v1778, 7
      %v1780 = vsub.s32 1, %v1779
      %v1781 = vrot.slane %v1461, %v1780
      %v1782 = vlaneseq
      %v1783 = vshrl.u32 %v1782, 7
      %v1784 = vsub.s32 1, %v1783
      %v1785 = vrot.slane %v1465, %v1784
      %v1786 = vlaneseq
      %v1787 = vshrl.u32 %v1786, 7
      %v1788 = vsub.s32 1, %v1787
      %v1789 = vrot.slane %v1469, %v1788
      %v1790 = vlaneseq
      %v1791 = vshrl.u32 %v1790, 7
      %v1792 = vsub.s32 1, %v1791
      %v1793 = vrot.slane %v1473, %v1792
      %v1794 = vlaneseq
      %v1795 = vshrl.u32 %v1794, 7
      %v1796 = vsub.s32 1, %v1795
      %v1797 = vrot.slane %v1477, %v1796
      %v1798 = vlaneseq
      %v1799 = vshrl.u32 %v1798, 7
      %v1800 = vsub.s32 1, %v1799
      %v1801 = vrot.slane %v1481, %v1800
      %v1802 = vlaneseq
      %v1803 = vshrl.u32 %v1802, 7
      %v1804 = vsub.s32 1, %v1803
      %v1805 = vrot.slane %v1485, %v1804
      %v1806 = vlaneseq
      %v1807 = vshrl.u32 %v1806, 7
      %v1808 = vsub.s32 1, %v1807
      %v1809 = vrot.slane %v1489, %v1808
      %v1810 = vlaneseq
      %v1811 = vshrl.u32 %v1810, 7
      %v1812 = vsub.s32 1, %v1811
      %v1813 = vrot.slane %v1493, %v1812
      %v1814 = vlaneseq
      %v1815 = vshrl.u32 %v1814, 7
      %v1816 = vsub.s32 1, %v1815
      %v1817 = vrot.slane %v1497, %v1816
      %v1818 = vlaneseq
      %v1819 = vshrl.u32 %v1818, 7
      %v1820 = vsub.s32 1, %v1819
      %v1821 = vrot.slane %v1501, %v1820
      %v1822 = vlaneseq
      %v1823 = vshrl.u32 %v1822, 7
      %v1824 = vsub.s32 1, %v1823
      %v1825 = vrot.slane %v1505, %v1824
      %v1826 = vlaneseq
      %v1827 = vshrl.u32 %v1826, 7
      %v1828 = vsub.s32 1, %v1827
      %v1829 = vrot.slane %v1509, %v1828
      %v1830 = vlaneseq
      %v1831 = vshrl.u32 %v1830, 7
      %v1832 = vsub.s32 1, %v1831
      %v1833 = vrot.slane %v1513, %v1832
      %v1834 = vlaneseq
      %v1835 = vshrl.u32 %v1834, 7
      %v1836 = vsub.s32 1, %v1835
      %v1837 = vrot.slane %v1517, %v1836
      %v1838 = vlaneseq
      %v1839 = vshrl.u32 %v1838, 7
      %v1840 = vsub.s32 1, %v1839
      %v1841 = vrot.slane %v1521, %v1840
      %v1842 = vlaneseq
      %v1843 = vshrl.u32 %v1842, 7
      %v1844 = vsub.s32 1, %v1843
      %v1845 = vrot.slane %v1525, %v1844
      %v1846 = vlaneseq
      %v1847 = vshrl.u32 %v1846, 7
      %v1848 = vsub.s32 1, %v1847
      %v1849 = vrot.slane %v1529, %v1848
      %v1850 = vlaneseq
      %v1851 = vshrl.u32 %v1850, 7
      %v1852 = vsub.s32 1, %v1851
      %v1853 = vrot.slane %v1533, %v1852
      %v1854 = vlaneseq
      %v1855 = vshrl.u32 %v1854, 7
      %v1856 = vsub.s32 1, %v1855
      %v1857 = vrot.slane %v1537, %v1856
      %v1858 = vlaneseq
      %v1859 = vshrl.u32 %v1858, 7
      %v1860 = vsub.s32 1, %v1859
      %v1861 = vrot.slane %v1541, %v1860
      %v1862 = vlaneseq
      %v1863 = vshrl.u32 %v1862, 7
      %v1864 = vsub.s32 1, %v1863
      %v1865 = vrot.slane %v1545, %v1864
      %v1866 = vmul.f32 %v1284, %v1613
      %v1867 = vmul.f32 %v1284, %v1617
      %v1868 = vmul.f32 %v1284, %v1621
      %v1869 = vmul.f32 %v1284, %v1625
      %v1870 = vmul.f32 %v1284, %v1629
      %v1871 = vmul.f32 %v1284, %v1633
      %v1872 = vmul.f32 %v1284, %v1637
      %v1873 = vmul.f32 %v1284, %v1641
      %v1874 = vmul.f32 %v1284, %v1645
      %v1875 = vmul.f32 %v1284, %v1649
      %v1876 = vmul.f32 %v1284, %v1653
      %v1877 = vmul.f32 %v1284, %v1657
      %v1878 = vmul.f32 %v1284, %v1661
      %v1879 = vmul.f32 %v1284, %v1665
      %v1880 = vmul.f32 %v1284, %v1669
      %v1881 = vmul.f32 %v1284, %v1673
      %v1882 = vmul.f32 %v1284, %v1677
      %v1883 = vmul.f32 %v1284, %v1681
      %v1884 = vmul.f32 %v1284, %v1685
      %v1885 = vmul.f32 %v1284, %v1689
      %v1886 = vmul.f32 %v1284, %v1693
      %v1887 = vmul.f32 %v1284, %v1697
      %v1888 = vmul.f32 %v1284, %v1701
      %v1889 = vmul.f32 %v1284, %v1705
      %v1890 = vmul.f32 %v1284, %v1709
      %v1891 = vmul.f32 %v1284, %v1713
      %v1892 = vmul.f32 %v1284, %v1717
      %v1893 = vmul.f32 %v1284, %v1721
      %v1894 = vmul.f32 %v1284, %v1725
      %v1895 = vmul.f32 %v1284, %v1729
      %v1896 = vmul.f32 %v1284, %v1733
      %v1897 = vmul.f32 %v1284, %v1737
      %v1898 = vmul.f32 %v1284, %v1741
      %v1899 = vmul.f32 %v1284, %v1745
      %v1900 = vmul.f32 %v1284, %v1749
      %v1901 = vmul.f32 %v1284, %v1753
      %v1902 = vmul.f32 %v1284, %v1757
      %v1903 = vmul.f32 %v1284, %v1761
      %v1904 = vmul.f32 %v1284, %v1765
      %v1905 = vmul.f32 %v1284, %v1769
      %v1906 = vmul.f32 %v1284, %v1773
      %v1907 = vmul.f32 %v1284, %v1777
      %v1908 = vmul.f32 %v1284, %v1781
      %v1909 = vmul.f32 %v1284, %v1785
      %v1910 = vmul.f32 %v1284, %v1789
      %v1911 = vmul.f32 %v1284, %v1793
      %v1912 = vmul.f32 %v1284, %v1797
      %v1913 = vmul.f32 %v1284, %v1801
      %v1914 = vmul.f32 %v1284, %v1805
      %v1915 = vmul.f32 %v1284, %v1809
      %v1916 = vmul.f32 %v1284, %v1813
      %v1917 = vmul.f32 %v1284, %v1817
      %v1918 = vmul.f32 %v1284, %v1821
      %v1919 = vmul.f32 %v1284, %v1825
      %v1920 = vmul.f32 %v1284, %v1829
      %v1921 = vmul.f32 %v1284, %v1833
      %v1922 = vmul.f32 %v1284, %v1837
      %v1923 = vmul.f32 %v1284, %v1841
      %v1924 = vmul.f32 %v1284, %v1845
      %v1925 = vmul.f32 %v1284, %v1849
      %v1926 = vmul.f32 %v1284, %v1853
      %v1927 = vmul.f32 %v1284, %v1857
      %v1928 = vmul.f32 %v1284, %v1861
      %v1929 = vmul.f32 %v1284, %v1865
      %v1930 = vmul.f32 %v1288, %v1613
      %v1931 = vmul.f32 %v1288, %v1617
      %v1932 = vmul.f32 %v1288, %v1621
      %v1933 = vmul.f32 %v1288, %v1625
      %v1934 = vmul.f32 %v1288, %v1629
      %v1935 = vmul.f32 %v1288, %v1633
      %v1936 = vmul.f32 %v1288, %v1637
      %v1937 = vmul.f32 %v1288, %v1641
      %v1938 = vmul.f32 %v1288, %v1645
      %v1939 = vmul.f32 %v1288, %v1649
      %v1940 = vmul.f32 %v1288, %v1653
      %v1941 = vmul.f32 %v1288, %v1657
      %v1942 = vmul.f32 %v1288, %v1661
      %v1943 = vmul.f32 %v1288, %v1665
      %v1944 = vmul.f32 %v1288, %v1669
      %v1945 = vmul.f32 %v1288, %v1673
      %v1946 = vmul.f32 %v1288, %v1677
      %v1947 = vmul.f32 %v1288, %v1681
      %v1948 = vmul.f32 %v1288, %v1685
      %v1949 = vmul.f32 %v1288, %v1689
      %v1950 = vmul.f32 %v1288, %v1693
      %v1951 = vmul.f32 %v1288, %v1697
      %v1952 = vmul.f32 %v1288, %v1701
      %v1953 = vmul.f32 %v1288, %v1705
      %v1954 = vmul.f32 %v1288, %v1709
      %v1955 = vmul.f32 %v1288, %v1713
      %v1956 = vmul.f32 %v1288, %v1717
      %v1957 = vmul.f32 %v1288, %v1721
      %v1958 = vmul.f32 %v1288, %v1725
      %v1959 = vmul.f32 %v1288, %v1729
      %v1960 = vmul.f32 %v1288, %v1733
      %v1961 = vmul.f32 %v1288, %v1737
      %v1962 = vmul.f32 %v1288, %v1741
      %v1963 = vmul.f32 %v1288, %v1745
      %v1964 = vmul.f32 %v1288, %v1749
      %v1965 = vmul.f32 %v1288, %v1753
      %v1966 = vmul.f32 %v1288, %v1757
      %v1967 = vmul.f32 %v1288, %v1761
      %v1968 = vmul.f32 %v1288, %v1765
      %v1969 = vmul.f32 %v1288, %v1769
      %v1970 = vmul.f32 %v1288, %v1773
      %v1971 = vmul.f32 %v1288, %v1777
      %v1972 = vmul.f32 %v1288, %v1781
      %v1973 = vmul.f32 %v1288, %v1785
      %v1974 = vmul.f32 %v1288, %v1789
      %v1975 = vmul.f32 %v1288, %v1793
      %v1976 = vmul.f32 %v1288, %v1797
      %v1977 = vmul.f32 %v1288, %v1801
      %v1978 = vmul.f32 %v1288, %v1805
      %v1979 = vmul.f32 %v1288, %v1809
      %v1980 = vmul.f32 %v1288, %v1813
      %v1981 = vmul.f32 %v1288, %v1817
      %v1982 = vmul.f32 %v1288, %v1821
      %v1983 = vmul.f32 %v1288, %v1825
      %v1984 = vmul.f32 %v1288, %v1829
      %v1985 = vmul.f32 %v1288, %v1833
      %v1986 = vmul.f32 %v1288, %v1837
      %v1987 = vmul.f32 %v1288, %v1841
      %v1988 = vmul.f32 %v1288, %v1845
      %v1989 = vmul.f32 %v1288, %v1849
      %v1990 = vmul.f32 %v1288, %v1853
      %v1991 = vmul.f32 %v1288, %v1857
      %v1992 = vmul.f32 %v1288, %v1861
      %v1993 = vmul.f32 %v1288, %v1865
      %v1994 = vadd.f32 %v1154, %v1866
      %v1995 = vadd.f32 %v1155, %v1867
      %v1996 = vadd.f32 %v1156, %v1868
      %v1997 = vadd.f32 %v1157, %v1869
      %v1998 = vadd.f32 %v1158, %v1870
      %v1999 = vadd.f32 %v1159, %v1871
      %v2000 = vadd.f32 %v1160, %v1872
      %v2001 = vadd.f32 %v1161, %v1873
      %v2002 = vadd.f32 %v1162, %v1874
      %v2003 = vadd.f32 %v1163, %v1875
      %v2004 = vadd.f32 %v1164, %v1876
      %v2005 = vadd.f32 %v1165, %v1877
      %v2006 = vadd.f32 %v1166, %v1878
      %v2007 = vadd.f32 %v1167, %v1879
      %v2008 = vadd.f32 %v1168, %v1880
      %v2009 = vadd.f32 %v1169, %v1881
      %v2010 = vadd.f32 %v1170, %v1882
      %v2011 = vadd.f32 %v1171, %v1883
      %v2012 = vadd.f32 %v1172, %v1884
      %v2013 = vadd.f32 %v1173, %v1885
      %v2014 = vadd.f32 %v1174, %v1886
      %v2015 = vadd.f32 %v1175, %v1887
      %v2016 = vadd.f32 %v1176, %v1888
      %v2017 = vadd.f32 %v1177, %v1889
      %v2018 = vadd.f32 %v1178, %v1890
      %v2019 = vadd.f32 %v1179, %v1891
      %v2020 = vadd.f32 %v1180, %v1892
      %v2021 = vadd.f32 %v1181, %v1893
      %v2022 = vadd.f32 %v1182, %v1894
      %v2023 = vadd.f32 %v1183, %v1895
      %v2024 = vadd.f32 %v1184, %v1896
      %v2025 = vadd.f32 %v1185, %v1897
      %v2026 = vadd.f32 %v1186, %v1898
      %v2027 = vadd.f32 %v1187, %v1899
      %v2028 = vadd.f32 %v1188, %v1900
      %v2029 = vadd.f32 %v1189, %v1901
      %v2030 = vadd.f32 %v1190, %v1902
      %v2031 = vadd.f32 %v1191, %v1903
      %v2032 = vadd.f32 %v1192, %v1904
      %v2033 = vadd.f32 %v1193, %v1905
      %v2034 = vadd.f32 %v1194, %v1906
      %v2035 = vadd.f32 %v1195, %v1907
      %v2036 = vadd.f32 %v1196, %v1908
      %v2037 = vadd.f32 %v1197, %v1909
      %v2038 = vadd.f32 %v1198, %v1910
      %v2039 = vadd.f32 %v1199, %v1911
      %v2040 = vadd.f32 %v1200, %v1912
      %v2041 = vadd.f32 %v1201, %v1913
      %v2042 = vadd.f32 %v1202, %v1914
      %v2043 = vadd.f32 %v1203, %v1915
      %v2044 = vadd.f32 %v1204, %v1916
      %v2045 = vadd.f32 %v1205, %v1917
      %v2046 = vadd.f32 %v1206, %v1918
      %v2047 = vadd.f32 %v1207, %v1919
      %v2048 = vadd.f32 %v1208, %v1920
      %v2049 = vadd.f32 %v1209, %v1921
      %v2050 = vadd.f32 %v1210, %v1922
      %v2051 = vadd.f32 %v1211, %v1923
      %v2052 = vadd.f32 %v1212, %v1924
      %v2053 = vadd.f32 %v1213, %v1925
      %v2054 = vadd.f32 %v1214, %v1926
      %v2055 = vadd.f32 %v1215, %v1927
      %v2056 = vadd.f32 %v1216, %v1928
      %v2057 = vadd.f32 %v1217, %v1929
      %v2058 = vadd.f32 %v1218, %v1930
      %v2059 = vadd.f32 %v1219, %v1931
      %v2060 = vadd.f32 %v1220, %v1932
      %v2061 = vadd.f32 %v1221, %v1933
      %v2062 = vadd.f32 %v1222, %v1934
      %v2063 = vadd.f32 %v1223, %v1935
      %v2064 = vadd.f32 %v1224, %v1936
      %v2065 = vadd.f32 %v1225, %v1937
      %v2066 = vadd.f32 %v1226, %v1938
      %v2067 = vadd.f32 %v1227, %v1939
      %v2068 = vadd.f32 %v1228, %v1940
      %v2069 = vadd.f32 %v1229, %v1941
      %v2070 = vadd.f32 %v1230, %v1942
      %v2071 = vadd.f32 %v1231, %v1943
      %v2072 = vadd.f32 %v1232, %v1944
      %v2073 = vadd.f32 %v1233, %v1945
      %v2074 = vadd.f32 %v1234, %v1946
      %v2075 = vadd.f32 %v1235, %v1947
      %v2076 = vadd.f32 %v1236, %v1948
      %v2077 = vadd.f32 %v1237, %v1949
      %v2078 = vadd.f32 %v1238, %v1950
      %v2079 = vadd.f32 %v1239, %v1951
      %v2080 = vadd.f32 %v1240, %v1952
      %v2081 = vadd.f32 %v1241, %v1953
      %v2082 = vadd.f32 %v1242, %v1954
      %v2083 = vadd.f32 %v1243, %v1955
      %v2084 = vadd.f32 %v1244, %v1956
      %v2085 = vadd.f32 %v1245, %v1957
      %v2086 = vadd.f32 %v1246, %v1958
      %v2087 = vadd.f32 %v1247, %v1959
      %v2088 = vadd.f32 %v1248, %v1960
      %v2089 = vadd.f32 %v1249, %v1961
      %v2090 = vadd.f32 %v1250, %v1962
      %v2091 = vadd.f32 %v1251, %v1963
      %v2092 = vadd.f32 %v1252, %v1964
      %v2093 = vadd.f32 %v1253, %v1965
      %v2094 = vadd.f32 %v1254, %v1966
      %v2095 = vadd.f32 %v1255, %v1967
      %v2096 = vadd.f32 %v1256, %v1968
      %v2097 = vadd.f32 %v1257, %v1969
      %v2098 = vadd.f32 %v1258, %v1970
      %v2099 = vadd.f32 %v1259, %v1971
      %v2100 = vadd.f32 %v1260, %v1972
      %v2101 = vadd.f32 %v1261, %v1973
      %v2102 = vadd.f32 %v1262, %v1974
      %v2103 = vadd.f32 %v1263, %v1975
      %v2104 = vadd.f32 %v1264, %v1976
      %v2105 = vadd.f32 %v1265, %v1977
      %v2106 = vadd.f32 %v1266, %v1978
      %v2107 = vadd.f32 %v1267, %v1979
      %v2108 = vadd.f32 %v1268, %v1980
      %v2109 = vadd.f32 %v1269, %v1981
      %v2110 = vadd.f32 %v1270, %v1982
      %v2111 = vadd.f32 %v1271, %v1983
      %v2112 = vadd.f32 %v1272, %v1984
      %v2113 = vadd.f32 %v1273, %v1985
      %v2114 = vadd.f32 %v1274, %v1986
      %v2115 = vadd.f32 %v1275, %v1987
      %v2116 = vadd.f32 %v1276, %v1988
      %v2117 = vadd.f32 %v1277, %v1989
      %v2118 = vadd.f32 %v1278, %v1990
      %v2119 = vadd.f32 %v1279, %v1991
      %v2120 = vadd.f32 %v1280, %v1992
      %v2121 = vadd.f32 %v1281, %v1993
      %2122 = vset.pattern.permute.xlu0 2
      %2123 = vperm.xlu0 %2122, %v394
      %v2124 = vpop.permute.xlu0 %2123
      %2126 = vset.pattern.permute.xlu0 2
      %2127 = vperm.xlu0 %2126, %v395
      %v2128 = vpop.permute.xlu0 %2127
      %v2130 = vlaneseq
      %v2131 = vshrl.u32 %v2130, 7
      %v2132 = vsub.s32 2, %v2131
      %v2133 = vrot.slane %v362, %v2132
      %v2134 = vlaneseq
      %v2135 = vshrl.u32 %v2134, 7
      %v2136 = vsub.s32 6, %v2135
      %v2137 = vrot.slane %v362, %v2136
      %v2138 = vlaneseq
      %v2139 = vshrl.u32 %v2138, 7
      %v2140 = vsub.s32 2, %v2139
      %v2141 = vrot.slane %v363, %v2140
      %v2142 = vlaneseq
      %v2143 = vshrl.u32 %v2142, 7
      %v2144 = vsub.s32 6, %v2143
      %v2145 = vrot.slane %v363, %v2144
      %v2146 = vlaneseq
      %v2147 = vshrl.u32 %v2146, 7
      %v2148 = vsub.s32 2, %v2147
      %v2149 = vrot.slane %v364, %v2148
      %v2150 = vlaneseq
      %v2151 = vshrl.u32 %v2150, 7
      %v2152 = vsub.s32 6, %v2151
      %v2153 = vrot.slane %v364, %v2152
      %v2154 = vlaneseq
      %v2155 = vshrl.u32 %v2154, 7
      %v2156 = vsub.s32 2, %v2155
      %v2157 = vrot.slane %v365, %v2156
      %v2158 = vlaneseq
      %v2159 = vshrl.u32 %v2158, 7
      %v2160 = vsub.s32 6, %v2159
      %v2161 = vrot.slane %v365, %v2160
      %v2162 = vlaneseq
      %v2163 = vshrl.u32 %v2162, 7
      %v2164 = vsub.s32 2, %v2163
      %v2165 = vrot.slane %v366, %v2164
      %v2166 = vlaneseq
      %v2167 = vshrl.u32 %v2166, 7
      %v2168 = vsub.s32 6, %v2167
      %v2169 = vrot.slane %v366, %v2168
      %v2170 = vlaneseq
      %v2171 = vshrl.u32 %v2170, 7
      %v2172 = vsub.s32 2, %v2171
      %v2173 = vrot.slane %v367, %v2172
      %v2174 = vlaneseq
      %v2175 = vshrl.u32 %v2174, 7
      %v2176 = vsub.s32 6, %v2175
      %v2177 = vrot.slane %v367, %v2176
      %v2178 = vlaneseq
      %v2179 = vshrl.u32 %v2178, 7
      %v2180 = vsub.s32 2, %v2179
      %v2181 = vrot.slane %v368, %v2180
      %v2182 = vlaneseq
      %v2183 = vshrl.u32 %v2182, 7
      %v2184 = vsub.s32 6, %v2183
      %v2185 = vrot.slane %v368, %v2184
      %v2186 = vlaneseq
      %v2187 = vshrl.u32 %v2186, 7
      %v2188 = vsub.s32 2, %v2187
      %v2189 = vrot.slane %v369, %v2188
      %v2190 = vlaneseq
      %v2191 = vshrl.u32 %v2190, 7
      %v2192 = vsub.s32 6, %v2191
      %v2193 = vrot.slane %v369, %v2192
      %v2194 = vlaneseq
      %v2195 = vshrl.u32 %v2194, 7
      %v2196 = vsub.s32 2, %v2195
      %v2197 = vrot.slane %v370, %v2196
      %v2198 = vlaneseq
      %v2199 = vshrl.u32 %v2198, 7
      %v2200 = vsub.s32 6, %v2199
      %v2201 = vrot.slane %v370, %v2200
      %v2202 = vlaneseq
      %v2203 = vshrl.u32 %v2202, 7
      %v2204 = vsub.s32 2, %v2203
      %v2205 = vrot.slane %v371, %v2204
      %v2206 = vlaneseq
      %v2207 = vshrl.u32 %v2206, 7
      %v2208 = vsub.s32 6, %v2207
      %v2209 = vrot.slane %v371, %v2208
      %v2210 = vlaneseq
      %v2211 = vshrl.u32 %v2210, 7
      %v2212 = vsub.s32 2, %v2211
      %v2213 = vrot.slane %v372, %v2212
      %v2214 = vlaneseq
      %v2215 = vshrl.u32 %v2214, 7
      %v2216 = vsub.s32 6, %v2215
      %v2217 = vrot.slane %v372, %v2216
      %v2218 = vlaneseq
      %v2219 = vshrl.u32 %v2218, 7
      %v2220 = vsub.s32 2, %v2219
      %v2221 = vrot.slane %v373, %v2220
      %v2222 = vlaneseq
      %v2223 = vshrl.u32 %v2222, 7
      %v2224 = vsub.s32 6, %v2223
      %v2225 = vrot.slane %v373, %v2224
      %v2226 = vlaneseq
      %v2227 = vshrl.u32 %v2226, 7
      %v2228 = vsub.s32 2, %v2227
      %v2229 = vrot.slane %v374, %v2228
      %v2230 = vlaneseq
      %v2231 = vshrl.u32 %v2230, 7
      %v2232 = vsub.s32 6, %v2231
      %v2233 = vrot.slane %v374, %v2232
      %v2234 = vlaneseq
      %v2235 = vshrl.u32 %v2234, 7
      %v2236 = vsub.s32 2, %v2235
      %v2237 = vrot.slane %v375, %v2236
      %v2238 = vlaneseq
      %v2239 = vshrl.u32 %v2238, 7
      %v2240 = vsub.s32 6, %v2239
      %v2241 = vrot.slane %v375, %v2240
      %v2242 = vlaneseq
      %v2243 = vshrl.u32 %v2242, 7
      %v2244 = vsub.s32 2, %v2243
      %v2245 = vrot.slane %v376, %v2244
      %v2246 = vlaneseq
      %v2247 = vshrl.u32 %v2246, 7
      %v2248 = vsub.s32 6, %v2247
      %v2249 = vrot.slane %v376, %v2248
      %v2250 = vlaneseq
      %v2251 = vshrl.u32 %v2250, 7
      %v2252 = vsub.s32 2, %v2251
      %v2253 = vrot.slane %v377, %v2252
      %v2254 = vlaneseq
      %v2255 = vshrl.u32 %v2254, 7
      %v2256 = vsub.s32 6, %v2255
      %v2257 = vrot.slane %v377, %v2256
      %v2258 = vlaneseq
      %v2259 = vshrl.u32 %v2258, 7
      %v2260 = vsub.s32 2, %v2259
      %v2261 = vrot.slane %v378, %v2260
      %v2262 = vlaneseq
      %v2263 = vshrl.u32 %v2262, 7
      %v2264 = vsub.s32 6, %v2263
      %v2265 = vrot.slane %v378, %v2264
      %v2266 = vlaneseq
      %v2267 = vshrl.u32 %v2266, 7
      %v2268 = vsub.s32 2, %v2267
      %v2269 = vrot.slane %v379, %v2268
      %v2270 = vlaneseq
      %v2271 = vshrl.u32 %v2270, 7
      %v2272 = vsub.s32 6, %v2271
      %v2273 = vrot.slane %v379, %v2272
      %v2274 = vlaneseq
      %v2275 = vshrl.u32 %v2274, 7
      %v2276 = vsub.s32 2, %v2275
      %v2277 = vrot.slane %v380, %v2276
      %v2278 = vlaneseq
      %v2279 = vshrl.u32 %v2278, 7
      %v2280 = vsub.s32 6, %v2279
      %v2281 = vrot.slane %v380, %v2280
      %v2282 = vlaneseq
      %v2283 = vshrl.u32 %v2282, 7
      %v2284 = vsub.s32 2, %v2283
      %v2285 = vrot.slane %v381, %v2284
      %v2286 = vlaneseq
      %v2287 = vshrl.u32 %v2286, 7
      %v2288 = vsub.s32 6, %v2287
      %v2289 = vrot.slane %v381, %v2288
      %v2290 = vlaneseq
      %v2291 = vshrl.u32 %v2290, 7
      %v2292 = vsub.s32 2, %v2291
      %v2293 = vrot.slane %v382, %v2292
      %v2294 = vlaneseq
      %v2295 = vshrl.u32 %v2294, 7
      %v2296 = vsub.s32 6, %v2295
      %v2297 = vrot.slane %v382, %v2296
      %v2298 = vlaneseq
      %v2299 = vshrl.u32 %v2298, 7
      %v2300 = vsub.s32 2, %v2299
      %v2301 = vrot.slane %v383, %v2300
      %v2302 = vlaneseq
      %v2303 = vshrl.u32 %v2302, 7
      %v2304 = vsub.s32 6, %v2303
      %v2305 = vrot.slane %v383, %v2304
      %v2306 = vlaneseq
      %v2307 = vshrl.u32 %v2306, 7
      %v2308 = vsub.s32 2, %v2307
      %v2309 = vrot.slane %v384, %v2308
      %v2310 = vlaneseq
      %v2311 = vshrl.u32 %v2310, 7
      %v2312 = vsub.s32 6, %v2311
      %v2313 = vrot.slane %v384, %v2312
      %v2314 = vlaneseq
      %v2315 = vshrl.u32 %v2314, 7
      %v2316 = vsub.s32 2, %v2315
      %v2317 = vrot.slane %v385, %v2316
      %v2318 = vlaneseq
      %v2319 = vshrl.u32 %v2318, 7
      %v2320 = vsub.s32 6, %v2319
      %v2321 = vrot.slane %v385, %v2320
      %v2322 = vlaneseq
      %v2323 = vshrl.u32 %v2322, 7
      %v2324 = vsub.s32 2, %v2323
      %v2325 = vrot.slane %v386, %v2324
      %v2326 = vlaneseq
      %v2327 = vshrl.u32 %v2326, 7
      %v2328 = vsub.s32 6, %v2327
      %v2329 = vrot.slane %v386, %v2328
      %v2330 = vlaneseq
      %v2331 = vshrl.u32 %v2330, 7
      %v2332 = vsub.s32 2, %v2331
      %v2333 = vrot.slane %v387, %v2332
      %v2334 = vlaneseq
      %v2335 = vshrl.u32 %v2334, 7
      %v2336 = vsub.s32 6, %v2335
      %v2337 = vrot.slane %v387, %v2336
      %v2338 = vlaneseq
      %v2339 = vshrl.u32 %v2338, 7
      %v2340 = vsub.s32 2, %v2339
      %v2341 = vrot.slane %v388, %v2340
      %v2342 = vlaneseq
      %v2343 = vshrl.u32 %v2342, 7
      %v2344 = vsub.s32 6, %v2343
      %v2345 = vrot.slane %v388, %v2344
      %v2346 = vlaneseq
      %v2347 = vshrl.u32 %v2346, 7
      %v2348 = vsub.s32 2, %v2347
      %v2349 = vrot.slane %v389, %v2348
      %v2350 = vlaneseq
      %v2351 = vshrl.u32 %v2350, 7
      %v2352 = vsub.s32 6, %v2351
      %v2353 = vrot.slane %v389, %v2352
      %v2354 = vlaneseq
      %v2355 = vshrl.u32 %v2354, 7
      %v2356 = vsub.s32 2, %v2355
      %v2357 = vrot.slane %v390, %v2356
      %v2358 = vlaneseq
      %v2359 = vshrl.u32 %v2358, 7
      %v2360 = vsub.s32 6, %v2359
      %v2361 = vrot.slane %v390, %v2360
      %v2362 = vlaneseq
      %v2363 = vshrl.u32 %v2362, 7
      %v2364 = vsub.s32 2, %v2363
      %v2365 = vrot.slane %v391, %v2364
      %v2366 = vlaneseq
      %v2367 = vshrl.u32 %v2366, 7
      %v2368 = vsub.s32 6, %v2367
      %v2369 = vrot.slane %v391, %v2368
      %v2370 = vlaneseq
      %v2371 = vshrl.u32 %v2370, 7
      %v2372 = vsub.s32 2, %v2371
      %v2373 = vrot.slane %v392, %v2372
      %v2374 = vlaneseq
      %v2375 = vshrl.u32 %v2374, 7
      %v2376 = vsub.s32 6, %v2375
      %v2377 = vrot.slane %v392, %v2376
      %v2378 = vlaneseq
      %v2379 = vshrl.u32 %v2378, 7
      %v2380 = vsub.s32 2, %v2379
      %v2381 = vrot.slane %v393, %v2380
      %v2382 = vlaneseq
      %v2383 = vshrl.u32 %v2382, 7
      %v2384 = vsub.s32 6, %v2383
      %v2385 = vrot.slane %v393, %v2384
      %v2450 = vlaneseq
      %v2451 = vshrl.u32 %v2450, 7
      %v2452 = vsub.s32 2, %v2451
      %v2453 = vrot.slane %v2133, %v2452
      %v2454 = vlaneseq
      %v2455 = vshrl.u32 %v2454, 7
      %v2456 = vsub.s32 2, %v2455
      %v2457 = vrot.slane %v2137, %v2456
      %v2458 = vlaneseq
      %v2459 = vshrl.u32 %v2458, 7
      %v2460 = vsub.s32 2, %v2459
      %v2461 = vrot.slane %v2141, %v2460
      %v2462 = vlaneseq
      %v2463 = vshrl.u32 %v2462, 7
      %v2464 = vsub.s32 2, %v2463
      %v2465 = vrot.slane %v2145, %v2464
      %v2466 = vlaneseq
      %v2467 = vshrl.u32 %v2466, 7
      %v2468 = vsub.s32 2, %v2467
      %v2469 = vrot.slane %v2149, %v2468
      %v2470 = vlaneseq
      %v2471 = vshrl.u32 %v2470, 7
      %v2472 = vsub.s32 2, %v2471
      %v2473 = vrot.slane %v2153, %v2472
      %v2474 = vlaneseq
      %v2475 = vshrl.u32 %v2474, 7
      %v2476 = vsub.s32 2, %v2475
      %v2477 = vrot.slane %v2157, %v2476
      %v2478 = vlaneseq
      %v2479 = vshrl.u32 %v2478, 7
      %v2480 = vsub.s32 2, %v2479
      %v2481 = vrot.slane %v2161, %v2480
      %v2482 = vlaneseq
      %v2483 = vshrl.u32 %v2482, 7
      %v2484 = vsub.s32 2, %v2483
      %v2485 = vrot.slane %v2165, %v2484
      %v2486 = vlaneseq
      %v2487 = vshrl.u32 %v2486, 7
      %v2488 = vsub.s32 2, %v2487
      %v2489 = vrot.slane %v2169, %v2488
      %v2490 = vlaneseq
      %v2491 = vshrl.u32 %v2490, 7
      %v2492 = vsub.s32 2, %v2491
      %v2493 = vrot.slane %v2173, %v2492
      %v2494 = vlaneseq
      %v2495 = vshrl.u32 %v2494, 7
      %v2496 = vsub.s32 2, %v2495
      %v2497 = vrot.slane %v2177, %v2496
      %v2498 = vlaneseq
      %v2499 = vshrl.u32 %v2498, 7
      %v2500 = vsub.s32 2, %v2499
      %v2501 = vrot.slane %v2181, %v2500
      %v2502 = vlaneseq
      %v2503 = vshrl.u32 %v2502, 7
      %v2504 = vsub.s32 2, %v2503
      %v2505 = vrot.slane %v2185, %v2504
      %v2506 = vlaneseq
      %v2507 = vshrl.u32 %v2506, 7
      %v2508 = vsub.s32 2, %v2507
      %v2509 = vrot.slane %v2189, %v2508
      %v2510 = vlaneseq
      %v2511 = vshrl.u32 %v2510, 7
      %v2512 = vsub.s32 2, %v2511
      %v2513 = vrot.slane %v2193, %v2512
      %v2514 = vlaneseq
      %v2515 = vshrl.u32 %v2514, 7
      %v2516 = vsub.s32 2, %v2515
      %v2517 = vrot.slane %v2197, %v2516
      %v2518 = vlaneseq
      %v2519 = vshrl.u32 %v2518, 7
      %v2520 = vsub.s32 2, %v2519
      %v2521 = vrot.slane %v2201, %v2520
      %v2522 = vlaneseq
      %v2523 = vshrl.u32 %v2522, 7
      %v2524 = vsub.s32 2, %v2523
      %v2525 = vrot.slane %v2205, %v2524
      %v2526 = vlaneseq
      %v2527 = vshrl.u32 %v2526, 7
      %v2528 = vsub.s32 2, %v2527
      %v2529 = vrot.slane %v2209, %v2528
      %v2530 = vlaneseq
      %v2531 = vshrl.u32 %v2530, 7
      %v2532 = vsub.s32 2, %v2531
      %v2533 = vrot.slane %v2213, %v2532
      %v2534 = vlaneseq
      %v2535 = vshrl.u32 %v2534, 7
      %v2536 = vsub.s32 2, %v2535
      %v2537 = vrot.slane %v2217, %v2536
      %v2538 = vlaneseq
      %v2539 = vshrl.u32 %v2538, 7
      %v2540 = vsub.s32 2, %v2539
      %v2541 = vrot.slane %v2221, %v2540
      %v2542 = vlaneseq
      %v2543 = vshrl.u32 %v2542, 7
      %v2544 = vsub.s32 2, %v2543
      %v2545 = vrot.slane %v2225, %v2544
      %v2546 = vlaneseq
      %v2547 = vshrl.u32 %v2546, 7
      %v2548 = vsub.s32 2, %v2547
      %v2549 = vrot.slane %v2229, %v2548
      %v2550 = vlaneseq
      %v2551 = vshrl.u32 %v2550, 7
      %v2552 = vsub.s32 2, %v2551
      %v2553 = vrot.slane %v2233, %v2552
      %v2554 = vlaneseq
      %v2555 = vshrl.u32 %v2554, 7
      %v2556 = vsub.s32 2, %v2555
      %v2557 = vrot.slane %v2237, %v2556
      %v2558 = vlaneseq
      %v2559 = vshrl.u32 %v2558, 7
      %v2560 = vsub.s32 2, %v2559
      %v2561 = vrot.slane %v2241, %v2560
      %v2562 = vlaneseq
      %v2563 = vshrl.u32 %v2562, 7
      %v2564 = vsub.s32 2, %v2563
      %v2565 = vrot.slane %v2245, %v2564
      %v2566 = vlaneseq
      %v2567 = vshrl.u32 %v2566, 7
      %v2568 = vsub.s32 2, %v2567
      %v2569 = vrot.slane %v2249, %v2568
      %v2570 = vlaneseq
      %v2571 = vshrl.u32 %v2570, 7
      %v2572 = vsub.s32 2, %v2571
      %v2573 = vrot.slane %v2253, %v2572
      %v2574 = vlaneseq
      %v2575 = vshrl.u32 %v2574, 7
      %v2576 = vsub.s32 2, %v2575
      %v2577 = vrot.slane %v2257, %v2576
      %v2578 = vlaneseq
      %v2579 = vshrl.u32 %v2578, 7
      %v2580 = vsub.s32 2, %v2579
      %v2581 = vrot.slane %v2261, %v2580
      %v2582 = vlaneseq
      %v2583 = vshrl.u32 %v2582, 7
      %v2584 = vsub.s32 2, %v2583
      %v2585 = vrot.slane %v2265, %v2584
      %v2586 = vlaneseq
      %v2587 = vshrl.u32 %v2586, 7
      %v2588 = vsub.s32 2, %v2587
      %v2589 = vrot.slane %v2269, %v2588
      %v2590 = vlaneseq
      %v2591 = vshrl.u32 %v2590, 7
      %v2592 = vsub.s32 2, %v2591
      %v2593 = vrot.slane %v2273, %v2592
      %v2594 = vlaneseq
      %v2595 = vshrl.u32 %v2594, 7
      %v2596 = vsub.s32 2, %v2595
      %v2597 = vrot.slane %v2277, %v2596
      %v2598 = vlaneseq
      %v2599 = vshrl.u32 %v2598, 7
      %v2600 = vsub.s32 2, %v2599
      %v2601 = vrot.slane %v2281, %v2600
      %v2602 = vlaneseq
      %v2603 = vshrl.u32 %v2602, 7
      %v2604 = vsub.s32 2, %v2603
      %v2605 = vrot.slane %v2285, %v2604
      %v2606 = vlaneseq
      %v2607 = vshrl.u32 %v2606, 7
      %v2608 = vsub.s32 2, %v2607
      %v2609 = vrot.slane %v2289, %v2608
      %v2610 = vlaneseq
      %v2611 = vshrl.u32 %v2610, 7
      %v2612 = vsub.s32 2, %v2611
      %v2613 = vrot.slane %v2293, %v2612
      %v2614 = vlaneseq
      %v2615 = vshrl.u32 %v2614, 7
      %v2616 = vsub.s32 2, %v2615
      %v2617 = vrot.slane %v2297, %v2616
      %v2618 = vlaneseq
      %v2619 = vshrl.u32 %v2618, 7
      %v2620 = vsub.s32 2, %v2619
      %v2621 = vrot.slane %v2301, %v2620
      %v2622 = vlaneseq
      %v2623 = vshrl.u32 %v2622, 7
      %v2624 = vsub.s32 2, %v2623
      %v2625 = vrot.slane %v2305, %v2624
      %v2626 = vlaneseq
      %v2627 = vshrl.u32 %v2626, 7
      %v2628 = vsub.s32 2, %v2627
      %v2629 = vrot.slane %v2309, %v2628
      %v2630 = vlaneseq
      %v2631 = vshrl.u32 %v2630, 7
      %v2632 = vsub.s32 2, %v2631
      %v2633 = vrot.slane %v2313, %v2632
      %v2634 = vlaneseq
      %v2635 = vshrl.u32 %v2634, 7
      %v2636 = vsub.s32 2, %v2635
      %v2637 = vrot.slane %v2317, %v2636
      %v2638 = vlaneseq
      %v2639 = vshrl.u32 %v2638, 7
      %v2640 = vsub.s32 2, %v2639
      %v2641 = vrot.slane %v2321, %v2640
      %v2642 = vlaneseq
      %v2643 = vshrl.u32 %v2642, 7
      %v2644 = vsub.s32 2, %v2643
      %v2645 = vrot.slane %v2325, %v2644
      %v2646 = vlaneseq
      %v2647 = vshrl.u32 %v2646, 7
      %v2648 = vsub.s32 2, %v2647
      %v2649 = vrot.slane %v2329, %v2648
      %v2650 = vlaneseq
      %v2651 = vshrl.u32 %v2650, 7
      %v2652 = vsub.s32 2, %v2651
      %v2653 = vrot.slane %v2333, %v2652
      %v2654 = vlaneseq
      %v2655 = vshrl.u32 %v2654, 7
      %v2656 = vsub.s32 2, %v2655
      %v2657 = vrot.slane %v2337, %v2656
      %v2658 = vlaneseq
      %v2659 = vshrl.u32 %v2658, 7
      %v2660 = vsub.s32 2, %v2659
      %v2661 = vrot.slane %v2341, %v2660
      %v2662 = vlaneseq
      %v2663 = vshrl.u32 %v2662, 7
      %v2664 = vsub.s32 2, %v2663
      %v2665 = vrot.slane %v2345, %v2664
      %v2666 = vlaneseq
      %v2667 = vshrl.u32 %v2666, 7
      %v2668 = vsub.s32 2, %v2667
      %v2669 = vrot.slane %v2349, %v2668
      %v2670 = vlaneseq
      %v2671 = vshrl.u32 %v2670, 7
      %v2672 = vsub.s32 2, %v2671
      %v2673 = vrot.slane %v2353, %v2672
      %v2674 = vlaneseq
      %v2675 = vshrl.u32 %v2674, 7
      %v2676 = vsub.s32 2, %v2675
      %v2677 = vrot.slane %v2357, %v2676
      %v2678 = vlaneseq
      %v2679 = vshrl.u32 %v2678, 7
      %v2680 = vsub.s32 2, %v2679
      %v2681 = vrot.slane %v2361, %v2680
      %v2682 = vlaneseq
      %v2683 = vshrl.u32 %v2682, 7
      %v2684 = vsub.s32 2, %v2683
      %v2685 = vrot.slane %v2365, %v2684
      %v2686 = vlaneseq
      %v2687 = vshrl.u32 %v2686, 7
      %v2688 = vsub.s32 2, %v2687
      %v2689 = vrot.slane %v2369, %v2688
      %v2690 = vlaneseq
      %v2691 = vshrl.u32 %v2690, 7
      %v2692 = vsub.s32 2, %v2691
      %v2693 = vrot.slane %v2373, %v2692
      %v2694 = vlaneseq
      %v2695 = vshrl.u32 %v2694, 7
      %v2696 = vsub.s32 2, %v2695
      %v2697 = vrot.slane %v2377, %v2696
      %v2698 = vlaneseq
      %v2699 = vshrl.u32 %v2698, 7
      %v2700 = vsub.s32 2, %v2699
      %v2701 = vrot.slane %v2381, %v2700
      %v2702 = vlaneseq
      %v2703 = vshrl.u32 %v2702, 7
      %v2704 = vsub.s32 2, %v2703
      %v2705 = vrot.slane %v2385, %v2704
      %v2706 = vmul.f32 %v2124, %v2453
      %v2707 = vmul.f32 %v2124, %v2457
      %v2708 = vmul.f32 %v2124, %v2461
      %v2709 = vmul.f32 %v2124, %v2465
      %v2710 = vmul.f32 %v2124, %v2469
      %v2711 = vmul.f32 %v2124, %v2473
      %v2712 = vmul.f32 %v2124, %v2477
      %v2713 = vmul.f32 %v2124, %v2481
      %v2714 = vmul.f32 %v2124, %v2485
      %v2715 = vmul.f32 %v2124, %v2489
      %v2716 = vmul.f32 %v2124, %v2493
      %v2717 = vmul.f32 %v2124, %v2497
      %v2718 = vmul.f32 %v2124, %v2501
      %v2719 = vmul.f32 %v2124, %v2505
      %v2720 = vmul.f32 %v2124, %v2509
      %v2721 = vmul.f32 %v2124, %v2513
      %v2722 = vmul.f32 %v2124, %v2517
      %v2723 = vmul.f32 %v2124, %v2521
      %v2724 = vmul.f32 %v2124, %v2525
      %v2725 = vmul.f32 %v2124, %v2529
      %v2726 = vmul.f32 %v2124, %v2533
      %v2727 = vmul.f32 %v2124, %v2537
      %v2728 = vmul.f32 %v2124, %v2541
      %v2729 = vmul.f32 %v2124, %v2545
      %v2730 = vmul.f32 %v2124, %v2549
      %v2731 = vmul.f32 %v2124, %v2553
      %v2732 = vmul.f32 %v2124, %v2557
      %v2733 = vmul.f32 %v2124, %v2561
      %v2734 = vmul.f32 %v2124, %v2565
      %v2735 = vmul.f32 %v2124, %v2569
      %v2736 = vmul.f32 %v2124, %v2573
      %v2737 = vmul.f32 %v2124, %v2577
      %v2738 = vmul.f32 %v2124, %v2581
      %v2739 = vmul.f32 %v2124, %v2585
      %v2740 = vmul.f32 %v2124, %v2589
      %v2741 = vmul.f32 %v2124, %v2593
      %v2742 = vmul.f32 %v2124, %v2597
      %v2743 = vmul.f32 %v2124, %v2601
      %v2744 = vmul.f32 %v2124, %v2605
      %v2745 = vmul.f32 %v2124, %v2609
      %v2746 = vmul.f32 %v2124, %v2613
      %v2747 = vmul.f32 %v2124, %v2617
      %v2748 = vmul.f32 %v2124, %v2621
      %v2749 = vmul.f32 %v2124, %v2625
      %v2750 = vmul.f32 %v2124, %v2629
      %v2751 = vmul.f32 %v2124, %v2633
      %v2752 = vmul.f32 %v2124, %v2637
      %v2753 = vmul.f32 %v2124, %v2641
      %v2754 = vmul.f32 %v2124, %v2645
      %v2755 = vmul.f32 %v2124, %v2649
      %v2756 = vmul.f32 %v2124, %v2653
      %v2757 = vmul.f32 %v2124, %v2657
      %v2758 = vmul.f32 %v2124, %v2661
      %v2759 = vmul.f32 %v2124, %v2665
      %v2760 = vmul.f32 %v2124, %v2669
      %v2761 = vmul.f32 %v2124, %v2673
      %v2762 = vmul.f32 %v2124, %v2677
      %v2763 = vmul.f32 %v2124, %v2681
      %v2764 = vmul.f32 %v2124, %v2685
      %v2765 = vmul.f32 %v2124, %v2689
      %v2766 = vmul.f32 %v2124, %v2693
      %v2767 = vmul.f32 %v2124, %v2697
      %v2768 = vmul.f32 %v2124, %v2701
      %v2769 = vmul.f32 %v2124, %v2705
      %v2770 = vmul.f32 %v2128, %v2453
      %v2771 = vmul.f32 %v2128, %v2457
      %v2772 = vmul.f32 %v2128, %v2461
      %v2773 = vmul.f32 %v2128, %v2465
      %v2774 = vmul.f32 %v2128, %v2469
      %v2775 = vmul.f32 %v2128, %v2473
      %v2776 = vmul.f32 %v2128, %v2477
      %v2777 = vmul.f32 %v2128, %v2481
      %v2778 = vmul.f32 %v2128, %v2485
      %v2779 = vmul.f32 %v2128, %v2489
      %v2780 = vmul.f32 %v2128, %v2493
      %v2781 = vmul.f32 %v2128, %v2497
      %v2782 = vmul.f32 %v2128, %v2501
      %v2783 = vmul.f32 %v2128, %v2505
      %v2784 = vmul.f32 %v2128, %v2509
      %v2785 = vmul.f32 %v2128, %v2513
      %v2786 = vmul.f32 %v2128, %v2517
      %v2787 = vmul.f32 %v2128, %v2521
      %v2788 = vmul.f32 %v2128, %v2525
      %v2789 = vmul.f32 %v2128, %v2529
      %v2790 = vmul.f32 %v2128, %v2533
      %v2791 = vmul.f32 %v2128, %v2537
      %v2792 = vmul.f32 %v2128, %v2541
      %v2793 = vmul.f32 %v2128, %v2545
      %v2794 = vmul.f32 %v2128, %v2549
      %v2795 = vmul.f32 %v2128, %v2553
      %v2796 = vmul.f32 %v2128, %v2557
      %v2797 = vmul.f32 %v2128, %v2561
      %v2798 = vmul.f32 %v2128, %v2565
      %v2799 = vmul.f32 %v2128, %v2569
      %v2800 = vmul.f32 %v2128, %v2573
      %v2801 = vmul.f32 %v2128, %v2577
      %v2802 = vmul.f32 %v2128, %v2581
      %v2803 = vmul.f32 %v2128, %v2585
      %v2804 = vmul.f32 %v2128, %v2589
      %v2805 = vmul.f32 %v2128, %v2593
      %v2806 = vmul.f32 %v2128, %v2597
      %v2807 = vmul.f32 %v2128, %v2601
      %v2808 = vmul.f32 %v2128, %v2605
      %v2809 = vmul.f32 %v2128, %v2609
      %v2810 = vmul.f32 %v2128, %v2613
      %v2811 = vmul.f32 %v2128, %v2617
      %v2812 = vmul.f32 %v2128, %v2621
      %v2813 = vmul.f32 %v2128, %v2625
      %v2814 = vmul.f32 %v2128, %v2629
      %v2815 = vmul.f32 %v2128, %v2633
      %v2816 = vmul.f32 %v2128, %v2637
      %v2817 = vmul.f32 %v2128, %v2641
      %v2818 = vmul.f32 %v2128, %v2645
      %v2819 = vmul.f32 %v2128, %v2649
      %v2820 = vmul.f32 %v2128, %v2653
      %v2821 = vmul.f32 %v2128, %v2657
      %v2822 = vmul.f32 %v2128, %v2661
      %v2823 = vmul.f32 %v2128, %v2665
      %v2824 = vmul.f32 %v2128, %v2669
      %v2825 = vmul.f32 %v2128, %v2673
      %v2826 = vmul.f32 %v2128, %v2677
      %v2827 = vmul.f32 %v2128, %v2681
      %v2828 = vmul.f32 %v2128, %v2685
      %v2829 = vmul.f32 %v2128, %v2689
      %v2830 = vmul.f32 %v2128, %v2693
      %v2831 = vmul.f32 %v2128, %v2697
      %v2832 = vmul.f32 %v2128, %v2701
      %v2833 = vmul.f32 %v2128, %v2705
      %v2834 = vadd.f32 %v1994, %v2706
      %v2835 = vadd.f32 %v1995, %v2707
      %v2836 = vadd.f32 %v1996, %v2708
      %v2837 = vadd.f32 %v1997, %v2709
      %v2838 = vadd.f32 %v1998, %v2710
      %v2839 = vadd.f32 %v1999, %v2711
      %v2840 = vadd.f32 %v2000, %v2712
      %v2841 = vadd.f32 %v2001, %v2713
      %v2842 = vadd.f32 %v2002, %v2714
      %v2843 = vadd.f32 %v2003, %v2715
      %v2844 = vadd.f32 %v2004, %v2716
      %v2845 = vadd.f32 %v2005, %v2717
      %v2846 = vadd.f32 %v2006, %v2718
      %v2847 = vadd.f32 %v2007, %v2719
      %v2848 = vadd.f32 %v2008, %v2720
      %v2849 = vadd.f32 %v2009, %v2721
      %v2850 = vadd.f32 %v2010, %v2722
      %v2851 = vadd.f32 %v2011, %v2723
      %v2852 = vadd.f32 %v2012, %v2724
      %v2853 = vadd.f32 %v2013, %v2725
      %v2854 = vadd.f32 %v2014, %v2726
      %v2855 = vadd.f32 %v2015, %v2727
      %v2856 = vadd.f32 %v2016, %v2728
      %v2857 = vadd.f32 %v2017, %v2729
      %v2858 = vadd.f32 %v2018, %v2730
      %v2859 = vadd.f32 %v2019, %v2731
      %v2860 = vadd.f32 %v2020, %v2732
      %v2861 = vadd.f32 %v2021, %v2733
      %v2862 = vadd.f32 %v2022, %v2734
      %v2863 = vadd.f32 %v2023, %v2735
      %v2864 = vadd.f32 %v2024, %v2736
      %v2865 = vadd.f32 %v2025, %v2737
      %v2866 = vadd.f32 %v2026, %v2738
      %v2867 = vadd.f32 %v2027, %v2739
      %v2868 = vadd.f32 %v2028, %v2740
      %v2869 = vadd.f32 %v2029, %v2741
      %v2870 = vadd.f32 %v2030, %v2742
      %v2871 = vadd.f32 %v2031, %v2743
      %v2872 = vadd.f32 %v2032, %v2744
      %v2873 = vadd.f32 %v2033, %v2745
      %v2874 = vadd.f32 %v2034, %v2746
      %v2875 = vadd.f32 %v2035, %v2747
      %v2876 = vadd.f32 %v2036, %v2748
      %v2877 = vadd.f32 %v2037, %v2749
      %v2878 = vadd.f32 %v2038, %v2750
      %v2879 = vadd.f32 %v2039, %v2751
      %v2880 = vadd.f32 %v2040, %v2752
      %v2881 = vadd.f32 %v2041, %v2753
      %v2882 = vadd.f32 %v2042, %v2754
      %v2883 = vadd.f32 %v2043, %v2755
      %v2884 = vadd.f32 %v2044, %v2756
      %v2885 = vadd.f32 %v2045, %v2757
      %v2886 = vadd.f32 %v2046, %v2758
      %v2887 = vadd.f32 %v2047, %v2759
      %v2888 = vadd.f32 %v2048, %v2760
      %v2889 = vadd.f32 %v2049, %v2761
      %v2890 = vadd.f32 %v2050, %v2762
      %v2891 = vadd.f32 %v2051, %v2763
      %v2892 = vadd.f32 %v2052, %v2764
      %v2893 = vadd.f32 %v2053, %v2765
      %v2894 = vadd.f32 %v2054, %v2766
      %v2895 = vadd.f32 %v2055, %v2767
      %v2896 = vadd.f32 %v2056, %v2768
      %v2897 = vadd.f32 %v2057, %v2769
      %v2898 = vadd.f32 %v2058, %v2770
      %v2899 = vadd.f32 %v2059, %v2771
      %v2900 = vadd.f32 %v2060, %v2772
      %v2901 = vadd.f32 %v2061, %v2773
      %v2902 = vadd.f32 %v2062, %v2774
      %v2903 = vadd.f32 %v2063, %v2775
      %v2904 = vadd.f32 %v2064, %v2776
      %v2905 = vadd.f32 %v2065, %v2777
      %v2906 = vadd.f32 %v2066, %v2778
      %v2907 = vadd.f32 %v2067, %v2779
      %v2908 = vadd.f32 %v2068, %v2780
      %v2909 = vadd.f32 %v2069, %v2781
      %v2910 = vadd.f32 %v2070, %v2782
      %v2911 = vadd.f32 %v2071, %v2783
      %v2912 = vadd.f32 %v2072, %v2784
      %v2913 = vadd.f32 %v2073, %v2785
      %v2914 = vadd.f32 %v2074, %v2786
      %v2915 = vadd.f32 %v2075, %v2787
      %v2916 = vadd.f32 %v2076, %v2788
      %v2917 = vadd.f32 %v2077, %v2789
      %v2918 = vadd.f32 %v2078, %v2790
      %v2919 = vadd.f32 %v2079, %v2791
      %v2920 = vadd.f32 %v2080, %v2792
      %v2921 = vadd.f32 %v2081, %v2793
      %v2922 = vadd.f32 %v2082, %v2794
      %v2923 = vadd.f32 %v2083, %v2795
      %v2924 = vadd.f32 %v2084, %v2796
      %v2925 = vadd.f32 %v2085, %v2797
      %v2926 = vadd.f32 %v2086, %v2798
      %v2927 = vadd.f32 %v2087, %v2799
      %v2928 = vadd.f32 %v2088, %v2800
      %v2929 = vadd.f32 %v2089, %v2801
      %v2930 = vadd.f32 %v2090, %v2802
      %v2931 = vadd.f32 %v2091, %v2803
      %v2932 = vadd.f32 %v2092, %v2804
      %v2933 = vadd.f32 %v2093, %v2805
      %v2934 = vadd.f32 %v2094, %v2806
      %v2935 = vadd.f32 %v2095, %v2807
      %v2936 = vadd.f32 %v2096, %v2808
      %v2937 = vadd.f32 %v2097, %v2809
      %v2938 = vadd.f32 %v2098, %v2810
      %v2939 = vadd.f32 %v2099, %v2811
      %v2940 = vadd.f32 %v2100, %v2812
      %v2941 = vadd.f32 %v2101, %v2813
      %v2942 = vadd.f32 %v2102, %v2814
      %v2943 = vadd.f32 %v2103, %v2815
      %v2944 = vadd.f32 %v2104, %v2816
      %v2945 = vadd.f32 %v2105, %v2817
      %v2946 = vadd.f32 %v2106, %v2818
      %v2947 = vadd.f32 %v2107, %v2819
      %v2948 = vadd.f32 %v2108, %v2820
      %v2949 = vadd.f32 %v2109, %v2821
      %v2950 = vadd.f32 %v2110, %v2822
      %v2951 = vadd.f32 %v2111, %v2823
      %v2952 = vadd.f32 %v2112, %v2824
      %v2953 = vadd.f32 %v2113, %v2825
      %v2954 = vadd.f32 %v2114, %v2826
      %v2955 = vadd.f32 %v2115, %v2827
      %v2956 = vadd.f32 %v2116, %v2828
      %v2957 = vadd.f32 %v2117, %v2829
      %v2958 = vadd.f32 %v2118, %v2830
      %v2959 = vadd.f32 %v2119, %v2831
      %v2960 = vadd.f32 %v2120, %v2832
      %v2961 = vadd.f32 %v2121, %v2833
      %vm2962 = vcmp.ge.f32.partialorder %v2834, 0.0
      %vm2963 = vcmp.ge.f32.partialorder %v2835, 0.0
      %vm2964 = vcmp.ge.f32.partialorder %v2836, 0.0
      %vm2965 = vcmp.ge.f32.partialorder %v2837, 0.0
      %vm2966 = vcmp.ge.f32.partialorder %v2838, 0.0
      %vm2967 = vcmp.ge.f32.partialorder %v2839, 0.0
      %vm2968 = vcmp.ge.f32.partialorder %v2840, 0.0
      %vm2969 = vcmp.ge.f32.partialorder %v2841, 0.0
      %vm2970 = vcmp.ge.f32.partialorder %v2842, 0.0
      %vm2971 = vcmp.ge.f32.partialorder %v2843, 0.0
      %vm2972 = vcmp.ge.f32.partialorder %v2844, 0.0
      %vm2973 = vcmp.ge.f32.partialorder %v2845, 0.0
      %vm2974 = vcmp.ge.f32.partialorder %v2846, 0.0
      %vm2975 = vcmp.ge.f32.partialorder %v2847, 0.0
      %vm2976 = vcmp.ge.f32.partialorder %v2848, 0.0
      %vm2977 = vcmp.ge.f32.partialorder %v2849, 0.0
      %vm2978 = vcmp.ge.f32.partialorder %v2850, 0.0
      %vm2979 = vcmp.ge.f32.partialorder %v2851, 0.0
      %vm2980 = vcmp.ge.f32.partialorder %v2852, 0.0
      %vm2981 = vcmp.ge.f32.partialorder %v2853, 0.0
      %vm2982 = vcmp.ge.f32.partialorder %v2854, 0.0
      %vm2983 = vcmp.ge.f32.partialorder %v2855, 0.0
      %vm2984 = vcmp.ge.f32.partialorder %v2856, 0.0
      %vm2985 = vcmp.ge.f32.partialorder %v2857, 0.0
      %vm2986 = vcmp.ge.f32.partialorder %v2858, 0.0
      %vm2987 = vcmp.ge.f32.partialorder %v2859, 0.0
      %vm2988 = vcmp.ge.f32.partialorder %v2860, 0.0
      %vm2989 = vcmp.ge.f32.partialorder %v2861, 0.0
      %vm2990 = vcmp.ge.f32.partialorder %v2862, 0.0
      %vm2991 = vcmp.ge.f32.partialorder %v2863, 0.0
      %vm2992 = vcmp.ge.f32.partialorder %v2864, 0.0
      %vm2993 = vcmp.ge.f32.partialorder %v2865, 0.0
      %vm2994 = vcmp.ge.f32.partialorder %v2866, 0.0
      %vm2995 = vcmp.ge.f32.partialorder %v2867, 0.0
      %vm2996 = vcmp.ge.f32.partialorder %v2868, 0.0
      %vm2997 = vcmp.ge.f32.partialorder %v2869, 0.0
      %vm2998 = vcmp.ge.f32.partialorder %v2870, 0.0
      %vm2999 = vcmp.ge.f32.partialorder %v2871, 0.0
      %vm3000 = vcmp.ge.f32.partialorder %v2872, 0.0
      %vm3001 = vcmp.ge.f32.partialorder %v2873, 0.0
      %vm3002 = vcmp.ge.f32.partialorder %v2874, 0.0
      %vm3003 = vcmp.ge.f32.partialorder %v2875, 0.0
      %vm3004 = vcmp.ge.f32.partialorder %v2876, 0.0
      %vm3005 = vcmp.ge.f32.partialorder %v2877, 0.0
      %vm3006 = vcmp.ge.f32.partialorder %v2878, 0.0
      %vm3007 = vcmp.ge.f32.partialorder %v2879, 0.0
      %vm3008 = vcmp.ge.f32.partialorder %v2880, 0.0
      %vm3009 = vcmp.ge.f32.partialorder %v2881, 0.0
      %vm3010 = vcmp.ge.f32.partialorder %v2882, 0.0
      %vm3011 = vcmp.ge.f32.partialorder %v2883, 0.0
      %vm3012 = vcmp.ge.f32.partialorder %v2884, 0.0
      %vm3013 = vcmp.ge.f32.partialorder %v2885, 0.0
      %vm3014 = vcmp.ge.f32.partialorder %v2886, 0.0
      %vm3015 = vcmp.ge.f32.partialorder %v2887, 0.0
      %vm3016 = vcmp.ge.f32.partialorder %v2888, 0.0
      %vm3017 = vcmp.ge.f32.partialorder %v2889, 0.0
      %vm3018 = vcmp.ge.f32.partialorder %v2890, 0.0
      %vm3019 = vcmp.ge.f32.partialorder %v2891, 0.0
      %vm3020 = vcmp.ge.f32.partialorder %v2892, 0.0
      %vm3021 = vcmp.ge.f32.partialorder %v2893, 0.0
      %vm3022 = vcmp.ge.f32.partialorder %v2894, 0.0
      %vm3023 = vcmp.ge.f32.partialorder %v2895, 0.0
      %vm3024 = vcmp.ge.f32.partialorder %v2896, 0.0
      %vm3025 = vcmp.ge.f32.partialorder %v2897, 0.0
      %vm3026 = vcmp.ge.f32.partialorder %v2898, 0.0
      %vm3027 = vcmp.ge.f32.partialorder %v2899, 0.0
      %vm3028 = vcmp.ge.f32.partialorder %v2900, 0.0
      %vm3029 = vcmp.ge.f32.partialorder %v2901, 0.0
      %vm3030 = vcmp.ge.f32.partialorder %v2902, 0.0
      %vm3031 = vcmp.ge.f32.partialorder %v2903, 0.0
      %vm3032 = vcmp.ge.f32.partialorder %v2904, 0.0
      %vm3033 = vcmp.ge.f32.partialorder %v2905, 0.0
      %vm3034 = vcmp.ge.f32.partialorder %v2906, 0.0
      %vm3035 = vcmp.ge.f32.partialorder %v2907, 0.0
      %vm3036 = vcmp.ge.f32.partialorder %v2908, 0.0
      %vm3037 = vcmp.ge.f32.partialorder %v2909, 0.0
      %vm3038 = vcmp.ge.f32.partialorder %v2910, 0.0
      %vm3039 = vcmp.ge.f32.partialorder %v2911, 0.0
      %vm3040 = vcmp.ge.f32.partialorder %v2912, 0.0
      %vm3041 = vcmp.ge.f32.partialorder %v2913, 0.0
      %vm3042 = vcmp.ge.f32.partialorder %v2914, 0.0
      %vm3043 = vcmp.ge.f32.partialorder %v2915, 0.0
      %vm3044 = vcmp.ge.f32.partialorder %v2916, 0.0
      %vm3045 = vcmp.ge.f32.partialorder %v2917, 0.0
      %vm3046 = vcmp.ge.f32.partialorder %v2918, 0.0
      %vm3047 = vcmp.ge.f32.partialorder %v2919, 0.0
      %vm3048 = vcmp.ge.f32.partialorder %v2920, 0.0
      %vm3049 = vcmp.ge.f32.partialorder %v2921, 0.0
      %vm3050 = vcmp.ge.f32.partialorder %v2922, 0.0
      %vm3051 = vcmp.ge.f32.partialorder %v2923, 0.0
      %vm3052 = vcmp.ge.f32.partialorder %v2924, 0.0
      %vm3053 = vcmp.ge.f32.partialorder %v2925, 0.0
      %vm3054 = vcmp.ge.f32.partialorder %v2926, 0.0
      %vm3055 = vcmp.ge.f32.partialorder %v2927, 0.0
      %vm3056 = vcmp.ge.f32.partialorder %v2928, 0.0
      %vm3057 = vcmp.ge.f32.partialorder %v2929, 0.0
      %vm3058 = vcmp.ge.f32.partialorder %v2930, 0.0
      %vm3059 = vcmp.ge.f32.partialorder %v2931, 0.0
      %vm3060 = vcmp.ge.f32.partialorder %v2932, 0.0
      %vm3061 = vcmp.ge.f32.partialorder %v2933, 0.0
      %vm3062 = vcmp.ge.f32.partialorder %v2934, 0.0
      %vm3063 = vcmp.ge.f32.partialorder %v2935, 0.0
      %vm3064 = vcmp.ge.f32.partialorder %v2936, 0.0
      %vm3065 = vcmp.ge.f32.partialorder %v2937, 0.0
      %vm3066 = vcmp.ge.f32.partialorder %v2938, 0.0
      %vm3067 = vcmp.ge.f32.partialorder %v2939, 0.0
      %vm3068 = vcmp.ge.f32.partialorder %v2940, 0.0
      %vm3069 = vcmp.ge.f32.partialorder %v2941, 0.0
      %vm3070 = vcmp.ge.f32.partialorder %v2942, 0.0
      %vm3071 = vcmp.ge.f32.partialorder %v2943, 0.0
      %vm3072 = vcmp.ge.f32.partialorder %v2944, 0.0
      %vm3073 = vcmp.ge.f32.partialorder %v2945, 0.0
      %vm3074 = vcmp.ge.f32.partialorder %v2946, 0.0
      %vm3075 = vcmp.ge.f32.partialorder %v2947, 0.0
      %vm3076 = vcmp.ge.f32.partialorder %v2948, 0.0
      %vm3077 = vcmp.ge.f32.partialorder %v2949, 0.0
      %vm3078 = vcmp.ge.f32.partialorder %v2950, 0.0
      %vm3079 = vcmp.ge.f32.partialorder %v2951, 0.0
      %vm3080 = vcmp.ge.f32.partialorder %v2952, 0.0
      %vm3081 = vcmp.ge.f32.partialorder %v2953, 0.0
      %vm3082 = vcmp.ge.f32.partialorder %v2954, 0.0
      %vm3083 = vcmp.ge.f32.partialorder %v2955, 0.0
      %vm3084 = vcmp.ge.f32.partialorder %v2956, 0.0
      %vm3085 = vcmp.ge.f32.partialorder %v2957, 0.0
      %vm3086 = vcmp.ge.f32.partialorder %v2958, 0.0
      %vm3087 = vcmp.ge.f32.partialorder %v2959, 0.0
      %vm3088 = vcmp.ge.f32.partialorder %v2960, 0.0
      %vm3089 = vcmp.ge.f32.partialorder %v2961, 0.0
      %v3090 = vmul.f32 %v2834, 0.2
      %v3091 = vmul.f32 %v2835, 0.2
      %v3092 = vmul.f32 %v2836, 0.2
      %v3093 = vmul.f32 %v2837, 0.2
      %v3094 = vmul.f32 %v2838, 0.2
      %v3095 = vmul.f32 %v2839, 0.2
      %v3096 = vmul.f32 %v2840, 0.2
      %v3097 = vmul.f32 %v2841, 0.2
      %v3098 = vmul.f32 %v2842, 0.2
      %v3099 = vmul.f32 %v2843, 0.2
      %v3100 = vmul.f32 %v2844, 0.2
      %v3101 = vmul.f32 %v2845, 0.2
      %v3102 = vmul.f32 %v2846, 0.2
      %v3103 = vmul.f32 %v2847, 0.2
      %v3104 = vmul.f32 %v2848, 0.2
      %v3105 = vmul.f32 %v2849, 0.2
      %v3106 = vmul.f32 %v2850, 0.2
      %v3107 = vmul.f32 %v2851, 0.2
      %v3108 = vmul.f32 %v2852, 0.2
      %v3109 = vmul.f32 %v2853, 0.2
      %v3110 = vmul.f32 %v2854, 0.2
      %v3111 = vmul.f32 %v2855, 0.2
      %v3112 = vmul.f32 %v2856, 0.2
      %v3113 = vmul.f32 %v2857, 0.2
      %v3114 = vmul.f32 %v2858, 0.2
      %v3115 = vmul.f32 %v2859, 0.2
      %v3116 = vmul.f32 %v2860, 0.2
      %v3117 = vmul.f32 %v2861, 0.2
      %v3118 = vmul.f32 %v2862, 0.2
      %v3119 = vmul.f32 %v2863, 0.2
      %v3120 = vmul.f32 %v2864, 0.2
      %v3121 = vmul.f32 %v2865, 0.2
      %v3122 = vmul.f32 %v2866, 0.2
      %v3123 = vmul.f32 %v2867, 0.2
      %v3124 = vmul.f32 %v2868, 0.2
      %v3125 = vmul.f32 %v2869, 0.2
      %v3126 = vmul.f32 %v2870, 0.2
      %v3127 = vmul.f32 %v2871, 0.2
      %v3128 = vmul.f32 %v2872, 0.2
      %v3129 = vmul.f32 %v2873, 0.2
      %v3130 = vmul.f32 %v2874, 0.2
      %v3131 = vmul.f32 %v2875, 0.2
      %v3132 = vmul.f32 %v2876, 0.2
      %v3133 = vmul.f32 %v2877, 0.2
      %v3134 = vmul.f32 %v2878, 0.2
      %v3135 = vmul.f32 %v2879, 0.2
      %v3136 = vmul.f32 %v2880, 0.2
      %v3137 = vmul.f32 %v2881, 0.2
      %v3138 = vmul.f32 %v2882, 0.2
      %v3139 = vmul.f32 %v2883, 0.2
      %v3140 = vmul.f32 %v2884, 0.2
      %v3141 = vmul.f32 %v2885, 0.2
      %v3142 = vmul.f32 %v2886, 0.2
      %v3143 = vmul.f32 %v2887, 0.2
      %v3144 = vmul.f32 %v2888, 0.2
      %v3145 = vmul.f32 %v2889, 0.2
      %v3146 = vmul.f32 %v2890, 0.2
      %v3147 = vmul.f32 %v2891, 0.2
      %v3148 = vmul.f32 %v2892, 0.2
      %v3149 = vmul.f32 %v2893, 0.2
      %v3150 = vmul.f32 %v2894, 0.2
      %v3151 = vmul.f32 %v2895, 0.2
      %v3152 = vmul.f32 %v2896, 0.2
      %v3153 = vmul.f32 %v2897, 0.2
      %v3154 = vmul.f32 %v2898, 0.2
      %v3155 = vmul.f32 %v2899, 0.2
      %v3156 = vmul.f32 %v2900, 0.2
      %v3157 = vmul.f32 %v2901, 0.2
      %v3158 = vmul.f32 %v2902, 0.2
      %v3159 = vmul.f32 %v2903, 0.2
      %v3160 = vmul.f32 %v2904, 0.2
      %v3161 = vmul.f32 %v2905, 0.2
      %v3162 = vmul.f32 %v2906, 0.2
      %v3163 = vmul.f32 %v2907, 0.2
      %v3164 = vmul.f32 %v2908, 0.2
      %v3165 = vmul.f32 %v2909, 0.2
      %v3166 = vmul.f32 %v2910, 0.2
      %v3167 = vmul.f32 %v2911, 0.2
      %v3168 = vmul.f32 %v2912, 0.2
      %v3169 = vmul.f32 %v2913, 0.2
      %v3170 = vmul.f32 %v2914, 0.2
      %v3171 = vmul.f32 %v2915, 0.2
      %v3172 = vmul.f32 %v2916, 0.2
      %v3173 = vmul.f32 %v2917, 0.2
      %v3174 = vmul.f32 %v2918, 0.2
      %v3175 = vmul.f32 %v2919, 0.2
      %v3176 = vmul.f32 %v2920, 0.2
      %v3177 = vmul.f32 %v2921, 0.2
      %v3178 = vmul.f32 %v2922, 0.2
      %v3179 = vmul.f32 %v2923, 0.2
      %v3180 = vmul.f32 %v2924, 0.2
      %v3181 = vmul.f32 %v2925, 0.2
      %v3182 = vmul.f32 %v2926, 0.2
      %v3183 = vmul.f32 %v2927, 0.2
      %v3184 = vmul.f32 %v2928, 0.2
      %v3185 = vmul.f32 %v2929, 0.2
      %v3186 = vmul.f32 %v2930, 0.2
      %v3187 = vmul.f32 %v2931, 0.2
      %v3188 = vmul.f32 %v2932, 0.2
      %v3189 = vmul.f32 %v2933, 0.2
      %v3190 = vmul.f32 %v2934, 0.2
      %v3191 = vmul.f32 %v2935, 0.2
      %v3192 = vmul.f32 %v2936, 0.2
      %v3193 = vmul.f32 %v2937, 0.2
      %v3194 = vmul.f32 %v2938, 0.2
      %v3195 = vmul.f32 %v2939, 0.2
      %v3196 = vmul.f32 %v2940, 0.2
      %v3197 = vmul.f32 %v2941, 0.2
      %v3198 = vmul.f32 %v2942, 0.2
      %v3199 = vmul.f32 %v2943, 0.2
      %v3200 = vmul.f32 %v2944, 0.2
      %v3201 = vmul.f32 %v2945, 0.2
      %v3202 = vmul.f32 %v2946, 0.2
      %v3203 = vmul.f32 %v2947, 0.2
      %v3204 = vmul.f32 %v2948, 0.2
      %v3205 = vmul.f32 %v2949, 0.2
      %v3206 = vmul.f32 %v2950, 0.2
      %v3207 = vmul.f32 %v2951, 0.2
      %v3208 = vmul.f32 %v2952, 0.2
      %v3209 = vmul.f32 %v2953, 0.2
      %v3210 = vmul.f32 %v2954, 0.2
      %v3211 = vmul.f32 %v2955, 0.2
      %v3212 = vmul.f32 %v2956, 0.2
      %v3213 = vmul.f32 %v2957, 0.2
      %v3214 = vmul.f32 %v2958, 0.2
      %v3215 = vmul.f32 %v2959, 0.2
      %v3216 = vmul.f32 %v2960, 0.2
      %v3217 = vmul.f32 %v2961, 0.2
      %v3218 = vsel %vm2962, %v2834, %v3090
      %v3219 = vsel %vm2963, %v2835, %v3091
      %v3220 = vsel %vm2964, %v2836, %v3092
      %v3221 = vsel %vm2965, %v2837, %v3093
      %v3222 = vsel %vm2966, %v2838, %v3094
      %v3223 = vsel %vm2967, %v2839, %v3095
      %v3224 = vsel %vm2968, %v2840, %v3096
      %v3225 = vsel %vm2969, %v2841, %v3097
      %v3226 = vsel %vm2970, %v2842, %v3098
      %v3227 = vsel %vm2971, %v2843, %v3099
      %v3228 = vsel %vm2972, %v2844, %v3100
      %v3229 = vsel %vm2973, %v2845, %v3101
      %v3230 = vsel %vm2974, %v2846, %v3102
      %v3231 = vsel %vm2975, %v2847, %v3103
      %v3232 = vsel %vm2976, %v2848, %v3104
      %v3233 = vsel %vm2977, %v2849, %v3105
      %v3234 = vsel %vm2978, %v2850, %v3106
      %v3235 = vsel %vm2979, %v2851, %v3107
      %v3236 = vsel %vm2980, %v2852, %v3108
      %v3237 = vsel %vm2981, %v2853, %v3109
      %v3238 = vsel %vm2982, %v2854, %v3110
      %v3239 = vsel %vm2983, %v2855, %v3111
      %v3240 = vsel %vm2984, %v2856, %v3112
      %v3241 = vsel %vm2985, %v2857, %v3113
      %v3242 = vsel %vm2986, %v2858, %v3114
      %v3243 = vsel %vm2987, %v2859, %v3115
      %v3244 = vsel %vm2988, %v2860, %v3116
      %v3245 = vsel %vm2989, %v2861, %v3117
      %v3246 = vsel %vm2990, %v2862, %v3118
      %v3247 = vsel %vm2991, %v2863, %v3119
      %v3248 = vsel %vm2992, %v2864, %v3120
      %v3249 = vsel %vm2993, %v2865, %v3121
      %v3250 = vsel %vm2994, %v2866, %v3122
      %v3251 = vsel %vm2995, %v2867, %v3123
      %v3252 = vsel %vm2996, %v2868, %v3124
      %v3253 = vsel %vm2997, %v2869, %v3125
      %v3254 = vsel %vm2998, %v2870, %v3126
      %v3255 = vsel %vm2999, %v2871, %v3127
      %v3256 = vsel %vm3000, %v2872, %v3128
      %v3257 = vsel %vm3001, %v2873, %v3129
      %v3258 = vsel %vm3002, %v2874, %v3130
      %v3259 = vsel %vm3003, %v2875, %v3131
      %v3260 = vsel %vm3004, %v2876, %v3132
      %v3261 = vsel %vm3005, %v2877, %v3133
      %v3262 = vsel %vm3006, %v2878, %v3134
      %v3263 = vsel %vm3007, %v2879, %v3135
      %v3264 = vsel %vm3008, %v2880, %v3136
      %v3265 = vsel %vm3009, %v2881, %v3137
      %v3266 = vsel %vm3010, %v2882, %v3138
      %v3267 = vsel %vm3011, %v2883, %v3139
      %v3268 = vsel %vm3012, %v2884, %v3140
      %v3269 = vsel %vm3013, %v2885, %v3141
      %v3270 = vsel %vm3014, %v2886, %v3142
      %v3271 = vsel %vm3015, %v2887, %v3143
      %v3272 = vsel %vm3016, %v2888, %v3144
      %v3273 = vsel %vm3017, %v2889, %v3145
      %v3274 = vsel %vm3018, %v2890, %v3146
      %v3275 = vsel %vm3019, %v2891, %v3147
      %v3276 = vsel %vm3020, %v2892, %v3148
      %v3277 = vsel %vm3021, %v2893, %v3149
      %v3278 = vsel %vm3022, %v2894, %v3150
      %v3279 = vsel %vm3023, %v2895, %v3151
      %v3280 = vsel %vm3024, %v2896, %v3152
      %v3281 = vsel %vm3025, %v2897, %v3153
      %v3282 = vsel %vm3026, %v2898, %v3154
      %v3283 = vsel %vm3027, %v2899, %v3155
      %v3284 = vsel %vm3028, %v2900, %v3156
      %v3285 = vsel %vm3029, %v2901, %v3157
      %v3286 = vsel %vm3030, %v2902, %v3158
      %v3287 = vsel %vm3031, %v2903, %v3159
      %v3288 = vsel %vm3032, %v2904, %v3160
      %v3289 = vsel %vm3033, %v2905, %v3161
      %v3290 = vsel %vm3034, %v2906, %v3162
      %v3291 = vsel %vm3035, %v2907, %v3163
      %v3292 = vsel %vm3036, %v2908, %v3164
      %v3293 = vsel %vm3037, %v2909, %v3165
      %v3294 = vsel %vm3038, %v2910, %v3166
      %v3295 = vsel %vm3039, %v2911, %v3167
      %v3296 = vsel %vm3040, %v2912, %v3168
      %v3297 = vsel %vm3041, %v2913, %v3169
      %v3298 = vsel %vm3042, %v2914, %v3170
      %v3299 = vsel %vm3043, %v2915, %v3171
      %v3300 = vsel %vm3044, %v2916, %v3172
      %v3301 = vsel %vm3045, %v2917, %v3173
      %v3302 = vsel %vm3046, %v2918, %v3174
      %v3303 = vsel %vm3047, %v2919, %v3175
      %v3304 = vsel %vm3048, %v2920, %v3176
      %v3305 = vsel %vm3049, %v2921, %v3177
      %v3306 = vsel %vm3050, %v2922, %v3178
      %v3307 = vsel %vm3051, %v2923, %v3179
      %v3308 = vsel %vm3052, %v2924, %v3180
      %v3309 = vsel %vm3053, %v2925, %v3181
      %v3310 = vsel %vm3054, %v2926, %v3182
      %v3311 = vsel %vm3055, %v2927, %v3183
      %v3312 = vsel %vm3056, %v2928, %v3184
      %v3313 = vsel %vm3057, %v2929, %v3185
      %v3314 = vsel %vm3058, %v2930, %v3186
      %v3315 = vsel %vm3059, %v2931, %v3187
      %v3316 = vsel %vm3060, %v2932, %v3188
      %v3317 = vsel %vm3061, %v2933, %v3189
      %v3318 = vsel %vm3062, %v2934, %v3190
      %v3319 = vsel %vm3063, %v2935, %v3191
      %v3320 = vsel %vm3064, %v2936, %v3192
      %v3321 = vsel %vm3065, %v2937, %v3193
      %v3322 = vsel %vm3066, %v2938, %v3194
      %v3323 = vsel %vm3067, %v2939, %v3195
      %v3324 = vsel %vm3068, %v2940, %v3196
      %v3325 = vsel %vm3069, %v2941, %v3197
      %v3326 = vsel %vm3070, %v2942, %v3198
      %v3327 = vsel %vm3071, %v2943, %v3199
      %v3328 = vsel %vm3072, %v2944, %v3200
      %v3329 = vsel %vm3073, %v2945, %v3201
      %v3330 = vsel %vm3074, %v2946, %v3202
      %v3331 = vsel %vm3075, %v2947, %v3203
      %v3332 = vsel %vm3076, %v2948, %v3204
      %v3333 = vsel %vm3077, %v2949, %v3205
      %v3334 = vsel %vm3078, %v2950, %v3206
      %v3335 = vsel %vm3079, %v2951, %v3207
      %v3336 = vsel %vm3080, %v2952, %v3208
      %v3337 = vsel %vm3081, %v2953, %v3209
      %v3338 = vsel %vm3082, %v2954, %v3210
      %v3339 = vsel %vm3083, %v2955, %v3211
      %v3340 = vsel %vm3084, %v2956, %v3212
      %v3341 = vsel %vm3085, %v2957, %v3213
      %v3342 = vsel %vm3086, %v2958, %v3214
      %v3343 = vsel %vm3087, %v2959, %v3215
      %v3344 = vsel %vm3088, %v2960, %v3216
      %v3345 = vsel %vm3089, %v2961, %v3217
      %v3346 = vld [vmem:[#allocation2] sm:$0xff]
      %v3347 = vld [vmem:[#allocation2 + $0x8] sm:$0xff]
      %v3348 = vld [vmem:[#allocation2 + $0x10] sm:$0xff]
      %v3349 = vld [vmem:[#allocation2 + $0x18] sm:$0xff]
      %v3350 = vld [vmem:[#allocation2 + $0x20] sm:$0xff]
      %v3351 = vld [vmem:[#allocation2 + $0x28] sm:$0xff]
      %v3352 = vld [vmem:[#allocation2 + $0x30] sm:$0xff]
      %v3353 = vld [vmem:[#allocation2 + $0x38] sm:$0xff]
      %v3354 = vld [vmem:[#allocation2 + $0x40] sm:$0xff]
      %v3355 = vld [vmem:[#allocation2 + $0x48] sm:$0xff]
      %v3356 = vld [vmem:[#allocation2 + $0x50] sm:$0xff]
      %v3357 = vld [vmem:[#allocation2 + $0x58] sm:$0xff]
      %v3358 = vld [vmem:[#allocation2 + $0x60] sm:$0xff]
      %v3359 = vld [vmem:[#allocation2 + $0x68] sm:$0xff]
      %v3360 = vld [vmem:[#allocation2 + $0x70] sm:$0xff]
      %v3361 = vld [vmem:[#allocation2 + $0x78] sm:$0xff]
      %v3362 = vld [vmem:[#allocation2 + $0x80] sm:$0xff]
      %v3363 = vld [vmem:[#allocation2 + $0x88] sm:$0xff]
      %v3364 = vld [vmem:[#allocation2 + $0x90] sm:$0xff]
      %v3365 = vld [vmem:[#allocation2 + $0x98] sm:$0xff]
      %v3366 = vld [vmem:[#allocation2 + $0xa0] sm:$0xff]
      %v3367 = vld [vmem:[#allocation2 + $0xa8] sm:$0xff]
      %v3368 = vld [vmem:[#allocation2 + $0xb0] sm:$0xff]
      %v3369 = vld [vmem:[#allocation2 + $0xb8] sm:$0xff]
      %v3370 = vld [vmem:[#allocation2 + $0xc0] sm:$0xff]
      %v3371 = vld [vmem:[#allocation2 + $0xc8] sm:$0xff]
      %v3372 = vld [vmem:[#allocation2 + $0xd0] sm:$0xff]
      %v3373 = vld [vmem:[#allocation2 + $0xd8] sm:$0xff]
      %v3374 = vld [vmem:[#allocation2 + $0xe0] sm:$0xff]
      %v3375 = vld [vmem:[#allocation2 + $0xe8] sm:$0xff]
      %v3376 = vld [vmem:[#allocation2 + $0xf0] sm:$0xff]
      %v3377 = vld [vmem:[#allocation2 + $0xf8] sm:$0xff]
      %v3378 = vld [vmem:[#allocation2 + $0x100] sm:$0xff]
      %v3379 = vld [vmem:[#allocation2 + $0x108] sm:$0xff]
      %v3380 = vld [vmem:[#allocation2 + $0x110] sm:$0xff]
      %v3381 = vld [vmem:[#allocation2 + $0x118] sm:$0xff]
      %v3382 = vld [vmem:[#allocation2 + $0x120] sm:$0xff]
      %v3383 = vld [vmem:[#allocation2 + $0x128] sm:$0xff]
      %v3384 = vld [vmem:[#allocation2 + $0x130] sm:$0xff]
      %v3385 = vld [vmem:[#allocation2 + $0x138] sm:$0xff]
      %v3386 = vld [vmem:[#allocation2 + $0x140] sm:$0xff]
      %v3387 = vld [vmem:[#allocation2 + $0x148] sm:$0xff]
      %v3388 = vld [vmem:[#allocation2 + $0x150] sm:$0xff]
      %v3389 = vld [vmem:[#allocation2 + $0x158] sm:$0xff]
      %v3390 = vld [vmem:[#allocation2 + $0x160] sm:$0xff]
      %v3391 = vld [vmem:[#allocation2 + $0x168] sm:$0xff]
      %v3392 = vld [vmem:[#allocation2 + $0x170] sm:$0xff]
      %v3393 = vld [vmem:[#allocation2 + $0x178] sm:$0xff]
      %v3394 = vld [vmem:[#allocation2 + $0x180] sm:$0xff]
      %v3395 = vld [vmem:[#allocation2 + $0x188] sm:$0xff]
      %v3396 = vld [vmem:[#allocation2 + $0x190] sm:$0xff]
      %v3397 = vld [vmem:[#allocation2 + $0x198] sm:$0xff]
      %v3398 = vld [vmem:[#allocation2 + $0x1a0] sm:$0xff]
      %v3399 = vld [vmem:[#allocation2 + $0x1a8] sm:$0xff]
      %v3400 = vld [vmem:[#allocation2 + $0x1b0] sm:$0xff]
      %v3401 = vld [vmem:[#allocation2 + $0x1b8] sm:$0xff]
      %v3402 = vld [vmem:[#allocation2 + $0x1c0] sm:$0xff]
      %v3403 = vld [vmem:[#allocation2 + $0x1c8] sm:$0xff]
      %v3404 = vld [vmem:[#allocation2 + $0x1d0] sm:$0xff]
      %v3405 = vld [vmem:[#allocation2 + $0x1d8] sm:$0xff]
      %v3406 = vld [vmem:[#allocation2 + $0x1e0] sm:$0xff]
      %v3407 = vld [vmem:[#allocation2 + $0x1e8] sm:$0xff]
      %v3408 = vld [vmem:[#allocation2 + $0x1f0] sm:$0xff]
      %v3409 = vld [vmem:[#allocation2 + $0x1f8] sm:$0xff]
      %v3410 = vld [vmem:[#allocation2 + $0x200] sm:$0x1f]
      %v3411 = vld [vmem:[#allocation2 + $0x208] sm:$0x1f]
      %v3412 = vld [vmem:[#allocation2 + $0x210] sm:$0x1f]
      %v3413 = vld [vmem:[#allocation2 + $0x218] sm:$0x1f]
      %v3414 = vld [vmem:[#allocation2 + $0x220] sm:$0x1f]
      %v3415 = vld [vmem:[#allocation2 + $0x228] sm:$0x1f]
      %v3416 = vld [vmem:[#allocation2 + $0x230] sm:$0x1f]
      %v3417 = vld [vmem:[#allocation2 + $0x238] sm:$0x1f]
      %v3418 = vld [vmem:[#allocation2 + $0x240] sm:$0x1f]
      %v3419 = vld [vmem:[#allocation2 + $0x248] sm:$0x1f]
      %v3420 = vld [vmem:[#allocation2 + $0x250] sm:$0x1f]
      %v3421 = vld [vmem:[#allocation2 + $0x258] sm:$0x1f]
      %v3422 = vld [vmem:[#allocation2 + $0x260] sm:$0x1f]
      %v3423 = vld [vmem:[#allocation2 + $0x268] sm:$0x1f]
      %v3424 = vld [vmem:[#allocation2 + $0x270] sm:$0x1f]
      %v3425 = vld [vmem:[#allocation2 + $0x278] sm:$0x1f]
      %v3426 = vld [vmem:[#allocation2 + $0x280] sm:$0x1f]
      %v3427 = vld [vmem:[#allocation2 + $0x288] sm:$0x1f]
      %v3428 = vld [vmem:[#allocation2 + $0x290] sm:$0x1f]
      %v3429 = vld [vmem:[#allocation2 + $0x298] sm:$0x1f]
      %v3430 = vld [vmem:[#allocation2 + $0x2a0] sm:$0x1f]
      %v3431 = vld [vmem:[#allocation2 + $0x2a8] sm:$0x1f]
      %v3432 = vld [vmem:[#allocation2 + $0x2b0] sm:$0x1f]
      %v3433 = vld [vmem:[#allocation2 + $0x2b8] sm:$0x1f]
      %v3434 = vld [vmem:[#allocation2 + $0x2c0] sm:$0x1f]
      %v3435 = vld [vmem:[#allocation2 + $0x2c8] sm:$0x1f]
      %v3436 = vld [vmem:[#allocation2 + $0x2d0] sm:$0x1f]
      %v3437 = vld [vmem:[#allocation2 + $0x2d8] sm:$0x1f]
      %v3438 = vld [vmem:[#allocation2 + $0x2e0] sm:$0x1f]
      %v3439 = vld [vmem:[#allocation2 + $0x2e8] sm:$0x1f]
      %v3440 = vld [vmem:[#allocation2 + $0x2f0] sm:$0x1f]
      %v3441 = vld [vmem:[#allocation2 + $0x2f8] sm:$0x1f]
      %v3442 = vld [vmem:[#allocation2 + $0x300] sm:$0x1f]
      %v3443 = vld [vmem:[#allocation2 + $0x308] sm:$0x1f]
      %v3444 = vld [vmem:[#allocation2 + $0x310] sm:$0x1f]
      %v3445 = vld [vmem:[#allocation2 + $0x318] sm:$0x1f]
      %v3446 = vld [vmem:[#allocation2 + $0x320] sm:$0x1f]
      %v3447 = vld [vmem:[#allocation2 + $0x328] sm:$0x1f]
      %v3448 = vld [vmem:[#allocation2 + $0x330] sm:$0x1f]
      %v3449 = vld [vmem:[#allocation2 + $0x338] sm:$0x1f]
      %v3450 = vld [vmem:[#allocation2 + $0x340] sm:$0x1f]
      %v3451 = vld [vmem:[#allocation2 + $0x348] sm:$0x1f]
      %v3452 = vld [vmem:[#allocation2 + $0x350] sm:$0x1f]
      %v3453 = vld [vmem:[#allocation2 + $0x358] sm:$0x1f]
      %v3454 = vld [vmem:[#allocation2 + $0x360] sm:$0x1f]
      %v3455 = vld [vmem:[#allocation2 + $0x368] sm:$0x1f]
      %v3456 = vld [vmem:[#allocation2 + $0x370] sm:$0x1f]
      %v3457 = vld [vmem:[#allocation2 + $0x378] sm:$0x1f]
      %v3458 = vld [vmem:[#allocation2 + $0x380] sm:$0x1f]
      %v3459 = vld [vmem:[#allocation2 + $0x388] sm:$0x1f]
      %v3460 = vld [vmem:[#allocation2 + $0x390] sm:$0x1f]
      %v3461 = vld [vmem:[#allocation2 + $0x398] sm:$0x1f]
      %v3462 = vld [vmem:[#allocation2 + $0x3a0] sm:$0x1f]
      %v3463 = vld [vmem:[#allocation2 + $0x3a8] sm:$0x1f]
      %v3464 = vld [vmem:[#allocation2 + $0x3b0] sm:$0x1f]
      %v3465 = vld [vmem:[#allocation2 + $0x3b8] sm:$0x1f]
      %v3466 = vld [vmem:[#allocation2 + $0x3c0] sm:$0x1f]
      %v3467 = vld [vmem:[#allocation2 + $0x3c8] sm:$0x1f]
      %v3468 = vld [vmem:[#allocation2 + $0x3d0] sm:$0x1f]
      %v3469 = vld [vmem:[#allocation2 + $0x3d8] sm:$0x1f]
      %v3470 = vld [vmem:[#allocation2 + $0x3e0] sm:$0x1f]
      %v3471 = vld [vmem:[#allocation2 + $0x3e8] sm:$0x1f]
      %v3472 = vld [vmem:[#allocation2 + $0x3f0] sm:$0x1f]
      %v3473 = vld [vmem:[#allocation2 + $0x3f8] sm:$0x1f]
      %v3474 = vadd.f32 %v3346, %v3218
      %v3475 = vadd.f32 %v3347, %v3219
      %v3476 = vadd.f32 %v3348, %v3220
      %v3477 = vadd.f32 %v3349, %v3221
      %v3478 = vadd.f32 %v3350, %v3222
      %v3479 = vadd.f32 %v3351, %v3223
      %v3480 = vadd.f32 %v3352, %v3224
      %v3481 = vadd.f32 %v3353, %v3225
      %v3482 = vadd.f32 %v3354, %v3226
      %v3483 = vadd.f32 %v3355, %v3227
      %v3484 = vadd.f32 %v3356, %v3228
      %v3485 = vadd.f32 %v3357, %v3229
      %v3486 = vadd.f32 %v3358, %v3230
      %v3487 = vadd.f32 %v3359, %v3231
      %v3488 = vadd.f32 %v3360, %v3232
      %v3489 = vadd.f32 %v3361, %v3233
      %v3490 = vadd.f32 %v3362, %v3234
      %v3491 = vadd.f32 %v3363, %v3235
      %v3492 = vadd.f32 %v3364, %v3236
      %v3493 = vadd.f32 %v3365, %v3237
      %v3494 = vadd.f32 %v3366, %v3238
      %v3495 = vadd.f32 %v3367, %v3239
      %v3496 = vadd.f32 %v3368, %v3240
      %v3497 = vadd.f32 %v3369, %v3241
      %v3498 = vadd.f32 %v3370, %v3242
      %v3499 = vadd.f32 %v3371, %v3243
      %v3500 = vadd.f32 %v3372, %v3244
      %v3501 = vadd.f32 %v3373, %v3245
      %v3502 = vadd.f32 %v3374, %v3246
      %v3503 = vadd.f32 %v3375, %v3247
      %v3504 = vadd.f32 %v3376, %v3248
      %v3505 = vadd.f32 %v3377, %v3249
      %v3506 = vadd.f32 %v3378, %v3250
      %v3507 = vadd.f32 %v3379, %v3251
      %v3508 = vadd.f32 %v3380, %v3252
      %v3509 = vadd.f32 %v3381, %v3253
      %v3510 = vadd.f32 %v3382, %v3254
      %v3511 = vadd.f32 %v3383, %v3255
      %v3512 = vadd.f32 %v3384, %v3256
      %v3513 = vadd.f32 %v3385, %v3257
      %v3514 = vadd.f32 %v3386, %v3258
      %v3515 = vadd.f32 %v3387, %v3259
      %v3516 = vadd.f32 %v3388, %v3260
      %v3517 = vadd.f32 %v3389, %v3261
      %v3518 = vadd.f32 %v3390, %v3262
      %v3519 = vadd.f32 %v3391, %v3263
      %v3520 = vadd.f32 %v3392, %v3264
      %v3521 = vadd.f32 %v3393, %v3265
      %v3522 = vadd.f32 %v3394, %v3266
      %v3523 = vadd.f32 %v3395, %v3267
      %v3524 = vadd.f32 %v3396, %v3268
      %v3525 = vadd.f32 %v3397, %v3269
      %v3526 = vadd.f32 %v3398, %v3270
      %v3527 = vadd.f32 %v3399, %v3271
      %v3528 = vadd.f32 %v3400, %v3272
      %v3529 = vadd.f32 %v3401, %v3273
      %v3530 = vadd.f32 %v3402, %v3274
      %v3531 = vadd.f32 %v3403, %v3275
      %v3532 = vadd.f32 %v3404, %v3276
      %v3533 = vadd.f32 %v3405, %v3277
      %v3534 = vadd.f32 %v3406, %v3278
      %v3535 = vadd.f32 %v3407, %v3279
      %v3536 = vadd.f32 %v3408, %v3280
      %v3537 = vadd.f32 %v3409, %v3281
      %v3538 = vadd.f32 %v3410, %v3282
      %v3539 = vadd.f32 %v3411, %v3283
      %v3540 = vadd.f32 %v3412, %v3284
      %v3541 = vadd.f32 %v3413, %v3285
      %v3542 = vadd.f32 %v3414, %v3286
      %v3543 = vadd.f32 %v3415, %v3287
      %v3544 = vadd.f32 %v3416, %v3288
      %v3545 = vadd.f32 %v3417, %v3289
      %v3546 = vadd.f32 %v3418, %v3290
      %v3547 = vadd.f32 %v3419, %v3291
      %v3548 = vadd.f32 %v3420, %v3292
      %v3549 = vadd.f32 %v3421, %v3293
      %v3550 = vadd.f32 %v3422, %v3294
      %v3551 = vadd.f32 %v3423, %v3295
      %v3552 = vadd.f32 %v3424, %v3296
      %v3553 = vadd.f32 %v3425, %v3297
      %v3554 = vadd.f32 %v3426, %v3298
      %v3555 = vadd.f32 %v3427, %v3299
      %v3556 = vadd.f32 %v3428, %v3300
      %v3557 = vadd.f32 %v3429, %v3301
      %v3558 = vadd.f32 %v3430, %v3302
      %v3559 = vadd.f32 %v3431, %v3303
      %v3560 = vadd.f32 %v3432, %v3304
      %v3561 = vadd.f32 %v3433, %v3305
      %v3562 = vadd.f32 %v3434, %v3306
      %v3563 = vadd.f32 %v3435, %v3307
      %v3564 = vadd.f32 %v3436, %v3308
      %v3565 = vadd.f32 %v3437, %v3309
      %v3566 = vadd.f32 %v3438, %v3310
      %v3567 = vadd.f32 %v3439, %v3311
      %v3568 = vadd.f32 %v3440, %v3312
      %v3569 = vadd.f32 %v3441, %v3313
      %v3570 = vadd.f32 %v3442, %v3314
      %v3571 = vadd.f32 %v3443, %v3315
      %v3572 = vadd.f32 %v3444, %v3316
      %v3573 = vadd.f32 %v3445, %v3317
      %v3574 = vadd.f32 %v3446, %v3318
      %v3575 = vadd.f32 %v3447, %v3319
      %v3576 = vadd.f32 %v3448, %v3320
      %v3577 = vadd.f32 %v3449, %v3321
      %v3578 = vadd.f32 %v3450, %v3322
      %v3579 = vadd.f32 %v3451, %v3323
      %v3580 = vadd.f32 %v3452, %v3324
      %v3581 = vadd.f32 %v3453, %v3325
      %v3582 = vadd.f32 %v3454, %v3326
      %v3583 = vadd.f32 %v3455, %v3327
      %v3584 = vadd.f32 %v3456, %v3328
      %v3585 = vadd.f32 %v3457, %v3329
      %v3586 = vadd.f32 %v3458, %v3330
      %v3587 = vadd.f32 %v3459, %v3331
      %v3588 = vadd.f32 %v3460, %v3332
      %v3589 = vadd.f32 %v3461, %v3333
      %v3590 = vadd.f32 %v3462, %v3334
      %v3591 = vadd.f32 %v3463, %v3335
      %v3592 = vadd.f32 %v3464, %v3336
      %v3593 = vadd.f32 %v3465, %v3337
      %v3594 = vadd.f32 %v3466, %v3338
      %v3595 = vadd.f32 %v3467, %v3339
      %v3596 = vadd.f32 %v3468, %v3340
      %v3597 = vadd.f32 %v3469, %v3341
      %v3598 = vadd.f32 %v3470, %v3342
      %v3599 = vadd.f32 %v3471, %v3343
      %v3600 = vadd.f32 %v3472, %v3344
      %v3601 = vadd.f32 %v3473, %v3345
      %3602 = vst [vmem:[#allocation2] sm:$0xff] %v3474
      %3603 = vst [vmem:[#allocation2 + $0x8] sm:$0xff] %v3475
      %3604 = vst [vmem:[#allocation2 + $0x10] sm:$0xff] %v3476
      %3605 = vst [vmem:[#allocation2 + $0x18] sm:$0xff] %v3477
      %3606 = vst [vmem:[#allocation2 + $0x20] sm:$0xff] %v3478
      %3607 = vst [vmem:[#allocation2 + $0x28] sm:$0xff] %v3479
      %3608 = vst [vmem:[#allocation2 + $0x30] sm:$0xff] %v3480
      %3609 = vst [vmem:[#allocation2 + $0x38] sm:$0xff] %v3481
      %3610 = vst [vmem:[#allocation2 + $0x40] sm:$0xff] %v3482
      %3611 = vst [vmem:[#allocation2 + $0x48] sm:$0xff] %v3483
      %3612 = vst [vmem:[#allocation2 + $0x50] sm:$0xff] %v3484
      %3613 = vst [vmem:[#allocation2 + $0x58] sm:$0xff] %v3485
      %3614 = vst [vmem:[#allocation2 + $0x60] sm:$0xff] %v3486
      %3615 = vst [vmem:[#allocation2 + $0x68] sm:$0xff] %v3487
      %3616 = vst [vmem:[#allocation2 + $0x70] sm:$0xff] %v3488
      %3617 = vst [vmem:[#allocation2 + $0x78] sm:$0xff] %v3489
      %3618 = vst [vmem:[#allocation2 + $0x80] sm:$0xff] %v3490
      %3619 = vst [vmem:[#allocation2 + $0x88] sm:$0xff] %v3491
      %3620 = vst [vmem:[#allocation2 + $0x90] sm:$0xff] %v3492
      %3621 = vst [vmem:[#allocation2 + $0x98] sm:$0xff] %v3493
      %3622 = vst [vmem:[#allocation2 + $0xa0] sm:$0xff] %v3494
      %3623 = vst [vmem:[#allocation2 + $0xa8] sm:$0xff] %v3495
      %3624 = vst [vmem:[#allocation2 + $0xb0] sm:$0xff] %v3496
      %3625 = vst [vmem:[#allocation2 + $0xb8] sm:$0xff] %v3497
      %3626 = vst [vmem:[#allocation2 + $0xc0] sm:$0xff] %v3498
      %3627 = vst [vmem:[#allocation2 + $0xc8] sm:$0xff] %v3499
      %3628 = vst [vmem:[#allocation2 + $0xd0] sm:$0xff] %v3500
      %3629 = vst [vmem:[#allocation2 + $0xd8] sm:$0xff] %v3501
      %3630 = vst [vmem:[#allocation2 + $0xe0] sm:$0xff] %v3502
      %3631 = vst [vmem:[#allocation2 + $0xe8] sm:$0xff] %v3503
      %3632 = vst [vmem:[#allocation2 + $0xf0] sm:$0xff] %v3504
      %3633 = vst [vmem:[#allocation2 + $0xf8] sm:$0xff] %v3505
      %3634 = vst [vmem:[#allocation2 + $0x100] sm:$0xff] %v3506
      %3635 = vst [vmem:[#allocation2 + $0x108] sm:$0xff] %v3507
      %3636 = vst [vmem:[#allocation2 + $0x110] sm:$0xff] %v3508
      %3637 = vst [vmem:[#allocation2 + $0x118] sm:$0xff] %v3509
      %3638 = vst [vmem:[#allocation2 + $0x120] sm:$0xff] %v3510
      %3639 = vst [vmem:[#allocation2 + $0x128] sm:$0xff] %v3511
      %3640 = vst [vmem:[#allocation2 + $0x130] sm:$0xff] %v3512
      %3641 = vst [vmem:[#allocation2 + $0x138] sm:$0xff] %v3513
      %3642 = vst [vmem:[#allocation2 + $0x140] sm:$0xff] %v3514
      %3643 = vst [vmem:[#allocation2 + $0x148] sm:$0xff] %v3515
      %3644 = vst [vmem:[#allocation2 + $0x150] sm:$0xff] %v3516
      %3645 = vst [vmem:[#allocation2 + $0x158] sm:$0xff] %v3517
      %3646 = vst [vmem:[#allocation2 + $0x160] sm:$0xff] %v3518
      %3647 = vst [vmem:[#allocation2 + $0x168] sm:$0xff] %v3519
      %3648 = vst [vmem:[#allocation2 + $0x170] sm:$0xff] %v3520
      %3649 = vst [vmem:[#allocation2 + $0x178] sm:$0xff] %v3521
      %3650 = vst [vmem:[#allocation2 + $0x180] sm:$0xff] %v3522
      %3651 = vst [vmem:[#allocation2 + $0x188] sm:$0xff] %v3523
      %3652 = vst [vmem:[#allocation2 + $0x190] sm:$0xff] %v3524
      %3653 = vst [vmem:[#allocation2 + $0x198] sm:$0xff] %v3525
      %3654 = vst [vmem:[#allocation2 + $0x1a0] sm:$0xff] %v3526
      %3655 = vst [vmem:[#allocation2 + $0x1a8] sm:$0xff] %v3527
      %3656 = vst [vmem:[#allocation2 + $0x1b0] sm:$0xff] %v3528
      %3657 = vst [vmem:[#allocation2 + $0x1b8] sm:$0xff] %v3529
      %3658 = vst [vmem:[#allocation2 + $0x1c0] sm:$0xff] %v3530
      %3659 = vst [vmem:[#allocation2 + $0x1c8] sm:$0xff] %v3531
      %3660 = vst [vmem:[#allocation2 + $0x1d0] sm:$0xff] %v3532
      %3661 = vst [vmem:[#allocation2 + $0x1d8] sm:$0xff] %v3533
      %3662 = vst [vmem:[#allocation2 + $0x1e0] sm:$0xff] %v3534
      %3663 = vst [vmem:[#allocation2 + $0x1e8] sm:$0xff] %v3535
      %3664 = vst [vmem:[#allocation2 + $0x1f0] sm:$0xff] %v3536
      %3665 = vst [vmem:[#allocation2 + $0x1f8] sm:$0xff] %v3537
      %3666 = vst [vmem:[#allocation2 + $0x200] sm:$0x1f] %v3538
      %3667 = vst [vmem:[#allocation2 + $0x208] sm:$0x1f] %v3539
      %3668 = vst [vmem:[#allocation2 + $0x210] sm:$0x1f] %v3540
      %3669 = vst [vmem:[#allocation2 + $0x218] sm:$0x1f] %v3541
      %3670 = vst [vmem:[#allocation2 + $0x220] sm:$0x1f] %v3542
      %3671 = vst [vmem:[#allocation2 + $0x228] sm:$0x1f] %v3543
      %3672 = vst [vmem:[#allocation2 + $0x230] sm:$0x1f] %v3544
      %3673 = vst [vmem:[#allocation2 + $0x238] sm:$0x1f] %v3545
      %3674 = vst [vmem:[#allocation2 + $0x240] sm:$0x1f] %v3546
      %3675 = vst [vmem:[#allocation2 + $0x248] sm:$0x1f] %v3547
      %3676 = vst [vmem:[#allocation2 + $0x250] sm:$0x1f] %v3548
      %3677 = vst [vmem:[#allocation2 + $0x258] sm:$0x1f] %v3549
      %3678 = vst [vmem:[#allocation2 + $0x260] sm:$0x1f] %v3550
      %3679 = vst [vmem:[#allocation2 + $0x268] sm:$0x1f] %v3551
      %3680 = vst [vmem:[#allocation2 + $0x270] sm:$0x1f] %v3552
      %3681 = vst [vmem:[#allocation2 + $0x278] sm:$0x1f] %v3553
      %3682 = vst [vmem:[#allocation2 + $0x280] sm:$0x1f] %v3554
      %3683 = vst [vmem:[#allocation2 + $0x288] sm:$0x1f] %v3555
      %3684 = vst [vmem:[#allocation2 + $0x290] sm:$0x1f] %v3556
      %3685 = vst [vmem:[#allocation2 + $0x298] sm:$0x1f] %v3557
      %3686 = vst [vmem:[#allocation2 + $0x2a0] sm:$0x1f] %v3558
      %3687 = vst [vmem:[#allocation2 + $0x2a8] sm:$0x1f] %v3559
      %3688 = vst [vmem:[#allocation2 + $0x2b0] sm:$0x1f] %v3560
      %3689 = vst [vmem:[#allocation2 + $0x2b8] sm:$0x1f] %v3561
      %3690 = vst [vmem:[#allocation2 + $0x2c0] sm:$0x1f] %v3562
      %3691 = vst [vmem:[#allocation2 + $0x2c8] sm:$0x1f] %v3563
      %3692 = vst [vmem:[#allocation2 + $0x2d0] sm:$0x1f] %v3564
      %3693 = vst [vmem:[#allocation2 + $0x2d8] sm:$0x1f] %v3565
      %3694 = vst [vmem:[#allocation2 + $0x2e0] sm:$0x1f] %v3566
      %3695 = vst [vmem:[#allocation2 + $0x2e8] sm:$0x1f] %v3567
      %3696 = vst [vmem:[#allocation2 + $0x2f0] sm:$0x1f] %v3568
      %3697 = vst [vmem:[#allocation2 + $0x2f8] sm:$0x1f] %v3569
      %3698 = vst [vmem:[#allocation2 + $0x300] sm:$0x1f] %v3570
      %3699 = vst [vmem:[#allocation2 + $0x308] sm:$0x1f] %v3571
      %3700 = vst [vmem:[#allocation2 + $0x310] sm:$0x1f] %v3572
      %3701 = vst [vmem:[#allocation2 + $0x318] sm:$0x1f] %v3573
      %3702 = vst [vmem:[#allocation2 + $0x320] sm:$0x1f] %v3574
      %3703 = vst [vmem:[#allocation2 + $0x328] sm:$0x1f] %v3575
      %3704 = vst [vmem:[#allocation2 + $0x330] sm:$0x1f] %v3576
      %3705 = vst [vmem:[#allocation2 + $0x338] sm:$0x1f] %v3577
      %3706 = vst [vmem:[#allocation2 + $0x340] sm:$0x1f] %v3578
      %3707 = vst [vmem:[#allocation2 + $0x348] sm:$0x1f] %v3579
      %3708 = vst [vmem:[#allocation2 + $0x350] sm:$0x1f] %v3580
      %3709 = vst [vmem:[#allocation2 + $0x358] sm:$0x1f] %v3581
      %3710 = vst [vmem:[#allocation2 + $0x360] sm:$0x1f] %v3582
      %3711 = vst [vmem:[#allocation2 + $0x368] sm:$0x1f] %v3583
      %3712 = vst [vmem:[#allocation2 + $0x370] sm:$0x1f] %v3584
      %3713 = vst [vmem:[#allocation2 + $0x378] sm:$0x1f] %v3585
      %3714 = vst [vmem:[#allocation2 + $0x380] sm:$0x1f] %v3586
      %3715 = vst [vmem:[#allocation2 + $0x388] sm:$0x1f] %v3587
      %3716 = vst [vmem:[#allocation2 + $0x390] sm:$0x1f] %v3588
      %3717 = vst [vmem:[#allocation2 + $0x398] sm:$0x1f] %v3589
      %3718 = vst [vmem:[#allocation2 + $0x3a0] sm:$0x1f] %v3590
      %3719 = vst [vmem:[#allocation2 + $0x3a8] sm:$0x1f] %v3591
      %3720 = vst [vmem:[#allocation2 + $0x3b0] sm:$0x1f] %v3592
      %3721 = vst [vmem:[#allocation2 + $0x3b8] sm:$0x1f] %v3593
      %3722 = vst [vmem:[#allocation2 + $0x3c0] sm:$0x1f] %v3594
      %3723 = vst [vmem:[#allocation2 + $0x3c8] sm:$0x1f] %v3595
      %3724 = vst [vmem:[#allocation2 + $0x3d0] sm:$0x1f] %v3596
      %3725 = vst [vmem:[#allocation2 + $0x3d8] sm:$0x1f] %v3597
      %3726 = vst [vmem:[#allocation2 + $0x3e0] sm:$0x1f] %v3598
      %3727 = vst [vmem:[#allocation2 + $0x3e8] sm:$0x1f] %v3599
      %3728 = vst [vmem:[#allocation2 + $0x3f0] sm:$0x1f] %v3600
      %3729 = vst [vmem:[#allocation2 + $0x3f8] sm:$0x1f] %v3601
      %p3730 = scmp.eq.s32.totalorder %s21, 1
      // Predicated region
      $region37: #{fuse_net_forward.2} parent=31 // pred_check
        %p3731 = pneg %p3730
      $region38: #{fuse_net_forward.2} parent=31 // pred_check_branch
        %3733 = sbr.rel (%p3731) target = $region40
      $region39: #{fuse_net_forward.2} parent=31 // pred_region
        %v3734 = vld [vmem:[#allocation2] sm:$0xff]
        %v3735 = vld [vmem:[#allocation2 + $0x8] sm:$0xff]
        %v3736 = vld [vmem:[#allocation2 + $0x10] sm:$0xff]
        %v3737 = vld [vmem:[#allocation2 + $0x18] sm:$0xff]
        %v3738 = vld [vmem:[#allocation2 + $0x20] sm:$0xff]
        %v3739 = vld [vmem:[#allocation2 + $0x28] sm:$0xff]
        %v3740 = vld [vmem:[#allocation2 + $0x30] sm:$0xff]
        %v3741 = vld [vmem:[#allocation2 + $0x38] sm:$0xff]
        %v3742 = vld [vmem:[#allocation2 + $0x40] sm:$0xff]
        %v3743 = vld [vmem:[#allocation2 + $0x48] sm:$0xff]
        %v3744 = vld [vmem:[#allocation2 + $0x50] sm:$0xff]
        %v3745 = vld [vmem:[#allocation2 + $0x58] sm:$0xff]
        %v3746 = vld [vmem:[#allocation2 + $0x60] sm:$0xff]
        %v3747 = vld [vmem:[#allocation2 + $0x68] sm:$0xff]
        %v3748 = vld [vmem:[#allocation2 + $0x70] sm:$0xff]
        %v3749 = vld [vmem:[#allocation2 + $0x78] sm:$0xff]
        %v3750 = vld [vmem:[#allocation2 + $0x80] sm:$0xff]
        %v3751 = vld [vmem:[#allocation2 + $0x88] sm:$0xff]
        %v3752 = vld [vmem:[#allocation2 + $0x90] sm:$0xff]
        %v3753 = vld [vmem:[#allocation2 + $0x98] sm:$0xff]
        %v3754 = vld [vmem:[#allocation2 + $0xa0] sm:$0xff]
        %v3755 = vld [vmem:[#allocation2 + $0xa8] sm:$0xff]
        %v3756 = vld [vmem:[#allocation2 + $0xb0] sm:$0xff]
        %v3757 = vld [vmem:[#allocation2 + $0xb8] sm:$0xff]
        %v3758 = vld [vmem:[#allocation2 + $0xc0] sm:$0xff]
        %v3759 = vld [vmem:[#allocation2 + $0xc8] sm:$0xff]
        %v3760 = vld [vmem:[#allocation2 + $0xd0] sm:$0xff]
        %v3761 = vld [vmem:[#allocation2 + $0xd8] sm:$0xff]
        %v3762 = vld [vmem:[#allocation2 + $0xe0] sm:$0xff]
        %v3763 = vld [vmem:[#allocation2 + $0xe8] sm:$0xff]
        %v3764 = vld [vmem:[#allocation2 + $0xf0] sm:$0xff]
        %v3765 = vld [vmem:[#allocation2 + $0xf8] sm:$0xff]
        %v3766 = vld [vmem:[#allocation2 + $0x100] sm:$0xff]
        %v3767 = vld [vmem:[#allocation2 + $0x108] sm:$0xff]
        %v3768 = vld [vmem:[#allocation2 + $0x110] sm:$0xff]
        %v3769 = vld [vmem:[#allocation2 + $0x118] sm:$0xff]
        %v3770 = vld [vmem:[#allocation2 + $0x120] sm:$0xff]
        %v3771 = vld [vmem:[#allocation2 + $0x128] sm:$0xff]
        %v3772 = vld [vmem:[#allocation2 + $0x130] sm:$0xff]
        %v3773 = vld [vmem:[#allocation2 + $0x138] sm:$0xff]
        %v3774 = vld [vmem:[#allocation2 + $0x140] sm:$0xff]
        %v3775 = vld [vmem:[#allocation2 + $0x148] sm:$0xff]
        %v3776 = vld [vmem:[#allocation2 + $0x150] sm:$0xff]
        %v3777 = vld [vmem:[#allocation2 + $0x158] sm:$0xff]
        %v3778 = vld [vmem:[#allocation2 + $0x160] sm:$0xff]
        %v3779 = vld [vmem:[#allocation2 + $0x168] sm:$0xff]
        %v3780 = vld [vmem:[#allocation2 + $0x170] sm:$0xff]
        %v3781 = vld [vmem:[#allocation2 + $0x178] sm:$0xff]
        %v3782 = vld [vmem:[#allocation2 + $0x180] sm:$0xff]
        %v3783 = vld [vmem:[#allocation2 + $0x188] sm:$0xff]
        %v3784 = vld [vmem:[#allocation2 + $0x190] sm:$0xff]
        %v3785 = vld [vmem:[#allocation2 + $0x198] sm:$0xff]
        %v3786 = vld [vmem:[#allocation2 + $0x1a0] sm:$0xff]
        %v3787 = vld [vmem:[#allocation2 + $0x1a8] sm:$0xff]
        %v3788 = vld [vmem:[#allocation2 + $0x1b0] sm:$0xff]
        %v3789 = vld [vmem:[#allocation2 + $0x1b8] sm:$0xff]
        %v3790 = vld [vmem:[#allocation2 + $0x1c0] sm:$0xff]
        %v3791 = vld [vmem:[#allocation2 + $0x1c8] sm:$0xff]
        %v3792 = vld [vmem:[#allocation2 + $0x1d0] sm:$0xff]
        %v3793 = vld [vmem:[#allocation2 + $0x1d8] sm:$0xff]
        %v3794 = vld [vmem:[#allocation2 + $0x1e0] sm:$0xff]
        %v3795 = vld [vmem:[#allocation2 + $0x1e8] sm:$0xff]
        %v3796 = vld [vmem:[#allocation2 + $0x1f0] sm:$0xff]
        %v3797 = vld [vmem:[#allocation2 + $0x1f8] sm:$0xff]
        %v3798 = vld [vmem:[#allocation2 + $0x200] sm:$0x1f]
        %v3799 = vld [vmem:[#allocation2 + $0x208] sm:$0x1f]
        %v3800 = vld [vmem:[#allocation2 + $0x210] sm:$0x1f]
        %v3801 = vld [vmem:[#allocation2 + $0x218] sm:$0x1f]
        %v3802 = vld [vmem:[#allocation2 + $0x220] sm:$0x1f]
        %v3803 = vld [vmem:[#allocation2 + $0x228] sm:$0x1f]
        %v3804 = vld [vmem:[#allocation2 + $0x230] sm:$0x1f]
        %v3805 = vld [vmem:[#allocation2 + $0x238] sm:$0x1f]
        %v3806 = vld [vmem:[#allocation2 + $0x240] sm:$0x1f]
        %v3807 = vld [vmem:[#allocation2 + $0x248] sm:$0x1f]
        %v3808 = vld [vmem:[#allocation2 + $0x250] sm:$0x1f]
        %v3809 = vld [vmem:[#allocation2 + $0x258] sm:$0x1f]
        %v3810 = vld [vmem:[#allocation2 + $0x260] sm:$0x1f]
        %v3811 = vld [vmem:[#allocation2 + $0x268] sm:$0x1f]
        %v3812 = vld [vmem:[#allocation2 + $0x270] sm:$0x1f]
        %v3813 = vld [vmem:[#allocation2 + $0x278] sm:$0x1f]
        %v3814 = vld [vmem:[#allocation2 + $0x280] sm:$0x1f]
        %v3815 = vld [vmem:[#allocation2 + $0x288] sm:$0x1f]
        %v3816 = vld [vmem:[#allocation2 + $0x290] sm:$0x1f]
        %v3817 = vld [vmem:[#allocation2 + $0x298] sm:$0x1f]
        %v3818 = vld [vmem:[#allocation2 + $0x2a0] sm:$0x1f]
        %v3819 = vld [vmem:[#allocation2 + $0x2a8] sm:$0x1f]
        %v3820 = vld [vmem:[#allocation2 + $0x2b0] sm:$0x1f]
        %v3821 = vld [vmem:[#allocation2 + $0x2b8] sm:$0x1f]
        %v3822 = vld [vmem:[#allocation2 + $0x2c0] sm:$0x1f]
        %v3823 = vld [vmem:[#allocation2 + $0x2c8] sm:$0x1f]
        %v3824 = vld [vmem:[#allocation2 + $0x2d0] sm:$0x1f]
        %v3825 = vld [vmem:[#allocation2 + $0x2d8] sm:$0x1f]
        %v3826 = vld [vmem:[#allocation2 + $0x2e0] sm:$0x1f]
        %v3827 = vld [vmem:[#allocation2 + $0x2e8] sm:$0x1f]
        %v3828 = vld [vmem:[#allocation2 + $0x2f0] sm:$0x1f]
        %v3829 = vld [vmem:[#allocation2 + $0x2f8] sm:$0x1f]
        %v3830 = vld [vmem:[#allocation2 + $0x300] sm:$0x1f]
        %v3831 = vld [vmem:[#allocation2 + $0x308] sm:$0x1f]
        %v3832 = vld [vmem:[#allocation2 + $0x310] sm:$0x1f]
        %v3833 = vld [vmem:[#allocation2 + $0x318] sm:$0x1f]
        %v3834 = vld [vmem:[#allocation2 + $0x320] sm:$0x1f]
        %v3835 = vld [vmem:[#allocation2 + $0x328] sm:$0x1f]
        %v3836 = vld [vmem:[#allocation2 + $0x330] sm:$0x1f]
        %v3837 = vld [vmem:[#allocation2 + $0x338] sm:$0x1f]
        %v3838 = vld [vmem:[#allocation2 + $0x340] sm:$0x1f]
        %v3839 = vld [vmem:[#allocation2 + $0x348] sm:$0x1f]
        %v3840 = vld [vmem:[#allocation2 + $0x350] sm:$0x1f]
        %v3841 = vld [vmem:[#allocation2 + $0x358] sm:$0x1f]
        %v3842 = vld [vmem:[#allocation2 + $0x360] sm:$0x1f]
        %v3843 = vld [vmem:[#allocation2 + $0x368] sm:$0x1f]
        %v3844 = vld [vmem:[#allocation2 + $0x370] sm:$0x1f]
        %v3845 = vld [vmem:[#allocation2 + $0x378] sm:$0x1f]
        %v3846 = vld [vmem:[#allocation2 + $0x380] sm:$0x1f]
        %v3847 = vld [vmem:[#allocation2 + $0x388] sm:$0x1f]
        %v3848 = vld [vmem:[#allocation2 + $0x390] sm:$0x1f]
        %v3849 = vld [vmem:[#allocation2 + $0x398] sm:$0x1f]
        %v3850 = vld [vmem:[#allocation2 + $0x3a0] sm:$0x1f]
        %v3851 = vld [vmem:[#allocation2 + $0x3a8] sm:$0x1f]
        %v3852 = vld [vmem:[#allocation2 + $0x3b0] sm:$0x1f]
        %v3853 = vld [vmem:[#allocation2 + $0x3b8] sm:$0x1f]
        %v3854 = vld [vmem:[#allocation2 + $0x3c0] sm:$0x1f]
        %v3855 = vld [vmem:[#allocation2 + $0x3c8] sm:$0x1f]
        %v3856 = vld [vmem:[#allocation2 + $0x3d0] sm:$0x1f]
        %v3857 = vld [vmem:[#allocation2 + $0x3d8] sm:$0x1f]
        %v3858 = vld [vmem:[#allocation2 + $0x3e0] sm:$0x1f]
        %v3859 = vld [vmem:[#allocation2 + $0x3e8] sm:$0x1f]
        %v3860 = vld [vmem:[#allocation2 + $0x3f0] sm:$0x1f]
        %v3861 = vld [vmem:[#allocation2 + $0x3f8] sm:$0x1f]
        %v3862 = vadd.f32 %v3734, %v3735
        %v3863 = vadd.f32 %v3862, %v3736
        %v3864 = vadd.f32 %v3863, %v3737
        %v3865 = vadd.f32 %v3864, %v3738
        %v3866 = vadd.f32 %v3865, %v3739
        %v3867 = vadd.f32 %v3866, %v3740
        %v3868 = vadd.f32 %v3867, %v3741
        %v3869 = vadd.f32 %v3868, %v3742
        %v3870 = vadd.f32 %v3869, %v3743
        %v3871 = vadd.f32 %v3870, %v3744
        %v3872 = vadd.f32 %v3871, %v3745
        %v3873 = vadd.f32 %v3872, %v3746
        %v3874 = vadd.f32 %v3873, %v3747
        %v3875 = vadd.f32 %v3874, %v3748
        %v3876 = vadd.f32 %v3875, %v3749
        %v3877 = vadd.f32 %v3876, %v3750
        %v3878 = vadd.f32 %v3877, %v3751
        %v3879 = vadd.f32 %v3878, %v3752
        %v3880 = vadd.f32 %v3879, %v3753
        %v3881 = vadd.f32 %v3880, %v3754
        %v3882 = vadd.f32 %v3881, %v3755
        %v3883 = vadd.f32 %v3882, %v3756
        %v3884 = vadd.f32 %v3883, %v3757
        %v3885 = vadd.f32 %v3884, %v3758
        %v3886 = vadd.f32 %v3885, %v3759
        %v3887 = vadd.f32 %v3886, %v3760
        %v3888 = vadd.f32 %v3887, %v3761
        %v3889 = vadd.f32 %v3888, %v3762
        %v3890 = vadd.f32 %v3889, %v3763
        %v3891 = vadd.f32 %v3890, %v3764
        %v3892 = vadd.f32 %v3891, %v3765
        %v3893 = vadd.f32 %v3892, %v3766
        %v3894 = vadd.f32 %v3893, %v3767
        %v3895 = vadd.f32 %v3894, %v3768
        %v3896 = vadd.f32 %v3895, %v3769
        %v3897 = vadd.f32 %v3896, %v3770
        %v3898 = vadd.f32 %v3897, %v3771
        %v3899 = vadd.f32 %v3898, %v3772
        %v3900 = vadd.f32 %v3899, %v3773
        %v3901 = vadd.f32 %v3900, %v3774
        %v3902 = vadd.f32 %v3901, %v3775
        %v3903 = vadd.f32 %v3902, %v3776
        %v3904 = vadd.f32 %v3903, %v3777
        %v3905 = vadd.f32 %v3904, %v3778
        %v3906 = vadd.f32 %v3905, %v3779
        %v3907 = vadd.f32 %v3906, %v3780
        %v3908 = vadd.f32 %v3907, %v3781
        %v3909 = vadd.f32 %v3908, %v3782
        %v3910 = vadd.f32 %v3909, %v3783
        %v3911 = vadd.f32 %v3910, %v3784
        %v3912 = vadd.f32 %v3911, %v3785
        %v3913 = vadd.f32 %v3912, %v3786
        %v3914 = vadd.f32 %v3913, %v3787
        %v3915 = vadd.f32 %v3914, %v3788
        %v3916 = vadd.f32 %v3915, %v3789
        %v3917 = vadd.f32 %v3916, %v3790
        %v3918 = vadd.f32 %v3917, %v3791
        %v3919 = vadd.f32 %v3918, %v3792
        %v3920 = vadd.f32 %v3919, %v3793
        %v3921 = vadd.f32 %v3920, %v3794
        %v3922 = vadd.f32 %v3921, %v3795
        %v3923 = vadd.f32 %v3922, %v3796
        %v3924 = vadd.f32 %v3923, %v3797
        %3925 = vadd.xlane.f32.xlu0 %v3924
        %v3926 = vpop.xlane.xlu0 %3925
        %vm3927 = vcmask 1044480
        %v3928 = vsel %vm3927, %v3798, 0.0
        %v3929 = vsel %vm3927, %v3799, 0.0
        %v3930 = vadd.f32 %v3928, %v3929
        %v3931 = vsel %vm3927, %v3800, 0.0
        %v3932 = vadd.f32 %v3930, %v3931
        %v3933 = vsel %vm3927, %v3801, 0.0
        %v3934 = vadd.f32 %v3932, %v3933
        %v3935 = vsel %vm3927, %v3802, 0.0
        %v3936 = vadd.f32 %v3934, %v3935
        %v3937 = vsel %vm3927, %v3803, 0.0
        %v3938 = vadd.f32 %v3936, %v3937
        %v3939 = vsel %vm3927, %v3804, 0.0
        %v3940 = vadd.f32 %v3938, %v3939
        %v3941 = vsel %vm3927, %v3805, 0.0
        %v3942 = vadd.f32 %v3940, %v3941
        %v3943 = vsel %vm3927, %v3806, 0.0
        %v3944 = vadd.f32 %v3942, %v3943
        %v3945 = vsel %vm3927, %v3807, 0.0
        %v3946 = vadd.f32 %v3944, %v3945
        %v3947 = vsel %vm3927, %v3808, 0.0
        %v3948 = vadd.f32 %v3946, %v3947
        %v3949 = vsel %vm3927, %v3809, 0.0
        %v3950 = vadd.f32 %v3948, %v3949
        %v3951 = vsel %vm3927, %v3810, 0.0
        %v3952 = vadd.f32 %v3950, %v3951
        %v3953 = vsel %vm3927, %v3811, 0.0
        %v3954 = vadd.f32 %v3952, %v3953
        %v3955 = vsel %vm3927, %v3812, 0.0
        %v3956 = vadd.f32 %v3954, %v3955
        %v3957 = vsel %vm3927, %v3813, 0.0
        %v3958 = vadd.f32 %v3956, %v3957
        %v3959 = vsel %vm3927, %v3814, 0.0
        %v3960 = vadd.f32 %v3958, %v3959
        %v3961 = vsel %vm3927, %v3815, 0.0
        %v3962 = vadd.f32 %v3960, %v3961
        %v3963 = vsel %vm3927, %v3816, 0.0
        %v3964 = vadd.f32 %v3962, %v3963
        %v3965 = vsel %vm3927, %v3817, 0.0
        %v3966 = vadd.f32 %v3964, %v3965
        %v3967 = vsel %vm3927, %v3818, 0.0
        %v3968 = vadd.f32 %v3966, %v3967
        %v3969 = vsel %vm3927, %v3819, 0.0
        %v3970 = vadd.f32 %v3968, %v3969
        %v3971 = vsel %vm3927, %v3820, 0.0
        %v3972 = vadd.f32 %v3970, %v3971
        %v3973 = vsel %vm3927, %v3821, 0.0
        %v3974 = vadd.f32 %v3972, %v3973
        %v3975 = vsel %vm3927, %v3822, 0.0
        %v3976 = vadd.f32 %v3974, %v3975
        %v3977 = vsel %vm3927, %v3823, 0.0
        %v3978 = vadd.f32 %v3976, %v3977
        %v3979 = vsel %vm3927, %v3824, 0.0
        %v3980 = vadd.f32 %v3978, %v3979
        %v3981 = vsel %vm3927, %v3825, 0.0
        %v3982 = vadd.f32 %v3980, %v3981
        %v3983 = vsel %vm3927, %v3826, 0.0
        %v3984 = vadd.f32 %v3982, %v3983
        %v3985 = vsel %vm3927, %v3827, 0.0
        %v3986 = vadd.f32 %v3984, %v3985
        %v3987 = vsel %vm3927, %v3828, 0.0
        %v3988 = vadd.f32 %v3986, %v3987
        %v3989 = vsel %vm3927, %v3829, 0.0
        %v3990 = vadd.f32 %v3988, %v3989
        %v3991 = vsel %vm3927, %v3830, 0.0
        %v3992 = vadd.f32 %v3990, %v3991
        %v3993 = vsel %vm3927, %v3831, 0.0
        %v3994 = vadd.f32 %v3992, %v3993
        %v3995 = vsel %vm3927, %v3832, 0.0
        %v3996 = vadd.f32 %v3994, %v3995
        %v3997 = vsel %vm3927, %v3833, 0.0
        %v3998 = vadd.f32 %v3996, %v3997
        %v3999 = vsel %vm3927, %v3834, 0.0
        %v4000 = vadd.f32 %v3998, %v3999
        %v4001 = vsel %vm3927, %v3835, 0.0
        %v4002 = vadd.f32 %v4000, %v4001
        %v4003 = vsel %vm3927, %v3836, 0.0
        %v4004 = vadd.f32 %v4002, %v4003
        %v4005 = vsel %vm3927, %v3837, 0.0
        %v4006 = vadd.f32 %v4004, %v4005
        %v4007 = vsel %vm3927, %v3838, 0.0
        %v4008 = vadd.f32 %v4006, %v4007
        %v4009 = vsel %vm3927, %v3839, 0.0
        %v4010 = vadd.f32 %v4008, %v4009
        %v4011 = vsel %vm3927, %v3840, 0.0
        %v4012 = vadd.f32 %v4010, %v4011
        %v4013 = vsel %vm3927, %v3841, 0.0
        %v4014 = vadd.f32 %v4012, %v4013
        %v4015 = vsel %vm3927, %v3842, 0.0
        %v4016 = vadd.f32 %v4014, %v4015
        %v4017 = vsel %vm3927, %v3843, 0.0
        %v4018 = vadd.f32 %v4016, %v4017
        %v4019 = vsel %vm3927, %v3844, 0.0
        %v4020 = vadd.f32 %v4018, %v4019
        %v4021 = vsel %vm3927, %v3845, 0.0
        %v4022 = vadd.f32 %v4020, %v4021
        %v4023 = vsel %vm3927, %v3846, 0.0
        %v4024 = vadd.f32 %v4022, %v4023
        %v4025 = vsel %vm3927, %v3847, 0.0
        %v4026 = vadd.f32 %v4024, %v4025
        %v4027 = vsel %vm3927, %v3848, 0.0
        %v4028 = vadd.f32 %v4026, %v4027
        %v4029 = vsel %vm3927, %v3849, 0.0
        %v4030 = vadd.f32 %v4028, %v4029
        %v4031 = vsel %vm3927, %v3850, 0.0
        %v4032 = vadd.f32 %v4030, %v4031
        %v4033 = vsel %vm3927, %v3851, 0.0
        %v4034 = vadd.f32 %v4032, %v4033
        %v4035 = vsel %vm3927, %v3852, 0.0
        %v4036 = vadd.f32 %v4034, %v4035
        %v4037 = vsel %vm3927, %v3853, 0.0
        %v4038 = vadd.f32 %v4036, %v4037
        %v4039 = vsel %vm3927, %v3854, 0.0
        %v4040 = vadd.f32 %v4038, %v4039
        %v4041 = vsel %vm3927, %v3855, 0.0
        %v4042 = vadd.f32 %v4040, %v4041
        %v4043 = vsel %vm3927, %v3856, 0.0
        %v4044 = vadd.f32 %v4042, %v4043
        %v4045 = vsel %vm3927, %v3857, 0.0
        %v4046 = vadd.f32 %v4044, %v4045
        %v4047 = vsel %vm3927, %v3858, 0.0
        %v4048 = vadd.f32 %v4046, %v4047
        %v4049 = vsel %vm3927, %v3859, 0.0
        %v4050 = vadd.f32 %v4048, %v4049
        %v4051 = vsel %vm3927, %v3860, 0.0
        %v4052 = vadd.f32 %v4050, %v4051
        %v4053 = vsel %vm3927, %v3861, 0.0
        %v4054 = vadd.f32 %v4052, %v4053
        %4055 = vadd.xlane.f32.xlu0 %v4054
        %v4056 = vpop.xlane.xlu0 %4055
        %v4057 = vmul.f32 %v3926, 3.7037036e-05
        %v4058 = vmul.f32 %v4056, 3.7037036e-05
        %vm4059 = vcmask 7168
        %4060 = vst.msk [vmem:[%s229] sm:$0xff] %vm4059, %v4057
        %vm4061 = vcmask 4096
        %4062 = vst.msk [vmem:[%s229 + $0x8] sm:$0x1f] %vm4061, %v4058
      $region40: #{fuse_net_forward.2} parent=31 // pred_fallthru
        _
      %p4063 = scmp.lt.s32.totalorder %s19, 1
      %s4064 = scalar_select %p4063, %s19, 1
      %p4065 = scmp.lt.s32.totalorder %s20, 1
      %s4066 = scalar_select %p4065, %s20, 1
      %s4067 = smul.addr %s4066, 2
      %s4068 = smul.addr %s4064, 4
      %s4069 = sadd.s32 %s4067, %s4068
      %s4070 = smul.addr %s4069, 8
      %s4071 = scalar_lea.vmem %s3, %s4070
      // Predicated region
      $region41: #{fuse_net_forward.2} parent=31 // pred_check
        %p4072 = pneg %p127
      $region42: #{fuse_net_forward.2} parent=31 // pred_check_branch
        %4074 = sbr.rel (%p4072) target = $region44
      $region43: #{fuse_net_forward.2} parent=31 // pred_region
        _
      $region44: #{fuse_net_forward.2} parent=31 // pred_fallthru
        _
    $region32: #{fuse_net_forward.2} parent=5 // pred_fallthru
      _
    %p4075 = scmp.le.s32.totalorder 2, %s9
    // Predicated region
    $region45: #{fuse_net_forward.2} parent=5 // pred_check
      %p4076 = pneg %p4075
    $region46: #{fuse_net_forward.2} parent=5 // pred_check_branch
      %4078 = sbr.rel (%p4076) target = $region48
    $region47: #{fuse_net_forward.2} parent=5 // pred_region
      %s4079 = ssub.s32 %s9, 2
      // Predicated region
      $region49: #{fuse_net_forward.2} parent=47 // pred_check
        %p4080 = pneg %p133
      $region50: #{fuse_net_forward.2} parent=47 // pred_check_branch
        %4082 = sbr.rel (%p4080) target = $region52
      $region51: #{fuse_net_forward.2} parent=47 // pred_region
        %p4083 = scmp.lt.s32.totalorder %s22, 1
        %s4084 = scalar_select %p4083, %s22, 1
        %p4085 = scmp.lt.s32.totalorder %s23, 1
        %s4086 = scalar_select %p4085, %s23, 1
        %s4087 = smul.addr %s4086, 2
        %s4088 = smul.addr %s4084, 4
        %s4089 = sadd.s32 %s4087, %s4088
        %s4090 = smul.addr %s4089, 8
        %s4091 = scalar_lea.vmem %s3, %s4090
      $region52: #{fuse_net_forward.2} parent=47 // pred_fallthru
        _
    $region48: #{fuse_net_forward.2} parent=5 // pred_fallthru
      _
  $region6: #{fuse_net_forward.2} parent=0 // loop_footer
    %s13 = sadd.s32 1, %s9
  $region7: #{fuse_net_forward.2} parent=0 // loop_footer_branch
    %8 = sbr.rel target = $region3
  $region8: #{fuse_net_forward.2} parent=0 // loop_exit
    _

</llo_original>
